<compile_context>
chip_gen: v7x
topology: tpu7x:2x2x1
jax: 0.10.0
libtpu: 0.0.40
codegen_flags: <defaults>
</compile_context>

<pallas_src>
import jax
import jax.numpy as jnp
import numpy as np
from jax.experimental import pallas as pl
from jax.experimental.pallas import tpu as pltpu

BN_EPS = 1e-5
VMEM_LIMIT = 32 * 1024 * 1024   # valid on v5e/v6e (128 MiB phys) and v7x (64 MiB)


# ---------------------------------------------------------------------------
# Tiled kernel (large N): grid = (batch, point-tile), channel-major math.
# ---------------------------------------------------------------------------
def _stn3d_tiled_kernel(x_ref, w1_ref, t1_ref, w2_ref, t2_ref, w3_ref, t3_ref,
                        w4_ref, t4_ref, w5_ref, t5_ref, w6_ref, b6_ref,
                        out_ref, acc_ref):
    """x_ref: (1, C, TN) native NCL slice (no wrapper transpose, no C padding).
    w1 (64,C) f32 | w2 (128,64) bf16 | w3 (1024,128) bf16
    w4 (512,1024) bf16 | w5 (256,512) bf16 | w6 (9,256) f32
    t* (ch,1) folded BN shifts | b6 (9,1) fc3 bias + flattened identity
    out_ref: (1, 9, 1) written on the last point tile
    acc_ref: (1024, 1) f32 running max of the RAW conv3 output
    """
    k = pl.program_id(1)

    @pl.when(k == 0)
    def _init():
        acc_ref[...] = jnp.full_like(acc_ref, -jnp.inf)

    # conv1 + bn1 + relu, channel-major: (64, TN).  K = C is tiny; f32 MXU.
    x = x_ref[0]                                                   # (C, TN)
    h = jnp.dot(w1_ref[...], x, preferred_element_type=jnp.float32)
    h = jnp.maximum(h + t1_ref[...], 0.0)                          # (64, TN)

    # conv2 + bn2 + relu: standard-orientation matmul -> no activation
    # transpose anywhere in the kernel (perf-review item #2).
    h = jnp.dot(w2_ref[...], h.astype(jnp.bfloat16),
                preferred_element_type=jnp.float32)                # (128, TN)
    h = jnp.maximum(h + t2_ref[...], 0.0)

    # conv3: raw matmul only — bn3 shift + ReLU hoisted to the head
    # (perf-review item #1).  K = 128 fills v5e's MXU, half of v6e/v7x's.
    z = jnp.dot(w3_ref[...], h.astype(jnp.bfloat16),
                preferred_element_type=jnp.float32)                # (1024, TN)

    # running max over point tiles: single pass over the big tensor
    acc_ref[...] = jnp.maximum(acc_ref[...],
                               jnp.max(z, axis=1, keepdims=True))  # (1024, 1)

    # fused FC head on the last tile of this batch
    @pl.when(k == pl.num_programs(1) - 1)
    def _head():
        # hoisted bn3 shift + ReLU (exact: shift constant over N, ReLU monotone)
        f = jnp.maximum(acc_ref[...] + t3_ref[...], 0.0)           # (1024, 1)
        g = jnp.dot(w4_ref[...], f.astype(jnp.bfloat16),
                    preferred_element_type=jnp.float32)
        g = jnp.maximum(g + t4_ref[...], 0.0)                      # (512, 1)
        g = jnp.dot(w5_ref[...], g.astype(jnp.bfloat16),
                    preferred_element_type=jnp.float32)
        g = jnp.maximum(g + t5_ref[...], 0.0)                      # (256, 1)
        y = jnp.dot(w6_ref[...], g, preferred_element_type=jnp.float32)
        out_ref[0] = y + b6_ref[...]                               # (9, 1)


# ---------------------------------------------------------------------------
# Batch-packed kernel (small N): several batches per grid step, whole N.
# ---------------------------------------------------------------------------
def _stn3d_packed_kernel(x_ref, w1_ref, t1_ref, w2_ref, t2_ref, w3_ref, t3_ref,
                         w4_ref, t4_ref, w5_ref, t5_ref, w6_ref, b6_ref,
                         out_ref):
    """x_ref: (Bb, Np, C) wrapper-transposed points-major slab (Np % 8 == 0).
    w*: row-major (Cin, Cout); t*: (1, Cout); b6: (1, 9).  out_ref: (Bb, 9).
    Batches are folded into the matmul M dimension (perf-review item on
    small-N packing); the per-batch max pool runs on the reshaped result.
    """
    bb, np_, c = x_ref.shape
    xf = x_ref[...].reshape(bb * np_, c)                           # (Bb*Np, C)
    h = jnp.dot(xf, w1_ref[...], preferred_element_type=jnp.float32)
    h = jnp.maximum(h + t1_ref[...], 0.0)                          # (Bb*Np, 64)
    h = jnp.dot(h.astype(jnp.bfloat16), w2_ref[...],
                preferred_element_type=jnp.float32)
    h = jnp.maximum(h + t2_ref[...], 0.0)                          # (Bb*Np, 128)
    z = jnp.dot(h.astype(jnp.bfloat16), w3_ref[...],
                preferred_element_type=jnp.float32)                # (Bb*Np, 1024)
    # per-batch max pool on the raw conv3 output; bn3 shift + relu hoisted below
    f = jnp.max(z.reshape(bb, np_, 1024), axis=1)                  # (Bb, 1024)
    f = jnp.maximum(f + t3_ref[...], 0.0)
    g = jnp.dot(f.astype(jnp.bfloat16), w4_ref[...],
                preferred_element_type=jnp.float32)
    g = jnp.maximum(g + t4_ref[...], 0.0)                          # (Bb, 512)
    g = jnp.dot(g.astype(jnp.bfloat16), w5_ref[...],
                preferred_element_type=jnp.float32)
    g = jnp.maximum(g + t5_ref[...], 0.0)                          # (Bb, 256)
    y = jnp.dot(g, w6_ref[...], preferred_element_type=jnp.float32)
    out_ref[...] = y + b6_ref[...]                                 # (Bb, 9)


# ---------------------------------------------------------------------------
# Parameters (deterministic, PyTorch-default-style uniform init)
# ---------------------------------------------------------------------------
def init_params(key, channel):
    dims = [(channel, 64), (64, 128), (128, 1024),    # conv1..conv3 (kernel=1)
            (1024, 512), (512, 256), (256, 9)]        # fc1..fc3
    keys = jax.random.split(key, 2 * len(dims))
    params = {}
    for i, (cin, cout) in enumerate(dims):
        bound = 1.0 / np.sqrt(cin)
        w = jax.random.uniform(keys[2 * i], (cin, cout), jnp.float32, -bound, bound)
        b = jax.random.uniform(keys[2 * i + 1], (cout,), jnp.float32, -bound, bound)
        params[f"w{i+1}"] = w            # stored already transposed: (Cin, Cout)
        params[f"b{i+1}"] = b
    for i, c in enumerate([64, 128, 1024, 512, 256]):
        params[f"bn{i+1}_gamma"] = jnp.ones((c,), jnp.float32)
        params[f"bn{i+1}_beta"] = jnp.zeros((c,), jnp.float32)
        params[f"bn{i+1}_mean"] = jnp.zeros((c,), jnp.float32)
        params[f"bn{i+1}_var"] = jnp.ones((c,), jnp.float32)
    return params


def _fold_bn(bias, gamma, beta, mean, var):
    """Fold (x@W + bias) -> BN(eval) into (scale on W, per-channel shift)."""
    scale = gamma / jnp.sqrt(var + BN_EPS)
    shift = (bias - mean) * scale + beta
    return scale, shift


def _prepare_params(p):
    """BN-fold + cast.  Row-major (Cin, Cout) layout; tiled path transposes."""
    s1, t1 = _fold_bn(p["b1"], p["bn1_gamma"], p["bn1_beta"], p["bn1_mean"], p["bn1_var"])
    s2, t2 = _fold_bn(p["b2"], p["bn2_gamma"], p["bn2_beta"], p["bn2_mean"], p["bn2_var"])
    s3, t3 = _fold_bn(p["b3"], p["bn3_gamma"], p["bn3_beta"], p["bn3_mean"], p["bn3_var"])
    s4, t4 = _fold_bn(p["b4"], p["bn4_gamma"], p["bn4_beta"], p["bn4_mean"], p["bn4_var"])
    s5, t5 = _fold_bn(p["b5"], p["bn5_gamma"], p["bn5_beta"], p["bn5_mean"], p["bn5_var"])
    return {
        "w1": (p["w1"] * s1[None, :]).astype(jnp.float32),      # (C, 64)
        "t1": t1.reshape(1, -1).astype(jnp.float32),
        "w2": (p["w2"] * s2[None, :]).astype(jnp.bfloat16),     # (64, 128)
        "t2": t2.reshape(1, -1).astype(jnp.float32),
        "w3": (p["w3"] * s3[None, :]).astype(jnp.bfloat16),     # (128, 1024)
        "t3": t3.reshape(1, -1).astype(jnp.float32),
        "w4": (p["w4"] * s4[None, :]).astype(jnp.bfloat16),     # (1024, 512)
        "t4": t4.reshape(1, -1).astype(jnp.float32),
        "w5": (p["w5"] * s5[None, :]).astype(jnp.bfloat16),     # (512, 256)
        "t5": t5.reshape(1, -1).astype(jnp.float32),
        "w6": p["w6"].astype(jnp.float32),                      # (256, 9)
        "b6": (p["b6"] + jnp.eye(3, dtype=jnp.float32).reshape(-1)).reshape(1, 9),
    }


# ---------------------------------------------------------------------------
# Wrappers
# ---------------------------------------------------------------------------
def _forward_tiled(x, q, tn):
    B, C, N = x.shape
    if tn is None:
        tn = N if N <= 1024 else 1024   # raise to 2048 on v6e if desired
    assert tn == N or tn % 128 == 0, "tn must equal N or be a multiple of 128"
    n_pad = -(-N // tn) * tn
    if n_pad != N:
        # replicate the last point; duplicates do not change the max-pool
        x = jnp.pad(x, ((0, 0), (0, 0), (0, n_pad - N)), mode="edge")
    num_tiles = n_pad // tn

    # channel-major operands (host-side transposes of the folded params)
    ops = (q["w1"].T, q["t1"].T, q["w2"].T, q["t2"].T, q["w3"].T, q["t3"].T,
           q["w4"].T, q["t4"].T, q["w5"].T, q["t5"].T, q["w6"].T, q["b6"].T)

    def cs(a):
        r = a.ndim
        return pl.BlockSpec(a.shape, lambda b, k, _r=r: (0,) * _r)

    out = pl.pallas_call(
        _stn3d_tiled_kernel,
        out_shape=jax.ShapeDtypeStruct((B, 9, 1), jnp.float32),
        grid=(B, num_tiles),
        in_specs=[pl.BlockSpec((1, C, tn), lambda b, k: (b, 0, k))]
                 + [cs(a) for a in ops],
        out_specs=pl.BlockSpec((1, 9, 1), lambda b, k: (b, 0, 0)),
        scratch_shapes=[pltpu.VMEM((1024, 1), jnp.float32)],
        compiler_params=pltpu.CompilerParams(
            dimension_semantics=("parallel", "arbitrary"),
            vmem_limit_bytes=VMEM_LIMIT),
    )(x, *ops)
    return out.reshape(B, 3, 3)


def _forward_packed(x, q, max_pack=8):
    B, C, N = x.shape
    np_ = -(-N // 8) * 8
    xt = jnp.transpose(x, (0, 2, 1))                              # (B, N, C)
    if np_ != N:
        xt = jnp.pad(xt, ((0, 0), (0, np_ - N), (0, 0)), mode="edge")
    bb = max(1, min(B, max_pack, 2048 // np_))                    # cap working set
    b_pad = -(-B // bb) * bb
    if b_pad != B:
        xt = jnp.pad(xt, ((0, b_pad - B), (0, 0), (0, 0)), mode="edge")

    args = (q["w1"], q["t1"], q["w2"], q["t2"], q["w3"], q["t3"],
            q["w4"], q["t4"], q["w5"], q["t5"], q["w6"], q["b6"])

    def cs(a):
        r = a.ndim
        return pl.BlockSpec(a.shape, lambda g, _r=r: (0,) * _r)

    out = pl.pallas_call(
        _stn3d_packed_kernel,
        out_shape=jax.ShapeDtypeStruct((b_pad, 9), jnp.float32),
        grid=(b_pad // bb,),
        in_specs=[pl.BlockSpec((bb, np_, C), lambda g: (g, 0, 0))]
                 + [cs(a) for a in args],
        out_specs=pl.BlockSpec((bb, 9), lambda g: (g, 0)),
        compiler_params=pltpu.CompilerParams(
            dimension_semantics=("parallel",),
            vmem_limit_bytes=VMEM_LIMIT),
    )(xt, *args)
    return out[:B].reshape(B, 3, 3)


def stn3d_forward(x, p, tn=None):
    """x: (B, C, N) float, PyTorch Conv1d NCL layout.  Returns (B, 3, 3)."""
    B, C, N = x.shape
    x = x.astype(jnp.float32)
    q = _prepare_params(p)
    if tn is None and N <= 256:
        return _forward_packed(x, q)          # batch-packed small-N path
    return _forward_tiled(x, q, tn)           # streamed / tiled large-N path


# Pure-JAX f32 reference of the same forward (eval-mode BN), for verification.
def stn3d_reference(x, p):
    def bn(h, i):
        return ((h - p[f"bn{i}_mean"]) / jnp.sqrt(p[f"bn{i}_var"] + BN_EPS)
                * p[f"bn{i}_gamma"] + p[f"bn{i}_beta"])

    xt = jnp.transpose(x, (0, 2, 1)).astype(jnp.float32)           # (B, N, C)
    h = jax.nn.relu(bn(xt @ p["w1"] + p["b1"], 1))
    h = jax.nn.relu(bn(h @ p["w2"] + p["b2"], 2))
    h = jax.nn.relu(bn(h @ p["w3"] + p["b3"], 3))                  # (B, N, 1024)
    f = jnp.max(h, axis=1)                                         # (B, 1024)
    h = jax.nn.relu(bn(f @ p["w4"] + p["b4"], 4))
    h = jax.nn.relu(bn(h @ p["w5"] + p["b5"], 5))
    y = h @ p["w6"] + p["b6"] + jnp.eye(3, dtype=jnp.float32).reshape(1, 9)
    return y.reshape(-1, 3, 3)


if __name__ == "__main__":
    key = jax.random.PRNGKey(0)
    ks = jax.random.split(key, 8)

    def check(B, C, N, kp, kx, tn=None):
        params = init_params(kp, C)
        x = jax.random.normal(kx, (B, C, N), dtype=jnp.float32)
        out = jax.block_until_ready(stn3d_forward(x, params, tn=tn))
        ref = jax.block_until_ready(stn3d_reference(x, params))
        assert out.shape == (B, 3, 3), out.shape
        assert jnp.allclose(out, ref, rtol=2e-2, atol=1e-2), (out, ref)

    # 1) small point cloud -> batch-packed single-step path (channel = 3)
    check(2, 3, 16, ks[0], ks[1])
    # 2) forced tn=128 -> tiled path, multi-tile running max + fused head
    #    finalize, MeshSegNet-style 15-channel input
    check(2, 15, 256, ks[2], ks[3], tn=128)
    # 3) mid-size N, default tile (tn == N, single full-extent block)
    check(3, 3, 700, ks[4], ks[5])
    # 4) large N: default TN=1024 tiling + edge padding of the point axis
    check(2, 15, 1500, ks[6], ks[7])

    print("KERNEL_OK")
</pallas_src>

<mosaic_0001>
module attributes {stable_mosaic.version = 11 : i64} {
  func.func @_stn3d_packed_kernel(%arg0: i32, %arg1: memref<2x16x3xf32, #tpu.memory_space<vmem>>, %arg2: memref<3x64xf32, #tpu.memory_space<vmem>>, %arg3: memref<1x64xf32, #tpu.memory_space<vmem>>, %arg4: memref<64x128xbf16, #tpu.memory_space<vmem>>, %arg5: memref<1x128xf32, #tpu.memory_space<vmem>>, %arg6: memref<128x1024xbf16, #tpu.memory_space<vmem>>, %arg7: memref<1x1024xf32, #tpu.memory_space<vmem>>, %arg8: memref<1024x512xbf16, #tpu.memory_space<vmem>>, %arg9: memref<1x512xf32, #tpu.memory_space<vmem>>, %arg10: memref<512x256xbf16, #tpu.memory_space<vmem>>, %arg11: memref<1x256xf32, #tpu.memory_space<vmem>>, %arg12: memref<256x9xf32, #tpu.memory_space<vmem>>, %arg13: memref<1x9xf32, #tpu.memory_space<vmem>>, %arg14: memref<2x9xf32, #tpu.memory_space<vmem>>) attributes {dimension_semantics = [#tpu.dimension_semantics<parallel>], iteration_bounds = array<i64: 1>, scalar_prefetch = 0 : i64, scratch_operands = 0 : i64, tpu.core_type = #tpu.core_type<tc>, window_params = [{transform_indices = @transform_0, window_bounds = array<i64: 2, 16, 3>}, {pipeline_mode = #tpu.pipeline_mode<synchronous>, transform_indices = @transform_1, window_bounds = array<i64: 3, 64>}, {pipeline_mode = #tpu.pipeline_mode<synchronous>, transform_indices = @transform_2, window_bounds = array<i64: 1, 64>}, {pipeline_mode = #tpu.pipeline_mode<synchronous>, transform_indices = @transform_3, window_bounds = array<i64: 64, 128>}, {pipeline_mode = #tpu.pipeline_mode<synchronous>, transform_indices = @transform_4, window_bounds = array<i64: 1, 128>}, {pipeline_mode = #tpu.pipeline_mode<synchronous>, transform_indices = @transform_5, window_bounds = array<i64: 128, 1024>}, {pipeline_mode = #tpu.pipeline_mode<synchronous>, transform_indices = @transform_6, window_bounds = array<i64: 1, 1024>}, {pipeline_mode = #tpu.pipeline_mode<synchronous>, transform_indices = @transform_7, window_bounds = array<i64: 1024, 512>}, {pipeline_mode = #tpu.pipeline_mode<synchronous>, transform_indices = @transform_8, window_bounds = array<i64: 1, 512>}, {pipeline_mode = #tpu.pipeline_mode<synchronous>, transform_indices = @transform_9, window_bounds = array<i64: 512, 256>}, {pipeline_mode = #tpu.pipeline_mode<synchronous>, transform_indices = @transform_10, window_bounds = array<i64: 1, 256>}, {pipeline_mode = #tpu.pipeline_mode<synchronous>, transform_indices = @transform_11, window_bounds = array<i64: 256, 9>}, {pipeline_mode = #tpu.pipeline_mode<synchronous>, transform_indices = @transform_12, window_bounds = array<i64: 1, 9>}, {transform_indices = @transform_13, window_bounds = array<i64: 2, 9>}]} {
    %c0 = arith.constant 0 : index
    %c0_0 = arith.constant 0 : index
    %c0_1 = arith.constant 0 : index
    %0 = vector.load %arg1[%c0, %c0_0, %c0_1] : memref<2x16x3xf32, #tpu.memory_space<vmem>>, vector<2x16x3xf32>
    %1 = vector.shape_cast %0 : vector<2x16x3xf32> to vector<32x3xf32>
    %c0_2 = arith.constant 0 : index
    %c0_3 = arith.constant 0 : index
    %2 = vector.load %arg2[%c0_2, %c0_3] : memref<3x64xf32, #tpu.memory_space<vmem>>, vector<3x64xf32>
    %cst = arith.constant dense<0.000000e+00> : vector<32x64xf32>
    %3 = tpu.matmul %1, %2, %cst {dimension_numbers = #tpu.dot_dimension_numbers<[1], [0], [0], [1], [0, 0, 1, 1], [], []>} : vector<32x3xf32>, vector<3x64xf32>, vector<32x64xf32> -> vector<32x64xf32>
    %c0_4 = arith.constant 0 : index
    %c0_5 = arith.constant 0 : index
    %4 = vector.load %arg3[%c0_4, %c0_5] : memref<1x64xf32, #tpu.memory_space<vmem>>, vector<1x64xf32>
    %5 = vector.broadcast %4 : vector<1x64xf32> to vector<32x64xf32>
    %6 = arith.addf %3, %5 : vector<32x64xf32>
    %cst_6 = arith.constant 0.000000e+00 : f32
    %7 = vector.broadcast %cst_6 : f32 to vector<32x64xf32>
    %8 = arith.maximumf %6, %7 : vector<32x64xf32>
    %9 = arith.truncf %8 : vector<32x64xf32> to vector<32x64xbf16>
    %c0_7 = arith.constant 0 : index
    %c0_8 = arith.constant 0 : index
    %10 = vector.load %arg4[%c0_7, %c0_8] : memref<64x128xbf16, #tpu.memory_space<vmem>>, vector<64x128xbf16>
    %cst_9 = arith.constant dense<0.000000e+00> : vector<32x128xf32>
    %11 = tpu.matmul %9, %10, %cst_9 {dimension_numbers = #tpu.dot_dimension_numbers<[1], [0], [0], [1], [0, 0, 1, 1], [], []>} : vector<32x64xbf16>, vector<64x128xbf16>, vector<32x128xf32> -> vector<32x128xf32>
    %c0_10 = arith.constant 0 : index
    %c0_11 = arith.constant 0 : index
    %12 = vector.load %arg5[%c0_10, %c0_11] : memref<1x128xf32, #tpu.memory_space<vmem>>, vector<1x128xf32>
    %13 = vector.broadcast %12 : vector<1x128xf32> to vector<32x128xf32>
    %14 = arith.addf %11, %13 : vector<32x128xf32>
    %cst_12 = arith.constant 0.000000e+00 : f32
    %15 = vector.broadcast %cst_12 : f32 to vector<32x128xf32>
    %16 = arith.maximumf %14, %15 : vector<32x128xf32>
    %17 = arith.truncf %16 : vector<32x128xf32> to vector<32x128xbf16>
    %c0_13 = arith.constant 0 : index
    %c0_14 = arith.constant 0 : index
    %18 = vector.load %arg6[%c0_13, %c0_14] : memref<128x1024xbf16, #tpu.memory_space<vmem>>, vector<128x1024xbf16>
    %cst_15 = arith.constant dense<0.000000e+00> : vector<32x1024xf32>
    %19 = tpu.matmul %17, %18, %cst_15 {dimension_numbers = #tpu.dot_dimension_numbers<[1], [0], [0], [1], [0, 0, 1, 1], [], []>} : vector<32x128xbf16>, vector<128x1024xbf16>, vector<32x1024xf32> -> vector<32x1024xf32>
    %20 = vector.shape_cast %19 : vector<32x1024xf32> to vector<2x16x1024xf32>
    %cst_16 = arith.constant dense<0xFF800000> : vector<2x1024xf32>
    %21 = vector.multi_reduction <maximumf>, %20, %cst_16 [1] : vector<2x16x1024xf32> to vector<2x1024xf32>
    %c0_17 = arith.constant 0 : index
    %c0_18 = arith.constant 0 : index
    %22 = vector.load %arg7[%c0_17, %c0_18] : memref<1x1024xf32, #tpu.memory_space<vmem>>, vector<1x1024xf32>
    %23 = vector.broadcast %22 : vector<1x1024xf32> to vector<2x1024xf32>
    %24 = arith.addf %21, %23 : vector<2x1024xf32>
    %cst_19 = arith.constant 0.000000e+00 : f32
    %25 = vector.broadcast %cst_19 : f32 to vector<2x1024xf32>
    %26 = arith.maximumf %24, %25 : vector<2x1024xf32>
    %27 = arith.truncf %26 : vector<2x1024xf32> to vector<2x1024xbf16>
    %c0_20 = arith.constant 0 : index
    %c0_21 = arith.constant 0 : index
    %28 = vector.load %arg8[%c0_20, %c0_21] : memref<1024x512xbf16, #tpu.memory_space<vmem>>, vector<1024x512xbf16>
    %cst_22 = arith.constant dense<0.000000e+00> : vector<2x512xf32>
    %29 = tpu.matmul %27, %28, %cst_22 {dimension_numbers = #tpu.dot_dimension_numbers<[1], [0], [0], [1], [0, 0, 1, 1], [], []>} : vector<2x1024xbf16>, vector<1024x512xbf16>, vector<2x512xf32> -> vector<2x512xf32>
    %c0_23 = arith.constant 0 : index
    %c0_24 = arith.constant 0 : index
    %30 = vector.load %arg9[%c0_23, %c0_24] : memref<1x512xf32, #tpu.memory_space<vmem>>, vector<1x512xf32>
    %31 = vector.broadcast %30 : vector<1x512xf32> to vector<2x512xf32>
    %32 = arith.addf %29, %31 : vector<2x512xf32>
    %cst_25 = arith.constant 0.000000e+00 : f32
    %33 = vector.broadcast %cst_25 : f32 to vector<2x512xf32>
    %34 = arith.maximumf %32, %33 : vector<2x512xf32>
    %35 = arith.truncf %34 : vector<2x512xf32> to vector<2x512xbf16>
    %c0_26 = arith.constant 0 : index
    %c0_27 = arith.constant 0 : index
    %36 = vector.load %arg10[%c0_26, %c0_27] : memref<512x256xbf16, #tpu.memory_space<vmem>>, vector<512x256xbf16>
    %cst_28 = arith.constant dense<0.000000e+00> : vector<2x256xf32>
    %37 = tpu.matmul %35, %36, %cst_28 {dimension_numbers = #tpu.dot_dimension_numbers<[1], [0], [0], [1], [0, 0, 1, 1], [], []>} : vector<2x512xbf16>, vector<512x256xbf16>, vector<2x256xf32> -> vector<2x256xf32>
    %c0_29 = arith.constant 0 : index
    %c0_30 = arith.constant 0 : index
    %38 = vector.load %arg11[%c0_29, %c0_30] : memref<1x256xf32, #tpu.memory_space<vmem>>, vector<1x256xf32>
    %39 = vector.broadcast %38 : vector<1x256xf32> to vector<2x256xf32>
    %40 = arith.addf %37, %39 : vector<2x256xf32>
    %cst_31 = arith.constant 0.000000e+00 : f32
    %41 = vector.broadcast %cst_31 : f32 to vector<2x256xf32>
    %42 = arith.maximumf %40, %41 : vector<2x256xf32>
    %c0_32 = arith.constant 0 : index
    %c0_33 = arith.constant 0 : index
    %43 = vector.load %arg12[%c0_32, %c0_33] : memref<256x9xf32, #tpu.memory_space<vmem>>, vector<256x9xf32>
    %cst_34 = arith.constant dense<0.000000e+00> : vector<2x9xf32>
    %44 = tpu.matmul %42, %43, %cst_34 {dimension_numbers = #tpu.dot_dimension_numbers<[1], [0], [0], [1], [0, 0, 1, 1], [], []>} : vector<2x256xf32>, vector<256x9xf32>, vector<2x9xf32> -> vector<2x9xf32>
    %c0_35 = arith.constant 0 : index
    %c0_36 = arith.constant 0 : index
    %45 = vector.load %arg13[%c0_35, %c0_36] : memref<1x9xf32, #tpu.memory_space<vmem>>, vector<1x9xf32>
    %46 = vector.broadcast %45 : vector<1x9xf32> to vector<2x9xf32>
    %47 = arith.addf %44, %46 : vector<2x9xf32>
    %c0_37 = arith.constant 0 : index
    %c0_38 = arith.constant 0 : index
    %48 = vector.load %arg14[%c0_37, %c0_38] : memref<2x9xf32, #tpu.memory_space<vmem>>, vector<2x9xf32>
    tpu.vector_store %arg14[%c0_37, %c0_38], %47 {strides = array<i32>} : memref<2x9xf32, #tpu.memory_space<vmem>>, vector<2x9xf32>,
    return
  }
  func.func @transform_0(%arg0: i32) -> (i32, i32, i32) {
    %c0_i32 = arith.constant 0 : i32
    %c0_i32_0 = arith.constant 0 : i32
    %c0_i32_1 = arith.constant 0 : i32
    return %arg0, %c0_i32, %c0_i32_0 : i32, i32, i32
  }
  func.func @transform_1(%arg0: i32) -> (i32, i32) {
    %c0_i32 = arith.constant 0 : i32
    %c0_i32_0 = arith.constant 0 : i32
    %c0_i32_1 = arith.constant 0 : i32
    return %c0_i32, %c0_i32_0 : i32, i32
  }
  func.func @transform_2(%arg0: i32) -> (i32, i32) {
    %c0_i32 = arith.constant 0 : i32
    %c0_i32_0 = arith.constant 0 : i32
    %c0_i32_1 = arith.constant 0 : i32
    return %c0_i32, %c0_i32_0 : i32, i32
  }
  func.func @transform_3(%arg0: i32) -> (i32, i32) {
    %c0_i32 = arith.constant 0 : i32
    %c0_i32_0 = arith.constant 0 : i32
    %c0_i32_1 = arith.constant 0 : i32
    return %c0_i32, %c0_i32_0 : i32, i32
  }
  func.func @transform_4(%arg0: i32) -> (i32, i32) {
    %c0_i32 = arith.constant 0 : i32
    %c0_i32_0 = arith.constant 0 : i32
    %c0_i32_1 = arith.constant 0 : i32
    return %c0_i32, %c0_i32_0 : i32, i32
  }
  func.func @transform_5(%arg0: i32) -> (i32, i32) {
    %c0_i32 = arith.constant 0 : i32
    %c0_i32_0 = arith.constant 0 : i32
    %c0_i32_1 = arith.constant 0 : i32
    return %c0_i32, %c0_i32_0 : i32, i32
  }
  func.func @transform_6(%arg0: i32) -> (i32, i32) {
    %c0_i32 = arith.constant 0 : i32
    %c0_i32_0 = arith.constant 0 : i32
    %c0_i32_1 = arith.constant 0 : i32
    return %c0_i32, %c0_i32_0 : i32, i32
  }
  func.func @transform_7(%arg0: i32) -> (i32, i32) {
    %c0_i32 = arith.constant 0 : i32
    %c0_i32_0 = arith.constant 0 : i32
    %c0_i32_1 = arith.constant 0 : i32
    return %c0_i32, %c0_i32_0 : i32, i32
  }
  func.func @transform_8(%arg0: i32) -> (i32, i32) {
    %c0_i32 = arith.constant 0 : i32
    %c0_i32_0 = arith.constant 0 : i32
    %c0_i32_1 = arith.constant 0 : i32
    return %c0_i32, %c0_i32_0 : i32, i32
  }
  func.func @transform_9(%arg0: i32) -> (i32, i32) {
    %c0_i32 = arith.constant 0 : i32
    %c0_i32_0 = arith.constant 0 : i32
    %c0_i32_1 = arith.constant 0 : i32
    return %c0_i32, %c0_i32_0 : i32, i32
  }
  func.func @transform_10(%arg0: i32) -> (i32, i32) {
    %c0_i32 = arith.constant 0 : i32
    %c0_i32_0 = arith.constant 0 : i32
    %c0_i32_1 = arith.constant 0 : i32
    return %c0_i32, %c0_i32_0 : i32, i32
  }
  func.func @transform_11(%arg0: i32) -> (i32, i32) {
    %c0_i32 = arith.constant 0 : i32
    %c0_i32_0 = arith.constant 0 : i32
    %c0_i32_1 = arith.constant 0 : i32
    return %c0_i32, %c0_i32_0 : i32, i32
  }
  func.func @transform_12(%arg0: i32) -> (i32, i32) {
    %c0_i32 = arith.constant 0 : i32
    %c0_i32_0 = arith.constant 0 : i32
    %c0_i32_1 = arith.constant 0 : i32
    return %c0_i32, %c0_i32_0 : i32, i32
  }
  func.func @transform_13(%arg0: i32) -> (i32, i32) {
    %c0_i32 = arith.constant 0 : i32
    %c0_i32_0 = arith.constant 0 : i32
    return %arg0, %c0_i32 : i32, i32
  }
}

</mosaic_0001>

<llo_original>
// kernel: tpu_custom_call.1
$region0: #{tpu_custom_call.1}
  #allocation0 [shape = 'u32[]', space=smem, size = 0x4, offset = 0x4, fixed_abs, tag = 'smem constant byte address 0x4 - core index']
  #allocation1 [shape = 'u32[144,128]{1,0:T(1,128)}', space=vmem, size = 0x12000, scoped, tag = 'internal scratch']
  %s0 = inlined_call_operand.vmem [shape: f32[2,16,3], index: 0, kind: input, shape index: {}]
  %s1 = inlined_call_operand.vmem [shape: f32[3,64], index: 1, kind: input, shape index: {}]
  %s2 = inlined_call_operand.vmem [shape: f32[1,64], index: 2, kind: input, shape index: {}]
  %s3 = inlined_call_operand.vmem [shape: bf16[64,128], index: 3, kind: input, shape index: {}]
  %s4 = inlined_call_operand.vmem [shape: f32[1,128], index: 4, kind: input, shape index: {}]
  %s5 = inlined_call_operand.hbm [shape: bf16[128,1024], index: 5, kind: input, shape index: {}]
  %s6 = inlined_call_operand.vmem [shape: f32[1,1024], index: 6, kind: input, shape index: {}]
  %s7 = inlined_call_operand.hbm [shape: bf16[1024,512], index: 7, kind: input, shape index: {}]
  %s8 = inlined_call_operand.vmem [shape: f32[1,512], index: 8, kind: input, shape index: {}]
  %s9 = inlined_call_operand.hbm [shape: bf16[512,256], index: 9, kind: input, shape index: {}]
  %s10 = inlined_call_operand.vmem [shape: f32[1,256], index: 10, kind: input, shape index: {}]
  %s11 = inlined_call_operand.vmem [shape: f32[256,9], index: 11, kind: input, shape index: {}]
  %s12 = inlined_call_operand.vmem [shape: f32[1,9], index: 12, kind: input, shape index: {}]
  %s13 = inlined_call_operand.hbm [shape: f32[2,9], index: 13, kind: output, shape index: {}]
  %s14 = sld [smem:[#allocation0]]
  $region74: #{tpu_custom_call.1} parent=0
    _
  %s16 = ssub.s32 1, %s14
  %s17 = scalar_select 0, %s16, %s14
  $region1: #{tpu_custom_call.1} parent=0
    #allocation2 [shape = 'u8[262144]{0}', space=vmem, size = 0x40000, scoped, tag = 'input window, operand 5, single buffered']
    #allocation3 [shape = 's32[1]{0}', space=sflag, size = 0x4, scoped, tag = 'scoped memory for tpu_custom_call.1']
    #allocation4 [shape = 's32[1]{0}', space=sflag, size = 0x4, scoped, tag = 'scoped memory for tpu_custom_call.1']
    #allocation5 [shape = 'u8[1048576]{0}', space=vmem, size = 0x100000, scoped, tag = 'input window, operand 7, single buffered']
    #allocation6 [shape = 's32[1]{0}', space=sflag, size = 0x4, scoped, tag = 'scoped memory for tpu_custom_call.1']
    #allocation7 [shape = 'u8[262144]{0}', space=vmem, size = 0x40000, scoped, tag = 'input window, operand 9, single buffered']
    #allocation8 [shape = 'u8[1024]{0}', space=vmem, size = 0x400, scoped, tag = 'output window, operand 0, single buffered']
    %18 = vsyncpa [#allocation3], 0
    %19 = vsyncpa [#allocation6], 0
    %20 = vsyncpa [#allocation4], 0
    // Predicated region
    $region2: #{tpu_custom_call.1} parent=1 // pred_check
      _
    $region3: #{tpu_custom_call.1} parent=1 // pred_check_branch
      %22 = sbr.rel (0) target = $region5
    $region4: #{tpu_custom_call.1} parent=1 // pred_region
      _
    $region5: #{tpu_custom_call.1} parent=1 // pred_fallthru
      _
    // Predicated region
    $region6: #{tpu_custom_call.1} parent=1 // pred_check
      _
    $region7: #{tpu_custom_call.1} parent=1 // pred_check_branch
      %24 = sbr.rel (0) target = $region9
    $region8: #{tpu_custom_call.1} parent=1 // pred_region
      _
    $region9: #{tpu_custom_call.1} parent=1 // pred_fallthru
      _
    // Predicated region
    $region10: #{tpu_custom_call.1} parent=1 // pred_check
      _
    $region11: #{tpu_custom_call.1} parent=1 // pred_check_branch
      %26 = sbr.rel (0) target = $region13
    $region12: #{tpu_custom_call.1} parent=1 // pred_region
      _
    $region13: #{tpu_custom_call.1} parent=1 // pred_fallthru
      _
    // Predicated region
    $region14: #{tpu_custom_call.1} parent=1 // pred_check
      _
    $region15: #{tpu_custom_call.1} parent=1 // pred_check_branch
      %28 = sbr.rel (0) target = $region17
    $region16: #{tpu_custom_call.1} parent=1 // pred_region
      _
    $region17: #{tpu_custom_call.1} parent=1 // pred_fallthru
      _
    // Predicated region
    $region18: #{tpu_custom_call.1} parent=1 // pred_check
      _
    $region19: #{tpu_custom_call.1} parent=1 // pred_check_branch
      %30 = sbr.rel (0) target = $region21
    $region20: #{tpu_custom_call.1} parent=1 // pred_region
      _
    $region21: #{tpu_custom_call.1} parent=1 // pred_fallthru
      _
    // Predicated region
    $region22: #{tpu_custom_call.1} parent=1 // pred_check
      _
    $region23: #{tpu_custom_call.1} parent=1 // pred_check_branch
      %32 = sbr.rel (0) target = $region25
    $region24: #{tpu_custom_call.1} parent=1 // pred_region
      %s34 = ssub.s32 8192, 8192
      %35 = vsyncadd [#allocation3], %s34
      %s36 = sshll.u32 [#allocation2], 4
      %s37 = int_to_ptr.vmem [resolvable:$true] %s36
      %42 = dma.hbm_to_vmem [thread:$0]  %s5, 8192, %s37, [#allocation3], 512, 512, 32
    $region25: #{tpu_custom_call.1} parent=1 // pred_fallthru
      _
    // Predicated region
    $region26: #{tpu_custom_call.1} parent=1 // pred_check
      _
    $region27: #{tpu_custom_call.1} parent=1 // pred_check_branch
      %44 = sbr.rel (0) target = $region29
    $region28: #{tpu_custom_call.1} parent=1 // pred_region
      _
    $region29: #{tpu_custom_call.1} parent=1 // pred_fallthru
      _
    // Predicated region
    $region30: #{tpu_custom_call.1} parent=1 // pred_check
      _
    $region31: #{tpu_custom_call.1} parent=1 // pred_check_branch
      %46 = sbr.rel (0) target = $region33
    $region32: #{tpu_custom_call.1} parent=1 // pred_region
      %s48 = ssub.s32 32768, 32768
      %49 = vsyncadd [#allocation6], %s48
      %s50 = sshll.u32 [#allocation5], 4
      %s51 = int_to_ptr.vmem [resolvable:$true] %s50
      %56 = dma.hbm_to_vmem [thread:$0]  %s7, 32768, %s51, [#allocation6], 256, 256, 16
    $region33: #{tpu_custom_call.1} parent=1 // pred_fallthru
      _
    // Predicated region
    $region34: #{tpu_custom_call.1} parent=1 // pred_check
      _
    $region35: #{tpu_custom_call.1} parent=1 // pred_check_branch
      %58 = sbr.rel (0) target = $region37
    $region36: #{tpu_custom_call.1} parent=1 // pred_region
      _
    $region37: #{tpu_custom_call.1} parent=1 // pred_fallthru
      _
    // Predicated region
    $region38: #{tpu_custom_call.1} parent=1 // pred_check
      _
    $region39: #{tpu_custom_call.1} parent=1 // pred_check_branch
      %60 = sbr.rel (0) target = $region41
    $region40: #{tpu_custom_call.1} parent=1 // pred_region
      %s62 = ssub.s32 8192, 8192
      %63 = vsyncadd [#allocation6], %s62
      %s64 = sshll.u32 [#allocation7], 4
      %s65 = int_to_ptr.vmem [resolvable:$true] %s64
      %70 = dma.hbm_to_vmem [thread:$0]  %s9, 8192, %s65, [#allocation6], 128, 128, 8
    $region41: #{tpu_custom_call.1} parent=1 // pred_fallthru
      _
    // Predicated region
    $region42: #{tpu_custom_call.1} parent=1 // pred_check
      _
    $region43: #{tpu_custom_call.1} parent=1 // pred_check_branch
      %72 = sbr.rel (0) target = $region45
    $region44: #{tpu_custom_call.1} parent=1 // pred_region
      _
    $region45: #{tpu_custom_call.1} parent=1 // pred_fallthru
      _
    // Predicated region
    $region46: #{tpu_custom_call.1} parent=1 // pred_check
      _
    $region47: #{tpu_custom_call.1} parent=1 // pred_check_branch
      %74 = sbr.rel (0) target = $region49
    $region48: #{tpu_custom_call.1} parent=1 // pred_region
      _
    $region49: #{tpu_custom_call.1} parent=1 // pred_fallthru
      _
    // Predicated region
    $region50: #{tpu_custom_call.1} parent=1 // pred_check
      _
    $region51: #{tpu_custom_call.1} parent=1 // pred_check_branch
      %76 = sbr.rel (0) target = $region53
    $region52: #{tpu_custom_call.1} parent=1 // pred_region
      _
    $region53: #{tpu_custom_call.1} parent=1 // pred_fallthru
      _
    // Predicated region
    $region54: #{tpu_custom_call.1} parent=1 // pred_check
      _
    $region55: #{tpu_custom_call.1} parent=1 // pred_check_branch
      %78 = sbr.rel (0) target = $region57
    $region56: #{tpu_custom_call.1} parent=1 // pred_region
      %79 = dma.done [#allocation3], 8192
    $region57: #{tpu_custom_call.1} parent=1 // pred_fallthru
      _
    // Predicated region
    $region58: #{tpu_custom_call.1} parent=1 // pred_check
      _
    $region59: #{tpu_custom_call.1} parent=1 // pred_check_branch
      %81 = sbr.rel (0) target = $region61
    $region60: #{tpu_custom_call.1} parent=1 // pred_region
      %82 = dma.done [#allocation6], 32768
    $region61: #{tpu_custom_call.1} parent=1 // pred_fallthru
      _
    // Predicated region
    $region62: #{tpu_custom_call.1} parent=1 // pred_check
      _
    $region63: #{tpu_custom_call.1} parent=1 // pred_check_branch
      %84 = sbr.rel (0) target = $region65
    $region64: #{tpu_custom_call.1} parent=1 // pred_region
      %85 = dma.done [#allocation6], 8192
    $region65: #{tpu_custom_call.1} parent=1 // pred_fallthru
      _
    %v87 = vld [vmem:[%s0] sm:$0xff]
    %v88 = vld [vmem:[%s0 + $0x8] sm:$0xff]
    %v89 = vld [vmem:[%s0 + $0x10] sm:$0xff]
    %v90 = vld [vmem:[%s0 + $0x18] sm:$0xff]
    %v91 = vld [vmem:[%s1] sm:$0x7]
    %v92 = vld [vmem:[%s2] sm:$0x1]
    %v94 = vlaneseq
    %v95 = vshrl.u32 %v94, 7
    %v96 = vsub.s32 0, %v95
    %v97 = vrot.slane %v92, %v96
    %vm99 = vcmask 23552
    %v101 = vsel %vm99, %v87, 0
    %v104 = vsel %vm99, %v88, 0
    %v107 = vsel %vm99, %v89, 0
    %v110 = vsel %vm99, %v90, 0
    %vm112 = vcmask 1042432
    %v114 = vsel %vm112, %v91, 0
    %116 = vmatprep.subr.mxu0 0.0
    %117 = vmatpush1.msra.mxu0 %v114
    %118 = vmatprep.subr.mxu0 0.0
    %119 = vmatpush1.msra.mxu0 0.0
    %120 = vmatprep.subr.mxu0 0.0
    %121 = vmatpush1.msra.mxu0 0.0
    %122 = vmatprep.subr.mxu0 0.0
    %123 = vmatpush1.msra.mxu0 0.0
    %124 = vmatprep.subr.mxu0 0.0
    %125 = vmatpush1.msra.mxu0 0.0
    %126 = vmatprep.subr.mxu0 0.0
    %127 = vmatpush1.msra.mxu0 0.0
    %128 = vmatprep.subr.mxu0 0.0
    %129 = vmatpush1.msra.mxu0 0.0
    %130 = vmatprep.subr.mxu0 0.0
    %131 = vmatpush1.msra.mxu0 0.0
    %132 = vmatprep.subr.mxu0 0.0
    %133 = vmatpush1.msra.mxu0 0.0
    %134 = vmatprep.subr.mxu0 0.0
    %135 = vmatpush1.msra.mxu0 0.0
    %136 = vmatprep.subr.mxu0 0.0
    %137 = vmatpush1.msra.mxu0 0.0
    %138 = vmatprep.subr.mxu0 0.0
    %139 = vmatpush1.msra.mxu0 0.0
    %140 = vmatprep.subr.mxu0 0.0
    %141 = vmatpush1.msra.mxu0 0.0
    %142 = vmatprep.subr.mxu0 0.0
    %143 = vmatpush1.msra.mxu0 0.0
    %144 = vmatprep.subr.mxu0 0.0
    %145 = vmatpush1.msra.mxu0 0.0
    %146 = vmatprep.subr.mxu0 0.0
    %147 = vmatpush1.msra.mxu0 0.0
    %148 = vmatprep.subr.mxu0 0.0
    %149 = vmatpush1.msra.mxu0 0.0
    %150 = vmatprep.subr.mxu0 0.0
    %151 = vmatpush1.msra.mxu0 0.0
    %152 = vmatprep.subr.mxu0 0.0
    %153 = vmatpush1.msra.mxu0 0.0
    %154 = vmatprep.subr.mxu0 0.0
    %155 = vmatpush1.msra.mxu0 0.0
    %156 = vmatprep.subr.mxu0 0.0
    %157 = vmatpush1.msra.mxu0 0.0
    %158 = vmatprep.subr.mxu0 0.0
    %159 = vmatpush1.msra.mxu0 0.0
    %160 = vmatprep.subr.mxu0 0.0
    %161 = vmatpush1.msra.mxu0 0.0
    %162 = vmatprep.subr.mxu0 0.0
    %163 = vmatpush1.msra.mxu0 0.0
    %164 = vmatprep.subr.mxu0 0.0
    %165 = vmatpush1.msra.mxu0 0.0
    %166 = vmatprep.subr.mxu0 0.0
    %167 = vmatpush1.msra.mxu0 0.0
    %168 = vmatprep.subr.mxu0 0.0
    %169 = vmatpush1.msra.mxu0 0.0
    %170 = vmatprep.subr.mxu0 0.0
    %171 = vmatpush1.msra.mxu0 0.0
    %172 = vmatprep.subr.mxu0 0.0
    %173 = vmatpush1.msra.mxu0 0.0
    %174 = vmatprep.subr.mxu0 0.0
    %175 = vmatpush1.msra.mxu0 0.0
    %176 = vmatprep.subr.mxu0 0.0
    %177 = vmatpush1.msra.mxu0 0.0
    %178 = vmatprep.subr.mxu0 0.0
    %179 = vmatpush1.msra.mxu0 0.0
    %180 = vmatprep.mubr.f32.mxu0 0.0
    %181 = vmatmul.mubr.f32.gmra.mrb[0].mxu0 %v101
    %v182 = vpop.f32.mrb[0].mxu0
    %v183 = vadd.f32 %v97, %v182
    %v184 = vpop.f32.mrb[0].mxu0
    %185 = vmatprep.mubr.f32.mxu0 0.0
    %186 = vmatmul.mubr.f32.gmra.mrb[0].mxu0 %v104
    %v187 = vpop.f32.mrb[0].mxu0
    %v188 = vadd.f32 %v97, %v187
    %v189 = vpop.f32.mrb[0].mxu0
    %190 = vmatprep.mubr.f32.mxu0 0.0
    %191 = vmatmul.mubr.f32.gmra.mrb[0].mxu0 %v107
    %v192 = vpop.f32.mrb[0].mxu0
    %v193 = vadd.f32 %v97, %v192
    %v194 = vpop.f32.mrb[0].mxu0
    %195 = vmatprep.mubr.f32.mxu0 0.0
    %196 = vmatmul.mubr.f32.gmra.mrb[0].mxu0 %v110
    %v197 = vpop.f32.mrb[0].mxu0
    %v198 = vadd.f32 %v97, %v197
    %v199 = vpop.f32.mrb[0].mxu0
    %200 = vdwg.mxu0
    %v201 = vmax.f32 %v183, 0.0
    %v202 = vmax.f32 %v188, 0.0
    %v203 = vmax.f32 %v193, 0.0
    %v204 = vmax.f32 %v198, 0.0
    %v205 = vpack.c.bf16 %v202, %v201
    %v206 = vpack.c.bf16 %v204, %v203
    %v207 = vld [vmem:[%s3] sm:$0xf]
    %v208 = vld [vmem:[%s3 + $0x4] sm:$0xf]
    %v209 = vld [vmem:[%s3 + $0x8] sm:$0xf]
    %v210 = vld [vmem:[%s3 + $0xc] sm:$0xf]
    %v211 = vld [vmem:[%s3 + $0x10] sm:$0xf]
    %v212 = vld [vmem:[%s3 + $0x14] sm:$0xf]
    %v213 = vld [vmem:[%s3 + $0x18] sm:$0xf]
    %v214 = vld [vmem:[%s3 + $0x1c] sm:$0xf]
    %v215 = vld [vmem:[%s4] sm:$0x1]
    %v217 = vlaneseq
    %v218 = vshrl.u32 %v217, 7
    %v219 = vsub.s32 0, %v218
    %v220 = vrot.slane %v215, %v219
    %v230 = vunpack.c.l.b16 %v207
    %v231 = vunpack.c.l.b16 %v208
    %v232 = vunpack.c.l.b16 %v209
    %v233 = vunpack.c.l.b16 %v210
    %v234 = vunpack.c.l.b16 %v211
    %v235 = vunpack.c.l.b16 %v212
    %v236 = vunpack.c.l.b16 %v213
    %v237 = vunpack.c.l.b16 %v214
    %v238 = vpack.c.b16 %v231, %v230
    %v239 = vpack.c.b16 %v233, %v232
    %v240 = vpack.c.b16 %v235, %v234
    %v241 = vpack.c.b16 %v237, %v236
    %vm246 = vcmask 523264
    %v248 = vsel %vm246, %v205, 0
    %v251 = vsel %vm246, %v206, 0
    %253 = vmatprep.subr.bf16.mxu0 0
    %254 = vmatpush1.bf16.msra.mxu0 %v238
    %255 = vmatprep.subr.bf16.mxu0 0
    %256 = vmatpush1.bf16.msra.mxu0 %v239
    %257 = vmatprep.subr.bf16.mxu0 0
    %258 = vmatpush1.bf16.msra.mxu0 %v240
    %259 = vmatprep.subr.bf16.mxu0 0
    %260 = vmatpush1.bf16.msra.mxu0 %v241
    %261 = vmatprep.subr.bf16.mxu0 0
    %262 = vmatpush1.bf16.msra.mxu0 0
    %263 = vmatprep.subr.bf16.mxu0 0
    %264 = vmatpush1.bf16.msra.mxu0 0
    %265 = vmatprep.subr.bf16.mxu0 0
    %266 = vmatpush1.bf16.msra.mxu0 0
    %267 = vmatprep.subr.bf16.mxu0 0
    %268 = vmatpush1.bf16.msra.mxu0 0
    %269 = vmatprep.subr.bf16.mxu0 0
    %270 = vmatpush1.bf16.msra.mxu0 0
    %271 = vmatprep.subr.bf16.mxu0 0
    %272 = vmatpush1.bf16.msra.mxu0 0
    %273 = vmatprep.subr.bf16.mxu0 0
    %274 = vmatpush1.bf16.msra.mxu0 0
    %275 = vmatprep.subr.bf16.mxu0 0
    %276 = vmatpush1.bf16.msra.mxu0 0
    %277 = vmatprep.subr.bf16.mxu0 0
    %278 = vmatpush1.bf16.msra.mxu0 0
    %279 = vmatprep.subr.bf16.mxu0 0
    %280 = vmatpush1.bf16.msra.mxu0 0
    %281 = vmatprep.subr.bf16.mxu0 0
    %282 = vmatpush1.bf16.msra.mxu0 0
    %283 = vmatprep.subr.bf16.mxu0 0
    %284 = vmatpush1.bf16.msra.mxu0 0
    %285 = vmatprep.mubr.bf16.mxu0 0
    %286 = vmatmul.mubr.bf16.gmra.mrb[0].mxu0 %v248
    %v287 = vpop.f32.mrb[0].mxu0
    %v288 = vadd.f32 %v220, %v287
    %v289 = vpop.f32.mrb[0].mxu0
    %v290 = vpop.f32.mrb[0].mxu0
    %v291 = vadd.f32 %v220, %v290
    %v292 = vpop.f32.mrb[0].mxu0
    %293 = vmatprep.mubr.bf16.mxu0 0
    %294 = vmatmul.mubr.bf16.gmra.mrb[0].mxu0 %v251
    %v295 = vpop.f32.mrb[0].mxu0
    %v296 = vadd.f32 %v220, %v295
    %v297 = vpop.f32.mrb[0].mxu0
    %v298 = vpop.f32.mrb[0].mxu0
    %v299 = vadd.f32 %v220, %v298
    %v300 = vpop.f32.mrb[0].mxu0
    %301 = vdwg.mxu0
    %v302 = vmax.f32 %v288, 0.0
    %v303 = vmax.f32 %v291, 0.0
    %v304 = vmax.f32 %v296, 0.0
    %v305 = vmax.f32 %v299, 0.0
    %v306 = vpack.c.bf16 %v303, %v302
    %v307 = vpack.c.bf16 %v305, %v304
    %v308 = vld [vmem:[#allocation2] sm:$0xff]
    %v309 = vld [vmem:[#allocation2 + $0x8] sm:$0xff]
    %v310 = vld [vmem:[#allocation2 + $0x10] sm:$0xff]
    %v311 = vld [vmem:[#allocation2 + $0x18] sm:$0xff]
    %v312 = vld [vmem:[#allocation2 + $0x20] sm:$0xff]
    %v313 = vld [vmem:[#allocation2 + $0x28] sm:$0xff]
    %v314 = vld [vmem:[#allocation2 + $0x30] sm:$0xff]
    %v315 = vld [vmem:[#allocation2 + $0x38] sm:$0xff]
    %v316 = vld [vmem:[#allocation2 + $0x40] sm:$0xff]
    %v317 = vld [vmem:[#allocation2 + $0x48] sm:$0xff]
    %v318 = vld [vmem:[#allocation2 + $0x50] sm:$0xff]
    %v319 = vld [vmem:[#allocation2 + $0x58] sm:$0xff]
    %v320 = vld [vmem:[#allocation2 + $0x60] sm:$0xff]
    %v321 = vld [vmem:[#allocation2 + $0x68] sm:$0xff]
    %v322 = vld [vmem:[#allocation2 + $0x70] sm:$0xff]
    %v323 = vld [vmem:[#allocation2 + $0x78] sm:$0xff]
    %v324 = vld [vmem:[#allocation2 + $0x80] sm:$0xff]
    %v325 = vld [vmem:[#allocation2 + $0x88] sm:$0xff]
    %v326 = vld [vmem:[#allocation2 + $0x90] sm:$0xff]
    %v327 = vld [vmem:[#allocation2 + $0x98] sm:$0xff]
    %v328 = vld [vmem:[#allocation2 + $0xa0] sm:$0xff]
    %v329 = vld [vmem:[#allocation2 + $0xa8] sm:$0xff]
    %v330 = vld [vmem:[#allocation2 + $0xb0] sm:$0xff]
    %v331 = vld [vmem:[#allocation2 + $0xb8] sm:$0xff]
    %v332 = vld [vmem:[#allocation2 + $0xc0] sm:$0xff]
    %v333 = vld [vmem:[#allocation2 + $0xc8] sm:$0xff]
    %v334 = vld [vmem:[#allocation2 + $0xd0] sm:$0xff]
    %v335 = vld [vmem:[#allocation2 + $0xd8] sm:$0xff]
    %v336 = vld [vmem:[#allocation2 + $0xe0] sm:$0xff]
    %v337 = vld [vmem:[#allocation2 + $0xe8] sm:$0xff]
    %v338 = vld [vmem:[#allocation2 + $0xf0] sm:$0xff]
    %v339 = vld [vmem:[#allocation2 + $0xf8] sm:$0xff]
    %v340 = vld [vmem:[#allocation2 + $0x100] sm:$0xff]
    %v341 = vld [vmem:[#allocation2 + $0x108] sm:$0xff]
    %v342 = vld [vmem:[#allocation2 + $0x110] sm:$0xff]
    %v343 = vld [vmem:[#allocation2 + $0x118] sm:$0xff]
    %v344 = vld [vmem:[#allocation2 + $0x120] sm:$0xff]
    %v345 = vld [vmem:[#allocation2 + $0x128] sm:$0xff]
    %v346 = vld [vmem:[#allocation2 + $0x130] sm:$0xff]
    %v347 = vld [vmem:[#allocation2 + $0x138] sm:$0xff]
    %v348 = vld [vmem:[#allocation2 + $0x140] sm:$0xff]
    %v349 = vld [vmem:[#allocation2 + $0x148] sm:$0xff]
    %v350 = vld [vmem:[#allocation2 + $0x150] sm:$0xff]
    %v351 = vld [vmem:[#allocation2 + $0x158] sm:$0xff]
    %v352 = vld [vmem:[#allocation2 + $0x160] sm:$0xff]
    %v353 = vld [vmem:[#allocation2 + $0x168] sm:$0xff]
    %v354 = vld [vmem:[#allocation2 + $0x170] sm:$0xff]
    %v355 = vld [vmem:[#allocation2 + $0x178] sm:$0xff]
    %v356 = vld [vmem:[#allocation2 + $0x180] sm:$0xff]
    %v357 = vld [vmem:[#allocation2 + $0x188] sm:$0xff]
    %v358 = vld [vmem:[#allocation2 + $0x190] sm:$0xff]
    %v359 = vld [vmem:[#allocation2 + $0x198] sm:$0xff]
    %v360 = vld [vmem:[#allocation2 + $0x1a0] sm:$0xff]
    %v361 = vld [vmem:[#allocation2 + $0x1a8] sm:$0xff]
    %v362 = vld [vmem:[#allocation2 + $0x1b0] sm:$0xff]
    %v363 = vld [vmem:[#allocation2 + $0x1b8] sm:$0xff]
    %v364 = vld [vmem:[#allocation2 + $0x1c0] sm:$0xff]
    %v365 = vld [vmem:[#allocation2 + $0x1c8] sm:$0xff]
    %v366 = vld [vmem:[#allocation2 + $0x1d0] sm:$0xff]
    %v367 = vld [vmem:[#allocation2 + $0x1d8] sm:$0xff]
    %v368 = vld [vmem:[#allocation2 + $0x1e0] sm:$0xff]
    %v369 = vld [vmem:[#allocation2 + $0x1e8] sm:$0xff]
    %v370 = vld [vmem:[#allocation2 + $0x1f0] sm:$0xff]
    %v371 = vld [vmem:[#allocation2 + $0x1f8] sm:$0xff]
    %v436 = vunpack.c.l.b16 %v308
    %v437 = vunpack.c.h.b16 %v308
    %v438 = vunpack.c.l.b16 %v309
    %v439 = vunpack.c.h.b16 %v309
    %v440 = vunpack.c.l.b16 %v310
    %v441 = vunpack.c.h.b16 %v310
    %v442 = vunpack.c.l.b16 %v311
    %v443 = vunpack.c.h.b16 %v311
    %v444 = vunpack.c.l.b16 %v312
    %v445 = vunpack.c.h.b16 %v312
    %v446 = vunpack.c.l.b16 %v313
    %v447 = vunpack.c.h.b16 %v313
    %v448 = vunpack.c.l.b16 %v314
    %v449 = vunpack.c.h.b16 %v314
    %v450 = vunpack.c.l.b16 %v315
    %v451 = vunpack.c.h.b16 %v315
    %v452 = vunpack.c.l.b16 %v316
    %v453 = vunpack.c.h.b16 %v316
    %v454 = vunpack.c.l.b16 %v317
    %v455 = vunpack.c.h.b16 %v317
    %v456 = vunpack.c.l.b16 %v318
    %v457 = vunpack.c.h.b16 %v318
    %v458 = vunpack.c.l.b16 %v319
    %v459 = vunpack.c.h.b16 %v319
    %v460 = vunpack.c.l.b16 %v320
    %v461 = vunpack.c.h.b16 %v320
    %v462 = vunpack.c.l.b16 %v321
    %v463 = vunpack.c.h.b16 %v321
    %v464 = vunpack.c.l.b16 %v322
    %v465 = vunpack.c.h.b16 %v322
    %v466 = vunpack.c.l.b16 %v323
    %v467 = vunpack.c.h.b16 %v323
    %v468 = vunpack.c.l.b16 %v324
    %v469 = vunpack.c.h.b16 %v324
    %v470 = vunpack.c.l.b16 %v325
    %v471 = vunpack.c.h.b16 %v325
    %v472 = vunpack.c.l.b16 %v326
    %v473 = vunpack.c.h.b16 %v326
    %v474 = vunpack.c.l.b16 %v327
    %v475 = vunpack.c.h.b16 %v327
    %v476 = vunpack.c.l.b16 %v328
    %v477 = vunpack.c.h.b16 %v328
    %v478 = vunpack.c.l.b16 %v329
    %v479 = vunpack.c.h.b16 %v329
    %v480 = vunpack.c.l.b16 %v330
    %v481 = vunpack.c.h.b16 %v330
    %v482 = vunpack.c.l.b16 %v331
    %v483 = vunpack.c.h.b16 %v331
    %v484 = vunpack.c.l.b16 %v332
    %v485 = vunpack.c.h.b16 %v332
    %v486 = vunpack.c.l.b16 %v333
    %v487 = vunpack.c.h.b16 %v333
    %v488 = vunpack.c.l.b16 %v334
    %v489 = vunpack.c.h.b16 %v334
    %v490 = vunpack.c.l.b16 %v335
    %v491 = vunpack.c.h.b16 %v335
    %v492 = vunpack.c.l.b16 %v336
    %v493 = vunpack.c.h.b16 %v336
    %v494 = vunpack.c.l.b16 %v337
    %v495 = vunpack.c.h.b16 %v337
    %v496 = vunpack.c.l.b16 %v338
    %v497 = vunpack.c.h.b16 %v338
    %v498 = vunpack.c.l.b16 %v339
    %v499 = vunpack.c.h.b16 %v339
    %v500 = vunpack.c.l.b16 %v340
    %v501 = vunpack.c.h.b16 %v340
    %v502 = vunpack.c.l.b16 %v341
    %v503 = vunpack.c.h.b16 %v341
    %v504 = vunpack.c.l.b16 %v342
    %v505 = vunpack.c.h.b16 %v342
    %v506 = vunpack.c.l.b16 %v343
    %v507 = vunpack.c.h.b16 %v343
    %v508 = vunpack.c.l.b16 %v344
    %v509 = vunpack.c.h.b16 %v344
    %v510 = vunpack.c.l.b16 %v345
    %v511 = vunpack.c.h.b16 %v345
    %v512 = vunpack.c.l.b16 %v346
    %v513 = vunpack.c.h.b16 %v346
    %v514 = vunpack.c.l.b16 %v347
    %v515 = vunpack.c.h.b16 %v347
    %v516 = vunpack.c.l.b16 %v348
    %v517 = vunpack.c.h.b16 %v348
    %v518 = vunpack.c.l.b16 %v349
    %v519 = vunpack.c.h.b16 %v349
    %v520 = vunpack.c.l.b16 %v350
    %v521 = vunpack.c.h.b16 %v350
    %v522 = vunpack.c.l.b16 %v351
    %v523 = vunpack.c.h.b16 %v351
    %v524 = vunpack.c.l.b16 %v352
    %v525 = vunpack.c.h.b16 %v352
    %v526 = vunpack.c.l.b16 %v353
    %v527 = vunpack.c.h.b16 %v353
    %v528 = vunpack.c.l.b16 %v354
    %v529 = vunpack.c.h.b16 %v354
    %v530 = vunpack.c.l.b16 %v355
    %v531 = vunpack.c.h.b16 %v355
    %v532 = vunpack.c.l.b16 %v356
    %v533 = vunpack.c.h.b16 %v356
    %v534 = vunpack.c.l.b16 %v357
    %v535 = vunpack.c.h.b16 %v357
    %v536 = vunpack.c.l.b16 %v358
    %v537 = vunpack.c.h.b16 %v358
    %v538 = vunpack.c.l.b16 %v359
    %v539 = vunpack.c.h.b16 %v359
    %v540 = vunpack.c.l.b16 %v360
    %v541 = vunpack.c.h.b16 %v360
    %v542 = vunpack.c.l.b16 %v361
    %v543 = vunpack.c.h.b16 %v361
    %v544 = vunpack.c.l.b16 %v362
    %v545 = vunpack.c.h.b16 %v362
    %v546 = vunpack.c.l.b16 %v363
    %v547 = vunpack.c.h.b16 %v363
    %v548 = vunpack.c.l.b16 %v364
    %v549 = vunpack.c.h.b16 %v364
    %v550 = vunpack.c.l.b16 %v365
    %v551 = vunpack.c.h.b16 %v365
    %v552 = vunpack.c.l.b16 %v366
    %v553 = vunpack.c.h.b16 %v366
    %v554 = vunpack.c.l.b16 %v367
    %v555 = vunpack.c.h.b16 %v367
    %v556 = vunpack.c.l.b16 %v368
    %v557 = vunpack.c.h.b16 %v368
    %v558 = vunpack.c.l.b16 %v369
    %v559 = vunpack.c.h.b16 %v369
    %v560 = vunpack.c.l.b16 %v370
    %v561 = vunpack.c.h.b16 %v370
    %v562 = vunpack.c.l.b16 %v371
    %v563 = vunpack.c.h.b16 %v371
    %v564 = vpack.c.b16 %v444, %v436
    %v565 = vpack.c.b16 %v445, %v437
    %v566 = vpack.c.b16 %v446, %v438
    %v567 = vpack.c.b16 %v447, %v439
    %v568 = vpack.c.b16 %v448, %v440
    %v569 = vpack.c.b16 %v449, %v441
    %v570 = vpack.c.b16 %v450, %v442
    %v571 = vpack.c.b16 %v451, %v443
    %v572 = vpack.c.b16 %v460, %v452
    %v573 = vpack.c.b16 %v461, %v453
    %v574 = vpack.c.b16 %v462, %v454
    %v575 = vpack.c.b16 %v463, %v455
    %v576 = vpack.c.b16 %v464, %v456
    %v577 = vpack.c.b16 %v465, %v457
    %v578 = vpack.c.b16 %v466, %v458
    %v579 = vpack.c.b16 %v467, %v459
    %v580 = vpack.c.b16 %v476, %v468
    %v581 = vpack.c.b16 %v477, %v469
    %v582 = vpack.c.b16 %v478, %v470
    %v583 = vpack.c.b16 %v479, %v471
    %v584 = vpack.c.b16 %v480, %v472
    %v585 = vpack.c.b16 %v481, %v473
    %v586 = vpack.c.b16 %v482, %v474
    %v587 = vpack.c.b16 %v483, %v475
    %v588 = vpack.c.b16 %v492, %v484
    %v589 = vpack.c.b16 %v493, %v485
    %v590 = vpack.c.b16 %v494, %v486
    %v591 = vpack.c.b16 %v495, %v487
    %v592 = vpack.c.b16 %v496, %v488
    %v593 = vpack.c.b16 %v497, %v489
    %v594 = vpack.c.b16 %v498, %v490
    %v595 = vpack.c.b16 %v499, %v491
    %v596 = vpack.c.b16 %v508, %v500
    %v597 = vpack.c.b16 %v509, %v501
    %v598 = vpack.c.b16 %v510, %v502
    %v599 = vpack.c.b16 %v511, %v503
    %v600 = vpack.c.b16 %v512, %v504
    %v601 = vpack.c.b16 %v513, %v505
    %v602 = vpack.c.b16 %v514, %v506
    %v603 = vpack.c.b16 %v515, %v507
    %v604 = vpack.c.b16 %v524, %v516
    %v605 = vpack.c.b16 %v525, %v517
    %v606 = vpack.c.b16 %v526, %v518
    %v607 = vpack.c.b16 %v527, %v519
    %v608 = vpack.c.b16 %v528, %v520
    %v609 = vpack.c.b16 %v529, %v521
    %v610 = vpack.c.b16 %v530, %v522
    %v611 = vpack.c.b16 %v531, %v523
    %v612 = vpack.c.b16 %v540, %v532
    %v613 = vpack.c.b16 %v541, %v533
    %v614 = vpack.c.b16 %v542, %v534
    %v615 = vpack.c.b16 %v543, %v535
    %v616 = vpack.c.b16 %v544, %v536
    %v617 = vpack.c.b16 %v545, %v537
    %v618 = vpack.c.b16 %v546, %v538
    %v619 = vpack.c.b16 %v547, %v539
    %v620 = vpack.c.b16 %v556, %v548
    %v621 = vpack.c.b16 %v557, %v549
    %v622 = vpack.c.b16 %v558, %v550
    %v623 = vpack.c.b16 %v559, %v551
    %v624 = vpack.c.b16 %v560, %v552
    %v625 = vpack.c.b16 %v561, %v553
    %v626 = vpack.c.b16 %v562, %v554
    %v627 = vpack.c.b16 %v563, %v555
    %692 = vmatprep.subr.bf16.mxu0 %v565
    %693 = vmatpush1.bf16.msra.mxu0 %v564
    %694 = vmatprep.subr.bf16.mxu0 %v573
    %695 = vmatpush1.bf16.msra.mxu0 %v572
    %696 = vmatprep.subr.bf16.mxu0 %v581
    %697 = vmatpush1.bf16.msra.mxu0 %v580
    %698 = vmatprep.subr.bf16.mxu0 %v589
    %699 = vmatpush1.bf16.msra.mxu0 %v588
    %700 = vmatprep.subr.bf16.mxu0 %v597
    %701 = vmatpush1.bf16.msra.mxu0 %v596
    %702 = vmatprep.subr.bf16.mxu0 %v605
    %703 = vmatpush1.bf16.msra.mxu0 %v604
    %704 = vmatprep.subr.bf16.mxu0 %v613
    %705 = vmatpush1.bf16.msra.mxu0 %v612
    %706 = vmatprep.subr.bf16.mxu0 %v621
    %707 = vmatpush1.bf16.msra.mxu0 %v620
    %708 = vmatprep.subr.bf16.mxu0 0
    %709 = vmatpush1.bf16.msra.mxu0 0
    %710 = vmatprep.subr.bf16.mxu0 0
    %711 = vmatpush1.bf16.msra.mxu0 0
    %712 = vmatprep.subr.bf16.mxu0 0
    %713 = vmatpush1.bf16.msra.mxu0 0
    %714 = vmatprep.subr.bf16.mxu0 0
    %715 = vmatpush1.bf16.msra.mxu0 0
    %716 = vmatprep.subr.bf16.mxu0 0
    %717 = vmatpush1.bf16.msra.mxu0 0
    %718 = vmatprep.subr.bf16.mxu0 0
    %719 = vmatpush1.bf16.msra.mxu0 0
    %720 = vmatprep.subr.bf16.mxu0 0
    %721 = vmatpush1.bf16.msra.mxu0 0
    %722 = vmatprep.subr.bf16.mxu0 0
    %723 = vmatpush1.bf16.msra.mxu0 0
    %724 = vmatprep.mubr.bf16.mxu0 0
    %725 = vmatmul.mubr.bf16.gmra.mrb[0].mxu0 %v306
    %v726 = vpop.f32.mrb[0].mxu0
    %v727 = vadd.f32 0.0, %v726
    %v728 = vpop.f32.mrb[0].mxu0
    %v729 = vadd.f32 0.0, %v728
    %v730 = vpop.f32.mrb[0].mxu0
    %v731 = vadd.f32 0.0, %v730
    %v732 = vpop.f32.mrb[0].mxu0
    %v733 = vadd.f32 0.0, %v732
    %734 = vmatprep.mubr.bf16.mxu0 0
    %735 = vmatmul.mubr.bf16.gmra.mrb[0].mxu0 %v307
    %v736 = vpop.f32.mrb[0].mxu0
    %v737 = vadd.f32 0.0, %v736
    %v738 = vpop.f32.mrb[0].mxu0
    %v739 = vadd.f32 0.0, %v738
    %v740 = vpop.f32.mrb[0].mxu0
    %v741 = vadd.f32 0.0, %v740
    %v742 = vpop.f32.mrb[0].mxu0
    %v743 = vadd.f32 0.0, %v742
    %744 = vdwg.mxu0
    %745 = vmatprep.subr.bf16.mxu0 %v567
    %746 = vmatpush1.bf16.msra.mxu0 %v566
    %747 = vmatprep.subr.bf16.mxu0 %v575
    %748 = vmatpush1.bf16.msra.mxu0 %v574
    %749 = vmatprep.subr.bf16.mxu0 %v583
    %750 = vmatpush1.bf16.msra.mxu0 %v582
    %751 = vmatprep.subr.bf16.mxu0 %v591
    %752 = vmatpush1.bf16.msra.mxu0 %v590
    %753 = vmatprep.subr.bf16.mxu0 %v599
    %754 = vmatpush1.bf16.msra.mxu0 %v598
    %755 = vmatprep.subr.bf16.mxu0 %v607
    %756 = vmatpush1.bf16.msra.mxu0 %v606
    %757 = vmatprep.subr.bf16.mxu0 %v615
    %758 = vmatpush1.bf16.msra.mxu0 %v614
    %759 = vmatprep.subr.bf16.mxu0 %v623
    %760 = vmatpush1.bf16.msra.mxu0 %v622
    %761 = vmatprep.subr.bf16.mxu0 0
    %762 = vmatpush1.bf16.msra.mxu0 0
    %763 = vmatprep.subr.bf16.mxu0 0
    %764 = vmatpush1.bf16.msra.mxu0 0
    %765 = vmatprep.subr.bf16.mxu0 0
    %766 = vmatpush1.bf16.msra.mxu0 0
    %767 = vmatprep.subr.bf16.mxu0 0
    %768 = vmatpush1.bf16.msra.mxu0 0
    %769 = vmatprep.subr.bf16.mxu0 0
    %770 = vmatpush1.bf16.msra.mxu0 0
    %771 = vmatprep.subr.bf16.mxu0 0
    %772 = vmatpush1.bf16.msra.mxu0 0
    %773 = vmatprep.subr.bf16.mxu0 0
    %774 = vmatpush1.bf16.msra.mxu0 0
    %775 = vmatprep.subr.bf16.mxu0 0
    %776 = vmatpush1.bf16.msra.mxu0 0
    %777 = vmatprep.mubr.bf16.mxu0 0
    %778 = vmatmul.mubr.bf16.gmra.mrb[0].mxu0 %v306
    %v779 = vpop.f32.mrb[0].mxu0
    %v780 = vadd.f32 0.0, %v779
    %v781 = vpop.f32.mrb[0].mxu0
    %v782 = vadd.f32 0.0, %v781
    %v783 = vpop.f32.mrb[0].mxu0
    %v784 = vadd.f32 0.0, %v783
    %v785 = vpop.f32.mrb[0].mxu0
    %v786 = vadd.f32 0.0, %v785
    %787 = vmatprep.mubr.bf16.mxu0 0
    %788 = vmatmul.mubr.bf16.gmra.mrb[0].mxu0 %v307
    %v789 = vpop.f32.mrb[0].mxu0
    %v790 = vadd.f32 0.0, %v789
    %v791 = vpop.f32.mrb[0].mxu0
    %v792 = vadd.f32 0.0, %v791
    %v793 = vpop.f32.mrb[0].mxu0
    %v794 = vadd.f32 0.0, %v793
    %v795 = vpop.f32.mrb[0].mxu0
    %v796 = vadd.f32 0.0, %v795
    %797 = vdwg.mxu0
    %798 = vmatprep.subr.bf16.mxu0 %v569
    %799 = vmatpush1.bf16.msra.mxu0 %v568
    %800 = vmatprep.subr.bf16.mxu0 %v577
    %801 = vmatpush1.bf16.msra.mxu0 %v576
    %802 = vmatprep.subr.bf16.mxu0 %v585
    %803 = vmatpush1.bf16.msra.mxu0 %v584
    %804 = vmatprep.subr.bf16.mxu0 %v593
    %805 = vmatpush1.bf16.msra.mxu0 %v592
    %806 = vmatprep.subr.bf16.mxu0 %v601
    %807 = vmatpush1.bf16.msra.mxu0 %v600
    %808 = vmatprep.subr.bf16.mxu0 %v609
    %809 = vmatpush1.bf16.msra.mxu0 %v608
    %810 = vmatprep.subr.bf16.mxu0 %v617
    %811 = vmatpush1.bf16.msra.mxu0 %v616
    %812 = vmatprep.subr.bf16.mxu0 %v625
    %813 = vmatpush1.bf16.msra.mxu0 %v624
    %814 = vmatprep.subr.bf16.mxu0 0
    %815 = vmatpush1.bf16.msra.mxu0 0
    %816 = vmatprep.subr.bf16.mxu0 0
    %817 = vmatpush1.bf16.msra.mxu0 0
    %818 = vmatprep.subr.bf16.mxu0 0
    %819 = vmatpush1.bf16.msra.mxu0 0
    %820 = vmatprep.subr.bf16.mxu0 0
    %821 = vmatpush1.bf16.msra.mxu0 0
    %822 = vmatprep.subr.bf16.mxu0 0
    %823 = vmatpush1.bf16.msra.mxu0 0
    %824 = vmatprep.subr.bf16.mxu0 0
    %825 = vmatpush1.bf16.msra.mxu0 0
    %826 = vmatprep.subr.bf16.mxu0 0
    %827 = vmatpush1.bf16.msra.mxu0 0
    %828 = vmatprep.subr.bf16.mxu0 0
    %829 = vmatpush1.bf16.msra.mxu0 0
    %830 = vmatprep.mubr.bf16.mxu0 0
    %831 = vmatmul.mubr.bf16.gmra.mrb[0].mxu0 %v306
    %v832 = vpop.f32.mrb[0].mxu0
    %v833 = vadd.f32 0.0, %v832
    %v834 = vpop.f32.mrb[0].mxu0
    %v835 = vadd.f32 0.0, %v834
    %v836 = vpop.f32.mrb[0].mxu0
    %v837 = vadd.f32 0.0, %v836
    %v838 = vpop.f32.mrb[0].mxu0
    %v839 = vadd.f32 0.0, %v838
    %840 = vmatprep.mubr.bf16.mxu0 0
    %841 = vmatmul.mubr.bf16.gmra.mrb[0].mxu0 %v307
    %v842 = vpop.f32.mrb[0].mxu0
    %v843 = vadd.f32 0.0, %v842
    %v844 = vpop.f32.mrb[0].mxu0
    %v845 = vadd.f32 0.0, %v844
    %v846 = vpop.f32.mrb[0].mxu0
    %v847 = vadd.f32 0.0, %v846
    %v848 = vpop.f32.mrb[0].mxu0
    %v849 = vadd.f32 0.0, %v848
    %850 = vdwg.mxu0
    %851 = vmatprep.subr.bf16.mxu0 %v571
    %852 = vmatpush1.bf16.msra.mxu0 %v570
    %853 = vmatprep.subr.bf16.mxu0 %v579
    %854 = vmatpush1.bf16.msra.mxu0 %v578
    %855 = vmatprep.subr.bf16.mxu0 %v587
    %856 = vmatpush1.bf16.msra.mxu0 %v586
    %857 = vmatprep.subr.bf16.mxu0 %v595
    %858 = vmatpush1.bf16.msra.mxu0 %v594
    %859 = vmatprep.subr.bf16.mxu0 %v603
    %860 = vmatpush1.bf16.msra.mxu0 %v602
    %861 = vmatprep.subr.bf16.mxu0 %v611
    %862 = vmatpush1.bf16.msra.mxu0 %v610
    %863 = vmatprep.subr.bf16.mxu0 %v619
    %864 = vmatpush1.bf16.msra.mxu0 %v618
    %865 = vmatprep.subr.bf16.mxu0 %v627
    %866 = vmatpush1.bf16.msra.mxu0 %v626
    %867 = vmatprep.subr.bf16.mxu0 0
    %868 = vmatpush1.bf16.msra.mxu0 0
    %869 = vmatprep.subr.bf16.mxu0 0
    %870 = vmatpush1.bf16.msra.mxu0 0
    %871 = vmatprep.subr.bf16.mxu0 0
    %872 = vmatpush1.bf16.msra.mxu0 0
    %873 = vmatprep.subr.bf16.mxu0 0
    %874 = vmatpush1.bf16.msra.mxu0 0
    %875 = vmatprep.subr.bf16.mxu0 0
    %876 = vmatpush1.bf16.msra.mxu0 0
    %877 = vmatprep.subr.bf16.mxu0 0
    %878 = vmatpush1.bf16.msra.mxu0 0
    %879 = vmatprep.subr.bf16.mxu0 0
    %880 = vmatpush1.bf16.msra.mxu0 0
    %881 = vmatprep.subr.bf16.mxu0 0
    %882 = vmatpush1.bf16.msra.mxu0 0
    %883 = vmatprep.mubr.bf16.mxu0 0
    %884 = vmatmul.mubr.bf16.gmra.mrb[0].mxu0 %v306
    %v885 = vpop.f32.mrb[0].mxu0
    %v886 = vadd.f32 0.0, %v885
    %v887 = vpop.f32.mrb[0].mxu0
    %v888 = vadd.f32 0.0, %v887
    %v889 = vpop.f32.mrb[0].mxu0
    %v890 = vadd.f32 0.0, %v889
    %v891 = vpop.f32.mrb[0].mxu0
    %v892 = vadd.f32 0.0, %v891
    %893 = vmatprep.mubr.bf16.mxu0 0
    %894 = vmatmul.mubr.bf16.gmra.mrb[0].mxu0 %v307
    %v895 = vpop.f32.mrb[0].mxu0
    %v896 = vadd.f32 0.0, %v895
    %v897 = vpop.f32.mrb[0].mxu0
    %v898 = vadd.f32 0.0, %v897
    %v899 = vpop.f32.mrb[0].mxu0
    %v900 = vadd.f32 0.0, %v899
    %v901 = vpop.f32.mrb[0].mxu0
    %v902 = vadd.f32 0.0, %v901
    %903 = vdwg.mxu0
    %v904 = vmax.f32 %v727, %v731
    %v905 = vrot.slane %v904, 4
    %v906 = vmax.f32 %v904, %v905
    %v907 = vrot.slane %v906, 2
    %v908 = vmax.f32 %v906, %v907
    %v909 = vrot.slane %v908, 1
    %v910 = vmax.f32 %v908, %v909
    %v911 = vmax.f32 %v729, %v733
    %v912 = vrot.slane %v911, 4
    %v913 = vmax.f32 %v911, %v912
    %v914 = vrot.slane %v913, 2
    %v915 = vmax.f32 %v913, %v914
    %v916 = vrot.slane %v915, 1
    %v917 = vmax.f32 %v915, %v916
    %v918 = vmax.f32 %v780, %v784
    %v919 = vrot.slane %v918, 4
    %v920 = vmax.f32 %v918, %v919
    %v921 = vrot.slane %v920, 2
    %v922 = vmax.f32 %v920, %v921
    %v923 = vrot.slane %v922, 1
    %v924 = vmax.f32 %v922, %v923
    %v925 = vmax.f32 %v782, %v786
    %v926 = vrot.slane %v925, 4
    %v927 = vmax.f32 %v925, %v926
    %v928 = vrot.slane %v927, 2
    %v929 = vmax.f32 %v927, %v928
    %v930 = vrot.slane %v929, 1
    %v931 = vmax.f32 %v929, %v930
    %v932 = vmax.f32 %v833, %v837
    %v933 = vrot.slane %v932, 4
    %v934 = vmax.f32 %v932, %v933
    %v935 = vrot.slane %v934, 2
    %v936 = vmax.f32 %v934, %v935
    %v937 = vrot.slane %v936, 1
    %v938 = vmax.f32 %v936, %v937
    %v939 = vmax.f32 %v835, %v839
    %v940 = vrot.slane %v939, 4
    %v941 = vmax.f32 %v939, %v940
    %v942 = vrot.slane %v941, 2
    %v943 = vmax.f32 %v941, %v942
    %v944 = vrot.slane %v943, 1
    %v945 = vmax.f32 %v943, %v944
    %v946 = vmax.f32 %v886, %v890
    %v947 = vrot.slane %v946, 4
    %v948 = vmax.f32 %v946, %v947
    %v949 = vrot.slane %v948, 2
    %v950 = vmax.f32 %v948, %v949
    %v951 = vrot.slane %v950, 1
    %v952 = vmax.f32 %v950, %v951
    %v953 = vmax.f32 %v888, %v892
    %v954 = vrot.slane %v953, 4
    %v955 = vmax.f32 %v953, %v954
    %v956 = vrot.slane %v955, 2
    %v957 = vmax.f32 %v955, %v956
    %v958 = vrot.slane %v957, 1
    %v959 = vmax.f32 %v957, %v958
    %v960 = vmax.f32 %v737, %v741
    %v961 = vrot.slane %v960, 4
    %v962 = vmax.f32 %v960, %v961
    %v963 = vrot.slane %v962, 2
    %v964 = vmax.f32 %v962, %v963
    %v965 = vrot.slane %v964, 1
    %v966 = vmax.f32 %v964, %v965
    %v967 = vmax.f32 %v739, %v743
    %v968 = vrot.slane %v967, 4
    %v969 = vmax.f32 %v967, %v968
    %v970 = vrot.slane %v969, 2
    %v971 = vmax.f32 %v969, %v970
    %v972 = vrot.slane %v971, 1
    %v973 = vmax.f32 %v971, %v972
    %v974 = vmax.f32 %v790, %v794
    %v975 = vrot.slane %v974, 4
    %v976 = vmax.f32 %v974, %v975
    %v977 = vrot.slane %v976, 2
    %v978 = vmax.f32 %v976, %v977
    %v979 = vrot.slane %v978, 1
    %v980 = vmax.f32 %v978, %v979
    %v981 = vmax.f32 %v792, %v796
    %v982 = vrot.slane %v981, 4
    %v983 = vmax.f32 %v981, %v982
    %v984 = vrot.slane %v983, 2
    %v985 = vmax.f32 %v983, %v984
    %v986 = vrot.slane %v985, 1
    %v987 = vmax.f32 %v985, %v986
    %v988 = vmax.f32 %v843, %v847
    %v989 = vrot.slane %v988, 4
    %v990 = vmax.f32 %v988, %v989
    %v991 = vrot.slane %v990, 2
    %v992 = vmax.f32 %v990, %v991
    %v993 = vrot.slane %v992, 1
    %v994 = vmax.f32 %v992, %v993
    %v995 = vmax.f32 %v845, %v849
    %v996 = vrot.slane %v995, 4
    %v997 = vmax.f32 %v995, %v996
    %v998 = vrot.slane %v997, 2
    %v999 = vmax.f32 %v997, %v998
    %v1000 = vrot.slane %v999, 1
    %v1001 = vmax.f32 %v999, %v1000
    %v1002 = vmax.f32 %v896, %v900
    %v1003 = vrot.slane %v1002, 4
    %v1004 = vmax.f32 %v1002, %v1003
    %v1005 = vrot.slane %v1004, 2
    %v1006 = vmax.f32 %v1004, %v1005
    %v1007 = vrot.slane %v1006, 1
    %v1008 = vmax.f32 %v1006, %v1007
    %v1009 = vmax.f32 %v898, %v902
    %v1010 = vrot.slane %v1009, 4
    %v1011 = vmax.f32 %v1009, %v1010
    %v1012 = vrot.slane %v1011, 2
    %v1013 = vmax.f32 %v1011, %v1012
    %v1014 = vrot.slane %v1013, 1
    %v1015 = vmax.f32 %v1013, %v1014
    %v1016 = vld [vmem:[%s6] sm:$0xff]
    %v1018 = vlaneseq
    %v1019 = vshrl.u32 %v1018, 7
    %v1020 = vsub.s32 0, %v1019
    %v1021 = vrot.slane %v1016, %v1020
    %v1022 = vlaneseq
    %v1023 = vshrl.u32 %v1022, 7
    %v1024 = vsub.s32 1, %v1023
    %v1025 = vrot.slane %v1016, %v1024
    %v1026 = vlaneseq
    %v1027 = vshrl.u32 %v1026, 7
    %v1028 = vsub.s32 2, %v1027
    %v1029 = vrot.slane %v1016, %v1028
    %v1030 = vlaneseq
    %v1031 = vshrl.u32 %v1030, 7
    %v1032 = vsub.s32 3, %v1031
    %v1033 = vrot.slane %v1016, %v1032
    %v1034 = vlaneseq
    %v1035 = vshrl.u32 %v1034, 7
    %v1036 = vsub.s32 4, %v1035
    %v1037 = vrot.slane %v1016, %v1036
    %v1038 = vlaneseq
    %v1039 = vshrl.u32 %v1038, 7
    %v1040 = vsub.s32 5, %v1039
    %v1041 = vrot.slane %v1016, %v1040
    %v1042 = vlaneseq
    %v1043 = vshrl.u32 %v1042, 7
    %v1044 = vsub.s32 6, %v1043
    %v1045 = vrot.slane %v1016, %v1044
    %v1046 = vlaneseq
    %v1047 = vshrl.u32 %v1046, 7
    %v1048 = vsub.s32 7, %v1047
    %v1049 = vrot.slane %v1016, %v1048
    %v1058 = vadd.f32 %v910, %v1021
    %v1059 = vadd.f32 %v917, %v1025
    %v1060 = vadd.f32 %v924, %v1029
    %v1061 = vadd.f32 %v931, %v1033
    %v1062 = vadd.f32 %v938, %v1037
    %v1063 = vadd.f32 %v945, %v1041
    %v1064 = vadd.f32 %v952, %v1045
    %v1065 = vadd.f32 %v959, %v1049
    %v1066 = vadd.f32 %v966, %v1021
    %v1067 = vadd.f32 %v973, %v1025
    %v1068 = vadd.f32 %v980, %v1029
    %v1069 = vadd.f32 %v987, %v1033
    %v1070 = vadd.f32 %v994, %v1037
    %v1071 = vadd.f32 %v1001, %v1041
    %v1072 = vadd.f32 %v1008, %v1045
    %v1073 = vadd.f32 %v1015, %v1049
    %v1074 = vmax.f32 %v1058, 0.0
    %v1075 = vmax.f32 %v1059, 0.0
    %v1076 = vmax.f32 %v1060, 0.0
    %v1077 = vmax.f32 %v1061, 0.0
    %v1078 = vmax.f32 %v1062, 0.0
    %v1079 = vmax.f32 %v1063, 0.0
    %v1080 = vmax.f32 %v1064, 0.0
    %v1081 = vmax.f32 %v1065, 0.0
    %v1082 = vmax.f32 %v1066, 0.0
    %v1083 = vmax.f32 %v1067, 0.0
    %v1084 = vmax.f32 %v1068, 0.0
    %v1085 = vmax.f32 %v1069, 0.0
    %v1086 = vmax.f32 %v1070, 0.0
    %v1087 = vmax.f32 %v1071, 0.0
    %v1088 = vmax.f32 %v1072, 0.0
    %v1089 = vmax.f32 %v1073, 0.0
    %v1090 = vpack.c.bf16 %v1074, %v1074
    %v1091 = vpack.c.bf16 %v1075, %v1075
    %v1092 = vpack.c.bf16 %v1076, %v1076
    %v1093 = vpack.c.bf16 %v1077, %v1077
    %v1094 = vpack.c.bf16 %v1078, %v1078
    %v1095 = vpack.c.bf16 %v1079, %v1079
    %v1096 = vpack.c.bf16 %v1080, %v1080
    %v1097 = vpack.c.bf16 %v1081, %v1081
    %v1098 = vpack.c.bf16 %v1082, %v1082
    %v1099 = vpack.c.bf16 %v1083, %v1083
    %v1100 = vpack.c.bf16 %v1084, %v1084
    %v1101 = vpack.c.bf16 %v1085, %v1085
    %v1102 = vpack.c.bf16 %v1086, %v1086
    %v1103 = vpack.c.bf16 %v1087, %v1087
    %v1104 = vpack.c.bf16 %v1088, %v1088
    %v1105 = vpack.c.bf16 %v1089, %v1089
    %v1106 = vld [vmem:[#allocation5] sm:$0xff]
    %v1107 = vld [vmem:[#allocation5 + $0x8] sm:$0xff]
    %v1108 = vld [vmem:[#allocation5 + $0x10] sm:$0xff]
    %v1109 = vld [vmem:[#allocation5 + $0x18] sm:$0xff]
    %v1110 = vld [vmem:[#allocation5 + $0x20] sm:$0xff]
    %v1111 = vld [vmem:[#allocation5 + $0x28] sm:$0xff]
    %v1112 = vld [vmem:[#allocation5 + $0x30] sm:$0xff]
    %v1113 = vld [vmem:[#allocation5 + $0x38] sm:$0xff]
    %v1114 = vld [vmem:[#allocation5 + $0x40] sm:$0xff]
    %v1115 = vld [vmem:[#allocation5 + $0x48] sm:$0xff]
    %v1116 = vld [vmem:[#allocation5 + $0x50] sm:$0xff]
    %v1117 = vld [vmem:[#allocation5 + $0x58] sm:$0xff]
    %v1118 = vld [vmem:[#allocation5 + $0x60] sm:$0xff]
    %v1119 = vld [vmem:[#allocation5 + $0x68] sm:$0xff]
    %v1120 = vld [vmem:[#allocation5 + $0x70] sm:$0xff]
    %v1121 = vld [vmem:[#allocation5 + $0x78] sm:$0xff]
    %v1122 = vld [vmem:[#allocation5 + $0x80] sm:$0xff]
    %v1123 = vld [vmem:[#allocation5 + $0x88] sm:$0xff]
    %v1124 = vld [vmem:[#allocation5 + $0x90] sm:$0xff]
    %v1125 = vld [vmem:[#allocation5 + $0x98] sm:$0xff]
    %v1126 = vld [vmem:[#allocation5 + $0xa0] sm:$0xff]
    %v1127 = vld [vmem:[#allocation5 + $0xa8] sm:$0xff]
    %v1128 = vld [vmem:[#allocation5 + $0xb0] sm:$0xff]
    %v1129 = vld [vmem:[#allocation5 + $0xb8] sm:$0xff]
    %v1130 = vld [vmem:[#allocation5 + $0xc0] sm:$0xff]
    %v1131 = vld [vmem:[#allocation5 + $0xc8] sm:$0xff]
    %v1132 = vld [vmem:[#allocation5 + $0xd0] sm:$0xff]
    %v1133 = vld [vmem:[#allocation5 + $0xd8] sm:$0xff]
    %v1134 = vld [vmem:[#allocation5 + $0xe0] sm:$0xff]
    %v1135 = vld [vmem:[#allocation5 + $0xe8] sm:$0xff]
    %v1136 = vld [vmem:[#allocation5 + $0xf0] sm:$0xff]
    %v1137 = vld [vmem:[#allocation5 + $0xf8] sm:$0xff]
    %v1138 = vld [vmem:[#allocation5 + $0x100] sm:$0xff]
    %v1139 = vld [vmem:[#allocation5 + $0x108] sm:$0xff]
    %v1140 = vld [vmem:[#allocation5 + $0x110] sm:$0xff]
    %v1141 = vld [vmem:[#allocation5 + $0x118] sm:$0xff]
    %v1142 = vld [vmem:[#allocation5 + $0x120] sm:$0xff]
    %v1143 = vld [vmem:[#allocation5 + $0x128] sm:$0xff]
    %v1144 = vld [vmem:[#allocation5 + $0x130] sm:$0xff]
    %v1145 = vld [vmem:[#allocation5 + $0x138] sm:$0xff]
    %v1146 = vld [vmem:[#allocation5 + $0x140] sm:$0xff]
    %v1147 = vld [vmem:[#allocation5 + $0x148] sm:$0xff]
    %v1148 = vld [vmem:[#allocation5 + $0x150] sm:$0xff]
    %v1149 = vld [vmem:[#allocation5 + $0x158] sm:$0xff]
    %v1150 = vld [vmem:[#allocation5 + $0x160] sm:$0xff]
    %v1151 = vld [vmem:[#allocation5 + $0x168] sm:$0xff]
    %v1152 = vld [vmem:[#allocation5 + $0x170] sm:$0xff]
    %v1153 = vld [vmem:[#allocation5 + $0x178] sm:$0xff]
    %v1154 = vld [vmem:[#allocation5 + $0x180] sm:$0xff]
    %v1155 = vld [vmem:[#allocation5 + $0x188] sm:$0xff]
    %v1156 = vld [vmem:[#allocation5 + $0x190] sm:$0xff]
    %v1157 = vld [vmem:[#allocation5 + $0x198] sm:$0xff]
    %v1158 = vld [vmem:[#allocation5 + $0x1a0] sm:$0xff]
    %v1159 = vld [vmem:[#allocation5 + $0x1a8] sm:$0xff]
    %v1160 = vld [vmem:[#allocation5 + $0x1b0] sm:$0xff]
    %v1161 = vld [vmem:[#allocation5 + $0x1b8] sm:$0xff]
    %v1162 = vld [vmem:[#allocation5 + $0x1c0] sm:$0xff]
    %v1163 = vld [vmem:[#allocation5 + $0x1c8] sm:$0xff]
    %v1164 = vld [vmem:[#allocation5 + $0x1d0] sm:$0xff]
    %v1165 = vld [vmem:[#allocation5 + $0x1d8] sm:$0xff]
    %v1166 = vld [vmem:[#allocation5 + $0x1e0] sm:$0xff]
    %v1167 = vld [vmem:[#allocation5 + $0x1e8] sm:$0xff]
    %v1168 = vld [vmem:[#allocation5 + $0x1f0] sm:$0xff]
    %v1169 = vld [vmem:[#allocation5 + $0x1f8] sm:$0xff]
    %v1170 = vld [vmem:[#allocation5 + $0x200] sm:$0xff]
    %v1171 = vld [vmem:[#allocation5 + $0x208] sm:$0xff]
    %v1172 = vld [vmem:[#allocation5 + $0x210] sm:$0xff]
    %v1173 = vld [vmem:[#allocation5 + $0x218] sm:$0xff]
    %v1174 = vld [vmem:[#allocation5 + $0x220] sm:$0xff]
    %v1175 = vld [vmem:[#allocation5 + $0x228] sm:$0xff]
    %v1176 = vld [vmem:[#allocation5 + $0x230] sm:$0xff]
    %v1177 = vld [vmem:[#allocation5 + $0x238] sm:$0xff]
    %v1178 = vld [vmem:[#allocation5 + $0x240] sm:$0xff]
    %v1179 = vld [vmem:[#allocation5 + $0x248] sm:$0xff]
    %v1180 = vld [vmem:[#allocation5 + $0x250] sm:$0xff]
    %v1181 = vld [vmem:[#allocation5 + $0x258] sm:$0xff]
    %v1182 = vld [vmem:[#allocation5 + $0x260] sm:$0xff]
    %v1183 = vld [vmem:[#allocation5 + $0x268] sm:$0xff]
    %v1184 = vld [vmem:[#allocation5 + $0x270] sm:$0xff]
    %v1185 = vld [vmem:[#allocation5 + $0x278] sm:$0xff]
    %v1186 = vld [vmem:[#allocation5 + $0x280] sm:$0xff]
    %v1187 = vld [vmem:[#allocation5 + $0x288] sm:$0xff]
    %v1188 = vld [vmem:[#allocation5 + $0x290] sm:$0xff]
    %v1189 = vld [vmem:[#allocation5 + $0x298] sm:$0xff]
    %v1190 = vld [vmem:[#allocation5 + $0x2a0] sm:$0xff]
    %v1191 = vld [vmem:[#allocation5 + $0x2a8] sm:$0xff]
    %v1192 = vld [vmem:[#allocation5 + $0x2b0] sm:$0xff]
    %v1193 = vld [vmem:[#allocation5 + $0x2b8] sm:$0xff]
    %v1194 = vld [vmem:[#allocation5 + $0x2c0] sm:$0xff]
    %v1195 = vld [vmem:[#allocation5 + $0x2c8] sm:$0xff]
    %v1196 = vld [vmem:[#allocation5 + $0x2d0] sm:$0xff]
    %v1197 = vld [vmem:[#allocation5 + $0x2d8] sm:$0xff]
    %v1198 = vld [vmem:[#allocation5 + $0x2e0] sm:$0xff]
    %v1199 = vld [vmem:[#allocation5 + $0x2e8] sm:$0xff]
    %v1200 = vld [vmem:[#allocation5 + $0x2f0] sm:$0xff]
    %v1201 = vld [vmem:[#allocation5 + $0x2f8] sm:$0xff]
    %v1202 = vld [vmem:[#allocation5 + $0x300] sm:$0xff]
    %v1203 = vld [vmem:[#allocation5 + $0x308] sm:$0xff]
    %v1204 = vld [vmem:[#allocation5 + $0x310] sm:$0xff]
    %v1205 = vld [vmem:[#allocation5 + $0x318] sm:$0xff]
    %v1206 = vld [vmem:[#allocation5 + $0x320] sm:$0xff]
    %v1207 = vld [vmem:[#allocation5 + $0x328] sm:$0xff]
    %v1208 = vld [vmem:[#allocation5 + $0x330] sm:$0xff]
    %v1209 = vld [vmem:[#allocation5 + $0x338] sm:$0xff]
    %v1210 = vld [vmem:[#allocation5 + $0x340] sm:$0xff]
    %v1211 = vld [vmem:[#allocation5 + $0x348] sm:$0xff]
    %v1212 = vld [vmem:[#allocation5 + $0x350] sm:$0xff]
    %v1213 = vld [vmem:[#allocation5 + $0x358] sm:$0xff]
    %v1214 = vld [vmem:[#allocation5 + $0x360] sm:$0xff]
    %v1215 = vld [vmem:[#allocation5 + $0x368] sm:$0xff]
    %v1216 = vld [vmem:[#allocation5 + $0x370] sm:$0xff]
    %v1217 = vld [vmem:[#allocation5 + $0x378] sm:$0xff]
    %v1218 = vld [vmem:[#allocation5 + $0x380] sm:$0xff]
    %v1219 = vld [vmem:[#allocation5 + $0x388] sm:$0xff]
    %v1220 = vld [vmem:[#allocation5 + $0x390] sm:$0xff]
    %v1221 = vld [vmem:[#allocation5 + $0x398] sm:$0xff]
    %v1222 = vld [vmem:[#allocation5 + $0x3a0] sm:$0xff]
    %v1223 = vld [vmem:[#allocation5 + $0x3a8] sm:$0xff]
    %v1224 = vld [vmem:[#allocation5 + $0x3b0] sm:$0xff]
    %v1225 = vld [vmem:[#allocation5 + $0x3b8] sm:$0xff]
    %v1226 = vld [vmem:[#allocation5 + $0x3c0] sm:$0xff]
    %v1227 = vld [vmem:[#allocation5 + $0x3c8] sm:$0xff]
    %v1228 = vld [vmem:[#allocation5 + $0x3d0] sm:$0xff]
    %v1229 = vld [vmem:[#allocation5 + $0x3d8] sm:$0xff]
    %v1230 = vld [vmem:[#allocation5 + $0x3e0] sm:$0xff]
    %v1231 = vld [vmem:[#allocation5 + $0x3e8] sm:$0xff]
    %v1232 = vld [vmem:[#allocation5 + $0x3f0] sm:$0xff]
    %v1233 = vld [vmem:[#allocation5 + $0x3f8] sm:$0xff]
    %v1234 = vld [vmem:[#allocation5 + $0x400] sm:$0xff]
    %v1235 = vld [vmem:[#allocation5 + $0x408] sm:$0xff]
    %v1236 = vld [vmem:[#allocation5 + $0x410] sm:$0xff]
    %v1237 = vld [vmem:[#allocation5 + $0x418] sm:$0xff]
    %v1238 = vld [vmem:[#allocation5 + $0x420] sm:$0xff]
    %v1239 = vld [vmem:[#allocation5 + $0x428] sm:$0xff]
    %v1240 = vld [vmem:[#allocation5 + $0x430] sm:$0xff]
    %v1241 = vld [vmem:[#allocation5 + $0x438] sm:$0xff]
    %v1242 = vld [vmem:[#allocation5 + $0x440] sm:$0xff]
    %v1243 = vld [vmem:[#allocation5 + $0x448] sm:$0xff]
    %v1244 = vld [vmem:[#allocation5 + $0x450] sm:$0xff]
    %v1245 = vld [vmem:[#allocation5 + $0x458] sm:$0xff]
    %v1246 = vld [vmem:[#allocation5 + $0x460] sm:$0xff]
    %v1247 = vld [vmem:[#allocation5 + $0x468] sm:$0xff]
    %v1248 = vld [vmem:[#allocation5 + $0x470] sm:$0xff]
    %v1249 = vld [vmem:[#allocation5 + $0x478] sm:$0xff]
    %v1250 = vld [vmem:[#allocation5 + $0x480] sm:$0xff]
    %v1251 = vld [vmem:[#allocation5 + $0x488] sm:$0xff]
    %v1252 = vld [vmem:[#allocation5 + $0x490] sm:$0xff]
    %v1253 = vld [vmem:[#allocation5 + $0x498] sm:$0xff]
    %v1254 = vld [vmem:[#allocation5 + $0x4a0] sm:$0xff]
    %v1255 = vld [vmem:[#allocation5 + $0x4a8] sm:$0xff]
    %v1256 = vld [vmem:[#allocation5 + $0x4b0] sm:$0xff]
    %v1257 = vld [vmem:[#allocation5 + $0x4b8] sm:$0xff]
    %v1258 = vld [vmem:[#allocation5 + $0x4c0] sm:$0xff]
    %v1259 = vld [vmem:[#allocation5 + $0x4c8] sm:$0xff]
    %v1260 = vld [vmem:[#allocation5 + $0x4d0] sm:$0xff]
    %v1261 = vld [vmem:[#allocation5 + $0x4d8] sm:$0xff]
    %v1262 = vld [vmem:[#allocation5 + $0x4e0] sm:$0xff]
    %v1263 = vld [vmem:[#allocation5 + $0x4e8] sm:$0xff]
    %v1264 = vld [vmem:[#allocation5 + $0x4f0] sm:$0xff]
    %v1265 = vld [vmem:[#allocation5 + $0x4f8] sm:$0xff]
    %v1266 = vld [vmem:[#allocation5 + $0x500] sm:$0xff]
    %v1267 = vld [vmem:[#allocation5 + $0x508] sm:$0xff]
    %v1268 = vld [vmem:[#allocation5 + $0x510] sm:$0xff]
    %v1269 = vld [vmem:[#allocation5 + $0x518] sm:$0xff]
    %v1270 = vld [vmem:[#allocation5 + $0x520] sm:$0xff]
    %v1271 = vld [vmem:[#allocation5 + $0x528] sm:$0xff]
    %v1272 = vld [vmem:[#allocation5 + $0x530] sm:$0xff]
    %v1273 = vld [vmem:[#allocation5 + $0x538] sm:$0xff]
    %v1274 = vld [vmem:[#allocation5 + $0x540] sm:$0xff]
    %v1275 = vld [vmem:[#allocation5 + $0x548] sm:$0xff]
    %v1276 = vld [vmem:[#allocation5 + $0x550] sm:$0xff]
    %v1277 = vld [vmem:[#allocation5 + $0x558] sm:$0xff]
    %v1278 = vld [vmem:[#allocation5 + $0x560] sm:$0xff]
    %v1279 = vld [vmem:[#allocation5 + $0x568] sm:$0xff]
    %v1280 = vld [vmem:[#allocation5 + $0x570] sm:$0xff]
    %v1281 = vld [vmem:[#allocation5 + $0x578] sm:$0xff]
    %v1282 = vld [vmem:[#allocation5 + $0x580] sm:$0xff]
    %v1283 = vld [vmem:[#allocation5 + $0x588] sm:$0xff]
    %v1284 = vld [vmem:[#allocation5 + $0x590] sm:$0xff]
    %v1285 = vld [vmem:[#allocation5 + $0x598] sm:$0xff]
    %v1286 = vld [vmem:[#allocation5 + $0x5a0] sm:$0xff]
    %v1287 = vld [vmem:[#allocation5 + $0x5a8] sm:$0xff]
    %v1288 = vld [vmem:[#allocation5 + $0x5b0] sm:$0xff]
    %v1289 = vld [vmem:[#allocation5 + $0x5b8] sm:$0xff]
    %v1290 = vld [vmem:[#allocation5 + $0x5c0] sm:$0xff]
    %v1291 = vld [vmem:[#allocation5 + $0x5c8] sm:$0xff]
    %v1292 = vld [vmem:[#allocation5 + $0x5d0] sm:$0xff]
    %v1293 = vld [vmem:[#allocation5 + $0x5d8] sm:$0xff]
    %v1294 = vld [vmem:[#allocation5 + $0x5e0] sm:$0xff]
    %v1295 = vld [vmem:[#allocation5 + $0x5e8] sm:$0xff]
    %v1296 = vld [vmem:[#allocation5 + $0x5f0] sm:$0xff]
    %v1297 = vld [vmem:[#allocation5 + $0x5f8] sm:$0xff]
    %v1298 = vld [vmem:[#allocation5 + $0x600] sm:$0xff]
    %v1299 = vld [vmem:[#allocation5 + $0x608] sm:$0xff]
    %v1300 = vld [vmem:[#allocation5 + $0x610] sm:$0xff]
    %v1301 = vld [vmem:[#allocation5 + $0x618] sm:$0xff]
    %v1302 = vld [vmem:[#allocation5 + $0x620] sm:$0xff]
    %v1303 = vld [vmem:[#allocation5 + $0x628] sm:$0xff]
    %v1304 = vld [vmem:[#allocation5 + $0x630] sm:$0xff]
    %v1305 = vld [vmem:[#allocation5 + $0x638] sm:$0xff]
    %v1306 = vld [vmem:[#allocation5 + $0x640] sm:$0xff]
    %v1307 = vld [vmem:[#allocation5 + $0x648] sm:$0xff]
    %v1308 = vld [vmem:[#allocation5 + $0x650] sm:$0xff]
    %v1309 = vld [vmem:[#allocation5 + $0x658] sm:$0xff]
    %v1310 = vld [vmem:[#allocation5 + $0x660] sm:$0xff]
    %v1311 = vld [vmem:[#allocation5 + $0x668] sm:$0xff]
    %v1312 = vld [vmem:[#allocation5 + $0x670] sm:$0xff]
    %v1313 = vld [vmem:[#allocation5 + $0x678] sm:$0xff]
    %v1314 = vld [vmem:[#allocation5 + $0x680] sm:$0xff]
    %v1315 = vld [vmem:[#allocation5 + $0x688] sm:$0xff]
    %v1316 = vld [vmem:[#allocation5 + $0x690] sm:$0xff]
    %v1317 = vld [vmem:[#allocation5 + $0x698] sm:$0xff]
    %v1318 = vld [vmem:[#allocation5 + $0x6a0] sm:$0xff]
    %v1319 = vld [vmem:[#allocation5 + $0x6a8] sm:$0xff]
    %v1320 = vld [vmem:[#allocation5 + $0x6b0] sm:$0xff]
    %v1321 = vld [vmem:[#allocation5 + $0x6b8] sm:$0xff]
    %v1322 = vld [vmem:[#allocation5 + $0x6c0] sm:$0xff]
    %v1323 = vld [vmem:[#allocation5 + $0x6c8] sm:$0xff]
    %v1324 = vld [vmem:[#allocation5 + $0x6d0] sm:$0xff]
    %v1325 = vld [vmem:[#allocation5 + $0x6d8] sm:$0xff]
    %v1326 = vld [vmem:[#allocation5 + $0x6e0] sm:$0xff]
    %v1327 = vld [vmem:[#allocation5 + $0x6e8] sm:$0xff]
    %v1328 = vld [vmem:[#allocation5 + $0x6f0] sm:$0xff]
    %v1329 = vld [vmem:[#allocation5 + $0x6f8] sm:$0xff]
    %v1330 = vld [vmem:[#allocation5 + $0x700] sm:$0xff]
    %v1331 = vld [vmem:[#allocation5 + $0x708] sm:$0xff]
    %v1332 = vld [vmem:[#allocation5 + $0x710] sm:$0xff]
    %v1333 = vld [vmem:[#allocation5 + $0x718] sm:$0xff]
    %v1334 = vld [vmem:[#allocation5 + $0x720] sm:$0xff]
    %v1335 = vld [vmem:[#allocation5 + $0x728] sm:$0xff]
    %v1336 = vld [vmem:[#allocation5 + $0x730] sm:$0xff]
    %v1337 = vld [vmem:[#allocation5 + $0x738] sm:$0xff]
    %v1338 = vld [vmem:[#allocation5 + $0x740] sm:$0xff]
    %v1339 = vld [vmem:[#allocation5 + $0x748] sm:$0xff]
    %v1340 = vld [vmem:[#allocation5 + $0x750] sm:$0xff]
    %v1341 = vld [vmem:[#allocation5 + $0x758] sm:$0xff]
    %v1342 = vld [vmem:[#allocation5 + $0x760] sm:$0xff]
    %v1343 = vld [vmem:[#allocation5 + $0x768] sm:$0xff]
    %v1344 = vld [vmem:[#allocation5 + $0x770] sm:$0xff]
    %v1345 = vld [vmem:[#allocation5 + $0x778] sm:$0xff]
    %v1346 = vld [vmem:[#allocation5 + $0x780] sm:$0xff]
    %v1347 = vld [vmem:[#allocation5 + $0x788] sm:$0xff]
    %v1348 = vld [vmem:[#allocation5 + $0x790] sm:$0xff]
    %v1349 = vld [vmem:[#allocation5 + $0x798] sm:$0xff]
    %v1350 = vld [vmem:[#allocation5 + $0x7a0] sm:$0xff]
    %v1351 = vld [vmem:[#allocation5 + $0x7a8] sm:$0xff]
    %v1352 = vld [vmem:[#allocation5 + $0x7b0] sm:$0xff]
    %v1353 = vld [vmem:[#allocation5 + $0x7b8] sm:$0xff]
    %v1354 = vld [vmem:[#allocation5 + $0x7c0] sm:$0xff]
    %v1355 = vld [vmem:[#allocation5 + $0x7c8] sm:$0xff]
    %v1356 = vld [vmem:[#allocation5 + $0x7d0] sm:$0xff]
    %v1357 = vld [vmem:[#allocation5 + $0x7d8] sm:$0xff]
    %v1358 = vld [vmem:[#allocation5 + $0x7e0] sm:$0xff]
    %v1359 = vld [vmem:[#allocation5 + $0x7e8] sm:$0xff]
    %v1360 = vld [vmem:[#allocation5 + $0x7f0] sm:$0xff]
    %v1361 = vld [vmem:[#allocation5 + $0x7f8] sm:$0xff]
    %v1362 = vld [vmem:[%s8] sm:$0xf]
    %v1364 = vlaneseq
    %v1365 = vshrl.u32 %v1364, 7
    %v1366 = vsub.s32 0, %v1365
    %v1367 = vrot.slane %v1362, %v1366
    %v1368 = vlaneseq
    %v1369 = vshrl.u32 %v1368, 7
    %v1370 = vsub.s32 1, %v1369
    %v1371 = vrot.slane %v1362, %v1370
    %v1372 = vlaneseq
    %v1373 = vshrl.u32 %v1372, 7
    %v1374 = vsub.s32 2, %v1373
    %v1375 = vrot.slane %v1362, %v1374
    %v1376 = vlaneseq
    %v1377 = vshrl.u32 %v1376, 7
    %v1378 = vsub.s32 3, %v1377
    %v1379 = vrot.slane %v1362, %v1378
    %v1400 = vunpack.c.l.b16 %v1090
    %v1401 = vunpack.c.l.b16 %v1091
    %v1402 = vunpack.c.l.b16 %v1092
    %v1403 = vunpack.c.l.b16 %v1093
    %v1404 = vunpack.c.l.b16 %v1094
    %v1405 = vunpack.c.l.b16 %v1095
    %v1406 = vunpack.c.l.b16 %v1096
    %v1407 = vunpack.c.l.b16 %v1097
    %v1408 = vunpack.c.l.b16 %v1098
    %v1409 = vunpack.c.l.b16 %v1099
    %v1410 = vunpack.c.l.b16 %v1100
    %v1411 = vunpack.c.l.b16 %v1101
    %v1412 = vunpack.c.l.b16 %v1102
    %v1413 = vunpack.c.l.b16 %v1103
    %v1414 = vunpack.c.l.b16 %v1104
    %v1415 = vunpack.c.l.b16 %v1105
    %v1416 = vrot.slane %v1408, 7
    %vm1417 = vcmask 1041409
    %v1418 = vsel %vm1417, %v1416, %v1400
    %v1419 = vrot.slane %v1409, 7
    %v1420 = vsel %vm1417, %v1419, %v1401
    %v1421 = vrot.slane %v1410, 7
    %v1422 = vsel %vm1417, %v1421, %v1402
    %v1423 = vrot.slane %v1411, 7
    %v1424 = vsel %vm1417, %v1423, %v1403
    %v1425 = vrot.slane %v1412, 7
    %v1426 = vsel %vm1417, %v1425, %v1404
    %v1427 = vrot.slane %v1413, 7
    %v1428 = vsel %vm1417, %v1427, %v1405
    %v1429 = vrot.slane %v1414, 7
    %v1430 = vsel %vm1417, %v1429, %v1406
    %v1431 = vrot.slane %v1415, 7
    %v1432 = vsel %vm1417, %v1431, %v1407
    %v1433 = vpack.c.b16 %v1418, %v1418
    %v1434 = vpack.c.b16 %v1420, %v1420
    %v1435 = vpack.c.b16 %v1422, %v1422
    %v1436 = vpack.c.b16 %v1424, %v1424
    %v1437 = vpack.c.b16 %v1426, %v1426
    %v1438 = vpack.c.b16 %v1428, %v1428
    %v1439 = vpack.c.b16 %v1430, %v1430
    %v1440 = vpack.c.b16 %v1432, %v1432
    %v1705 = vunpack.c.l.b16 %v1106
    %v1706 = vunpack.c.h.b16 %v1106
    %v1707 = vunpack.c.l.b16 %v1107
    %v1708 = vunpack.c.h.b16 %v1107
    %v1709 = vunpack.c.l.b16 %v1108
    %v1710 = vunpack.c.h.b16 %v1108
    %v1711 = vunpack.c.l.b16 %v1109
    %v1712 = vunpack.c.h.b16 %v1109
    %v1713 = vunpack.c.l.b16 %v1110
    %v1714 = vunpack.c.h.b16 %v1110
    %v1715 = vunpack.c.l.b16 %v1111
    %v1716 = vunpack.c.h.b16 %v1111
    %v1717 = vunpack.c.l.b16 %v1112
    %v1718 = vunpack.c.h.b16 %v1112
    %v1719 = vunpack.c.l.b16 %v1113
    %v1720 = vunpack.c.h.b16 %v1113
    %v1721 = vunpack.c.l.b16 %v1114
    %v1722 = vunpack.c.h.b16 %v1114
    %v1723 = vunpack.c.l.b16 %v1115
    %v1724 = vunpack.c.h.b16 %v1115
    %v1725 = vunpack.c.l.b16 %v1116
    %v1726 = vunpack.c.h.b16 %v1116
    %v1727 = vunpack.c.l.b16 %v1117
    %v1728 = vunpack.c.h.b16 %v1117
    %v1729 = vunpack.c.l.b16 %v1118
    %v1730 = vunpack.c.h.b16 %v1118
    %v1731 = vunpack.c.l.b16 %v1119
    %v1732 = vunpack.c.h.b16 %v1119
    %v1733 = vunpack.c.l.b16 %v1120
    %v1734 = vunpack.c.h.b16 %v1120
    %v1735 = vunpack.c.l.b16 %v1121
    %v1736 = vunpack.c.h.b16 %v1121
    %v1737 = vunpack.c.l.b16 %v1122
    %v1738 = vunpack.c.h.b16 %v1122
    %v1739 = vunpack.c.l.b16 %v1123
    %v1740 = vunpack.c.h.b16 %v1123
    %v1741 = vunpack.c.l.b16 %v1124
    %v1742 = vunpack.c.h.b16 %v1124
    %v1743 = vunpack.c.l.b16 %v1125
    %v1744 = vunpack.c.h.b16 %v1125
    %v1745 = vunpack.c.l.b16 %v1126
    %v1746 = vunpack.c.h.b16 %v1126
    %v1747 = vunpack.c.l.b16 %v1127
    %v1748 = vunpack.c.h.b16 %v1127
    %v1749 = vunpack.c.l.b16 %v1128
    %v1750 = vunpack.c.h.b16 %v1128
    %v1751 = vunpack.c.l.b16 %v1129
    %v1752 = vunpack.c.h.b16 %v1129
    %v1753 = vunpack.c.l.b16 %v1130
    %v1754 = vunpack.c.h.b16 %v1130
    %v1755 = vunpack.c.l.b16 %v1131
    %v1756 = vunpack.c.h.b16 %v1131
    %v1757 = vunpack.c.l.b16 %v1132
    %v1758 = vunpack.c.h.b16 %v1132
    %v1759 = vunpack.c.l.b16 %v1133
    %v1760 = vunpack.c.h.b16 %v1133
    %v1761 = vunpack.c.l.b16 %v1134
    %v1762 = vunpack.c.h.b16 %v1134
    %v1763 = vunpack.c.l.b16 %v1135
    %v1764 = vunpack.c.h.b16 %v1135
    %v1765 = vunpack.c.l.b16 %v1136
    %v1766 = vunpack.c.h.b16 %v1136
    %v1767 = vunpack.c.l.b16 %v1137
    %v1768 = vunpack.c.h.b16 %v1137
    %v1769 = vunpack.c.l.b16 %v1138
    %v1770 = vunpack.c.h.b16 %v1138
    %v1771 = vunpack.c.l.b16 %v1139
    %v1772 = vunpack.c.h.b16 %v1139
    %v1773 = vunpack.c.l.b16 %v1140
    %v1774 = vunpack.c.h.b16 %v1140
    %v1775 = vunpack.c.l.b16 %v1141
    %v1776 = vunpack.c.h.b16 %v1141
    %v1777 = vunpack.c.l.b16 %v1142
    %v1778 = vunpack.c.h.b16 %v1142
    %v1779 = vunpack.c.l.b16 %v1143
    %v1780 = vunpack.c.h.b16 %v1143
    %v1781 = vunpack.c.l.b16 %v1144
    %v1782 = vunpack.c.h.b16 %v1144
    %v1783 = vunpack.c.l.b16 %v1145
    %v1784 = vunpack.c.h.b16 %v1145
    %v1785 = vunpack.c.l.b16 %v1146
    %v1786 = vunpack.c.h.b16 %v1146
    %v1787 = vunpack.c.l.b16 %v1147
    %v1788 = vunpack.c.h.b16 %v1147
    %v1789 = vunpack.c.l.b16 %v1148
    %v1790 = vunpack.c.h.b16 %v1148
    %v1791 = vunpack.c.l.b16 %v1149
    %v1792 = vunpack.c.h.b16 %v1149
    %v1793 = vunpack.c.l.b16 %v1150
    %v1794 = vunpack.c.h.b16 %v1150
    %v1795 = vunpack.c.l.b16 %v1151
    %v1796 = vunpack.c.h.b16 %v1151
    %v1797 = vunpack.c.l.b16 %v1152
    %v1798 = vunpack.c.h.b16 %v1152
    %v1799 = vunpack.c.l.b16 %v1153
    %v1800 = vunpack.c.h.b16 %v1153
    %v1801 = vunpack.c.l.b16 %v1154
    %v1802 = vunpack.c.h.b16 %v1154
    %v1803 = vunpack.c.l.b16 %v1155
    %v1804 = vunpack.c.h.b16 %v1155
    %v1805 = vunpack.c.l.b16 %v1156
    %v1806 = vunpack.c.h.b16 %v1156
    %v1807 = vunpack.c.l.b16 %v1157
    %v1808 = vunpack.c.h.b16 %v1157
    %v1809 = vunpack.c.l.b16 %v1158
    %v1810 = vunpack.c.h.b16 %v1158
    %v1811 = vunpack.c.l.b16 %v1159
    %v1812 = vunpack.c.h.b16 %v1159
    %v1813 = vunpack.c.l.b16 %v1160
    %v1814 = vunpack.c.h.b16 %v1160
    %v1815 = vunpack.c.l.b16 %v1161
    %v1816 = vunpack.c.h.b16 %v1161
    %v1817 = vunpack.c.l.b16 %v1162
    %v1818 = vunpack.c.h.b16 %v1162
    %v1819 = vunpack.c.l.b16 %v1163
    %v1820 = vunpack.c.h.b16 %v1163
    %v1821 = vunpack.c.l.b16 %v1164
    %v1822 = vunpack.c.h.b16 %v1164
    %v1823 = vunpack.c.l.b16 %v1165
    %v1824 = vunpack.c.h.b16 %v1165
    %v1825 = vunpack.c.l.b16 %v1166
    %v1826 = vunpack.c.h.b16 %v1166
    %v1827 = vunpack.c.l.b16 %v1167
    %v1828 = vunpack.c.h.b16 %v1167
    %v1829 = vunpack.c.l.b16 %v1168
    %v1830 = vunpack.c.h.b16 %v1168
    %v1831 = vunpack.c.l.b16 %v1169
    %v1832 = vunpack.c.h.b16 %v1169
    %v1833 = vunpack.c.l.b16 %v1170
    %v1834 = vunpack.c.h.b16 %v1170
    %v1835 = vunpack.c.l.b16 %v1171
    %v1836 = vunpack.c.h.b16 %v1171
    %v1837 = vunpack.c.l.b16 %v1172
    %v1838 = vunpack.c.h.b16 %v1172
    %v1839 = vunpack.c.l.b16 %v1173
    %v1840 = vunpack.c.h.b16 %v1173
    %v1841 = vunpack.c.l.b16 %v1174
    %v1842 = vunpack.c.h.b16 %v1174
    %v1843 = vunpack.c.l.b16 %v1175
    %v1844 = vunpack.c.h.b16 %v1175
    %v1845 = vunpack.c.l.b16 %v1176
    %v1846 = vunpack.c.h.b16 %v1176
    %v1847 = vunpack.c.l.b16 %v1177
    %v1848 = vunpack.c.h.b16 %v1177
    %v1849 = vunpack.c.l.b16 %v1178
    %v1850 = vunpack.c.h.b16 %v1178
    %v1851 = vunpack.c.l.b16 %v1179
    %v1852 = vunpack.c.h.b16 %v1179
    %v1853 = vunpack.c.l.b16 %v1180
    %v1854 = vunpack.c.h.b16 %v1180
    %v1855 = vunpack.c.l.b16 %v1181
    %v1856 = vunpack.c.h.b16 %v1181
    %v1857 = vunpack.c.l.b16 %v1182
    %v1858 = vunpack.c.h.b16 %v1182
    %v1859 = vunpack.c.l.b16 %v1183
    %v1860 = vunpack.c.h.b16 %v1183
    %v1861 = vunpack.c.l.b16 %v1184
    %v1862 = vunpack.c.h.b16 %v1184
    %v1863 = vunpack.c.l.b16 %v1185
    %v1864 = vunpack.c.h.b16 %v1185
    %v1865 = vunpack.c.l.b16 %v1186
    %v1866 = vunpack.c.h.b16 %v1186
    %v1867 = vunpack.c.l.b16 %v1187
    %v1868 = vunpack.c.h.b16 %v1187
    %v1869 = vunpack.c.l.b16 %v1188
    %v1870 = vunpack.c.h.b16 %v1188
    %v1871 = vunpack.c.l.b16 %v1189
    %v1872 = vunpack.c.h.b16 %v1189
    %v1873 = vunpack.c.l.b16 %v1190
    %v1874 = vunpack.c.h.b16 %v1190
    %v1875 = vunpack.c.l.b16 %v1191
    %v1876 = vunpack.c.h.b16 %v1191
    %v1877 = vunpack.c.l.b16 %v1192
    %v1878 = vunpack.c.h.b16 %v1192
    %v1879 = vunpack.c.l.b16 %v1193
    %v1880 = vunpack.c.h.b16 %v1193
    %v1881 = vunpack.c.l.b16 %v1194
    %v1882 = vunpack.c.h.b16 %v1194
    %v1883 = vunpack.c.l.b16 %v1195
    %v1884 = vunpack.c.h.b16 %v1195
    %v1885 = vunpack.c.l.b16 %v1196
    %v1886 = vunpack.c.h.b16 %v1196
    %v1887 = vunpack.c.l.b16 %v1197
    %v1888 = vunpack.c.h.b16 %v1197
    %v1889 = vunpack.c.l.b16 %v1198
    %v1890 = vunpack.c.h.b16 %v1198
    %v1891 = vunpack.c.l.b16 %v1199
    %v1892 = vunpack.c.h.b16 %v1199
    %v1893 = vunpack.c.l.b16 %v1200
    %v1894 = vunpack.c.h.b16 %v1200
    %v1895 = vunpack.c.l.b16 %v1201
    %v1896 = vunpack.c.h.b16 %v1201
    %v1897 = vunpack.c.l.b16 %v1202
    %v1898 = vunpack.c.h.b16 %v1202
    %v1899 = vunpack.c.l.b16 %v1203
    %v1900 = vunpack.c.h.b16 %v1203
    %v1901 = vunpack.c.l.b16 %v1204
    %v1902 = vunpack.c.h.b16 %v1204
    %v1903 = vunpack.c.l.b16 %v1205
    %v1904 = vunpack.c.h.b16 %v1205
    %v1905 = vunpack.c.l.b16 %v1206
    %v1906 = vunpack.c.h.b16 %v1206
    %v1907 = vunpack.c.l.b16 %v1207
    %v1908 = vunpack.c.h.b16 %v1207
    %v1909 = vunpack.c.l.b16 %v1208
    %v1910 = vunpack.c.h.b16 %v1208
    %v1911 = vunpack.c.l.b16 %v1209
    %v1912 = vunpack.c.h.b16 %v1209
    %v1913 = vunpack.c.l.b16 %v1210
    %v1914 = vunpack.c.h.b16 %v1210
    %v1915 = vunpack.c.l.b16 %v1211
    %v1916 = vunpack.c.h.b16 %v1211
    %v1917 = vunpack.c.l.b16 %v1212
    %v1918 = vunpack.c.h.b16 %v1212
    %v1919 = vunpack.c.l.b16 %v1213
    %v1920 = vunpack.c.h.b16 %v1213
    %v1921 = vunpack.c.l.b16 %v1214
    %v1922 = vunpack.c.h.b16 %v1214
    %v1923 = vunpack.c.l.b16 %v1215
    %v1924 = vunpack.c.h.b16 %v1215
    %v1925 = vunpack.c.l.b16 %v1216
    %v1926 = vunpack.c.h.b16 %v1216
    %v1927 = vunpack.c.l.b16 %v1217
    %v1928 = vunpack.c.h.b16 %v1217
    %v1929 = vunpack.c.l.b16 %v1218
    %v1930 = vunpack.c.h.b16 %v1218
    %v1931 = vunpack.c.l.b16 %v1219
    %v1932 = vunpack.c.h.b16 %v1219
    %v1933 = vunpack.c.l.b16 %v1220
    %v1934 = vunpack.c.h.b16 %v1220
    %v1935 = vunpack.c.l.b16 %v1221
    %v1936 = vunpack.c.h.b16 %v1221
    %v1937 = vunpack.c.l.b16 %v1222
    %v1938 = vunpack.c.h.b16 %v1222
    %v1939 = vunpack.c.l.b16 %v1223
    %v1940 = vunpack.c.h.b16 %v1223
    %v1941 = vunpack.c.l.b16 %v1224
    %v1942 = vunpack.c.h.b16 %v1224
    %v1943 = vunpack.c.l.b16 %v1225
    %v1944 = vunpack.c.h.b16 %v1225
    %v1945 = vunpack.c.l.b16 %v1226
    %v1946 = vunpack.c.h.b16 %v1226
    %v1947 = vunpack.c.l.b16 %v1227
    %v1948 = vunpack.c.h.b16 %v1227
    %v1949 = vunpack.c.l.b16 %v1228
    %v1950 = vunpack.c.h.b16 %v1228
    %v1951 = vunpack.c.l.b16 %v1229
    %v1952 = vunpack.c.h.b16 %v1229
    %v1953 = vunpack.c.l.b16 %v1230
    %v1954 = vunpack.c.h.b16 %v1230
    %v1955 = vunpack.c.l.b16 %v1231
    %v1956 = vunpack.c.h.b16 %v1231
    %v1957 = vunpack.c.l.b16 %v1232
    %v1958 = vunpack.c.h.b16 %v1232
    %v1959 = vunpack.c.l.b16 %v1233
    %v1960 = vunpack.c.h.b16 %v1233
    %v1961 = vunpack.c.l.b16 %v1234
    %v1962 = vunpack.c.h.b16 %v1234
    %v1963 = vunpack.c.l.b16 %v1235
    %v1964 = vunpack.c.h.b16 %v1235
    %v1965 = vunpack.c.l.b16 %v1236
    %v1966 = vunpack.c.h.b16 %v1236
    %v1967 = vunpack.c.l.b16 %v1237
    %v1968 = vunpack.c.h.b16 %v1237
    %v1969 = vunpack.c.l.b16 %v1238
    %v1970 = vunpack.c.h.b16 %v1238
    %v1971 = vunpack.c.l.b16 %v1239
    %v1972 = vunpack.c.h.b16 %v1239
    %v1973 = vunpack.c.l.b16 %v1240
    %v1974 = vunpack.c.h.b16 %v1240
    %v1975 = vunpack.c.l.b16 %v1241
    %v1976 = vunpack.c.h.b16 %v1241
    %v1977 = vunpack.c.l.b16 %v1242
    %v1978 = vunpack.c.h.b16 %v1242
    %v1979 = vunpack.c.l.b16 %v1243
    %v1980 = vunpack.c.h.b16 %v1243
    %v1981 = vunpack.c.l.b16 %v1244
    %v1982 = vunpack.c.h.b16 %v1244
    %v1983 = vunpack.c.l.b16 %v1245
    %v1984 = vunpack.c.h.b16 %v1245
    %v1985 = vunpack.c.l.b16 %v1246
    %v1986 = vunpack.c.h.b16 %v1246
    %v1987 = vunpack.c.l.b16 %v1247
    %v1988 = vunpack.c.h.b16 %v1247
    %v1989 = vunpack.c.l.b16 %v1248
    %v1990 = vunpack.c.h.b16 %v1248
    %v1991 = vunpack.c.l.b16 %v1249
    %v1992 = vunpack.c.h.b16 %v1249
    %v1993 = vunpack.c.l.b16 %v1250
    %v1994 = vunpack.c.h.b16 %v1250
    %v1995 = vunpack.c.l.b16 %v1251
    %v1996 = vunpack.c.h.b16 %v1251
    %v1997 = vunpack.c.l.b16 %v1252
    %v1998 = vunpack.c.h.b16 %v1252
    %v1999 = vunpack.c.l.b16 %v1253
    %v2000 = vunpack.c.h.b16 %v1253
    %v2001 = vunpack.c.l.b16 %v1254
    %v2002 = vunpack.c.h.b16 %v1254
    %v2003 = vunpack.c.l.b16 %v1255
    %v2004 = vunpack.c.h.b16 %v1255
    %v2005 = vunpack.c.l.b16 %v1256
    %v2006 = vunpack.c.h.b16 %v1256
    %v2007 = vunpack.c.l.b16 %v1257
    %v2008 = vunpack.c.h.b16 %v1257
    %v2009 = vunpack.c.l.b16 %v1258
    %v2010 = vunpack.c.h.b16 %v1258
    %v2011 = vunpack.c.l.b16 %v1259
    %v2012 = vunpack.c.h.b16 %v1259
    %v2013 = vunpack.c.l.b16 %v1260
    %v2014 = vunpack.c.h.b16 %v1260
    %v2015 = vunpack.c.l.b16 %v1261
    %v2016 = vunpack.c.h.b16 %v1261
    %v2017 = vunpack.c.l.b16 %v1262
    %v2018 = vunpack.c.h.b16 %v1262
    %v2019 = vunpack.c.l.b16 %v1263
    %v2020 = vunpack.c.h.b16 %v1263
    %v2021 = vunpack.c.l.b16 %v1264
    %v2022 = vunpack.c.h.b16 %v1264
    %v2023 = vunpack.c.l.b16 %v1265
    %v2024 = vunpack.c.h.b16 %v1265
    %v2025 = vunpack.c.l.b16 %v1266
    %v2026 = vunpack.c.h.b16 %v1266
    %v2027 = vunpack.c.l.b16 %v1267
    %v2028 = vunpack.c.h.b16 %v1267
    %v2029 = vunpack.c.l.b16 %v1268
    %v2030 = vunpack.c.h.b16 %v1268
    %v2031 = vunpack.c.l.b16 %v1269
    %v2032 = vunpack.c.h.b16 %v1269
    %v2033 = vunpack.c.l.b16 %v1270
    %v2034 = vunpack.c.h.b16 %v1270
    %v2035 = vunpack.c.l.b16 %v1271
    %v2036 = vunpack.c.h.b16 %v1271
    %v2037 = vunpack.c.l.b16 %v1272
    %v2038 = vunpack.c.h.b16 %v1272
    %v2039 = vunpack.c.l.b16 %v1273
    %v2040 = vunpack.c.h.b16 %v1273
    %v2041 = vunpack.c.l.b16 %v1274
    %v2042 = vunpack.c.h.b16 %v1274
    %v2043 = vunpack.c.l.b16 %v1275
    %v2044 = vunpack.c.h.b16 %v1275
    %v2045 = vunpack.c.l.b16 %v1276
    %v2046 = vunpack.c.h.b16 %v1276
    %v2047 = vunpack.c.l.b16 %v1277
    %v2048 = vunpack.c.h.b16 %v1277
    %v2049 = vunpack.c.l.b16 %v1278
    %v2050 = vunpack.c.h.b16 %v1278
    %v2051 = vunpack.c.l.b16 %v1279
    %v2052 = vunpack.c.h.b16 %v1279
    %v2053 = vunpack.c.l.b16 %v1280
    %v2054 = vunpack.c.h.b16 %v1280
    %v2055 = vunpack.c.l.b16 %v1281
    %v2056 = vunpack.c.h.b16 %v1281
    %v2057 = vunpack.c.l.b16 %v1282
    %v2058 = vunpack.c.h.b16 %v1282
    %v2059 = vunpack.c.l.b16 %v1283
    %v2060 = vunpack.c.h.b16 %v1283
    %v2061 = vunpack.c.l.b16 %v1284
    %v2062 = vunpack.c.h.b16 %v1284
    %v2063 = vunpack.c.l.b16 %v1285
    %v2064 = vunpack.c.h.b16 %v1285
    %v2065 = vunpack.c.l.b16 %v1286
    %v2066 = vunpack.c.h.b16 %v1286
    %v2067 = vunpack.c.l.b16 %v1287
    %v2068 = vunpack.c.h.b16 %v1287
    %v2069 = vunpack.c.l.b16 %v1288
    %v2070 = vunpack.c.h.b16 %v1288
    %v2071 = vunpack.c.l.b16 %v1289
    %v2072 = vunpack.c.h.b16 %v1289
    %v2073 = vunpack.c.l.b16 %v1290
    %v2074 = vunpack.c.h.b16 %v1290
    %v2075 = vunpack.c.l.b16 %v1291
    %v2076 = vunpack.c.h.b16 %v1291
    %v2077 = vunpack.c.l.b16 %v1292
    %v2078 = vunpack.c.h.b16 %v1292
    %v2079 = vunpack.c.l.b16 %v1293
    %v2080 = vunpack.c.h.b16 %v1293
    %v2081 = vunpack.c.l.b16 %v1294
    %v2082 = vunpack.c.h.b16 %v1294
    %v2083 = vunpack.c.l.b16 %v1295
    %v2084 = vunpack.c.h.b16 %v1295
    %v2085 = vunpack.c.l.b16 %v1296
    %v2086 = vunpack.c.h.b16 %v1296
    %v2087 = vunpack.c.l.b16 %v1297
    %v2088 = vunpack.c.h.b16 %v1297
    %v2089 = vunpack.c.l.b16 %v1298
    %v2090 = vunpack.c.h.b16 %v1298
    %v2091 = vunpack.c.l.b16 %v1299
    %v2092 = vunpack.c.h.b16 %v1299
    %v2093 = vunpack.c.l.b16 %v1300
    %v2094 = vunpack.c.h.b16 %v1300
    %v2095 = vunpack.c.l.b16 %v1301
    %v2096 = vunpack.c.h.b16 %v1301
    %v2097 = vunpack.c.l.b16 %v1302
    %v2098 = vunpack.c.h.b16 %v1302
    %v2099 = vunpack.c.l.b16 %v1303
    %v2100 = vunpack.c.h.b16 %v1303
    %v2101 = vunpack.c.l.b16 %v1304
    %v2102 = vunpack.c.h.b16 %v1304
    %v2103 = vunpack.c.l.b16 %v1305
    %v2104 = vunpack.c.h.b16 %v1305
    %v2105 = vunpack.c.l.b16 %v1306
    %v2106 = vunpack.c.h.b16 %v1306
    %v2107 = vunpack.c.l.b16 %v1307
    %v2108 = vunpack.c.h.b16 %v1307
    %v2109 = vunpack.c.l.b16 %v1308
    %v2110 = vunpack.c.h.b16 %v1308
    %v2111 = vunpack.c.l.b16 %v1309
    %v2112 = vunpack.c.h.b16 %v1309
    %v2113 = vunpack.c.l.b16 %v1310
    %v2114 = vunpack.c.h.b16 %v1310
    %v2115 = vunpack.c.l.b16 %v1311
    %v2116 = vunpack.c.h.b16 %v1311
    %v2117 = vunpack.c.l.b16 %v1312
    %v2118 = vunpack.c.h.b16 %v1312
    %v2119 = vunpack.c.l.b16 %v1313
    %v2120 = vunpack.c.h.b16 %v1313
    %v2121 = vunpack.c.l.b16 %v1314
    %v2122 = vunpack.c.h.b16 %v1314
    %v2123 = vunpack.c.l.b16 %v1315
    %v2124 = vunpack.c.h.b16 %v1315
    %v2125 = vunpack.c.l.b16 %v1316
    %v2126 = vunpack.c.h.b16 %v1316
    %v2127 = vunpack.c.l.b16 %v1317
    %v2128 = vunpack.c.h.b16 %v1317
    %v2129 = vunpack.c.l.b16 %v1318
    %v2130 = vunpack.c.h.b16 %v1318
    %v2131 = vunpack.c.l.b16 %v1319
    %v2132 = vunpack.c.h.b16 %v1319
    %v2133 = vunpack.c.l.b16 %v1320
    %v2134 = vunpack.c.h.b16 %v1320
    %v2135 = vunpack.c.l.b16 %v1321
    %v2136 = vunpack.c.h.b16 %v1321
    %v2137 = vunpack.c.l.b16 %v1322
    %v2138 = vunpack.c.h.b16 %v1322
    %v2139 = vunpack.c.l.b16 %v1323
    %v2140 = vunpack.c.h.b16 %v1323
    %v2141 = vunpack.c.l.b16 %v1324
    %v2142 = vunpack.c.h.b16 %v1324
    %v2143 = vunpack.c.l.b16 %v1325
    %v2144 = vunpack.c.h.b16 %v1325
    %v2145 = vunpack.c.l.b16 %v1326
    %v2146 = vunpack.c.h.b16 %v1326
    %v2147 = vunpack.c.l.b16 %v1327
    %v2148 = vunpack.c.h.b16 %v1327
    %v2149 = vunpack.c.l.b16 %v1328
    %v2150 = vunpack.c.h.b16 %v1328
    %v2151 = vunpack.c.l.b16 %v1329
    %v2152 = vunpack.c.h.b16 %v1329
    %v2153 = vunpack.c.l.b16 %v1330
    %v2154 = vunpack.c.h.b16 %v1330
    %v2155 = vunpack.c.l.b16 %v1331
    %v2156 = vunpack.c.h.b16 %v1331
    %v2157 = vunpack.c.l.b16 %v1332
    %v2158 = vunpack.c.h.b16 %v1332
    %v2159 = vunpack.c.l.b16 %v1333
    %v2160 = vunpack.c.h.b16 %v1333
    %v2161 = vunpack.c.l.b16 %v1334
    %v2162 = vunpack.c.h.b16 %v1334
    %v2163 = vunpack.c.l.b16 %v1335
    %v2164 = vunpack.c.h.b16 %v1335
    %v2165 = vunpack.c.l.b16 %v1336
    %v2166 = vunpack.c.h.b16 %v1336
    %v2167 = vunpack.c.l.b16 %v1337
    %v2168 = vunpack.c.h.b16 %v1337
    %v2169 = vunpack.c.l.b16 %v1338
    %v2170 = vunpack.c.h.b16 %v1338
    %v2171 = vunpack.c.l.b16 %v1339
    %v2172 = vunpack.c.h.b16 %v1339
    %v2173 = vunpack.c.l.b16 %v1340
    %v2174 = vunpack.c.h.b16 %v1340
    %v2175 = vunpack.c.l.b16 %v1341
    %v2176 = vunpack.c.h.b16 %v1341
    %v2177 = vunpack.c.l.b16 %v1342
    %v2178 = vunpack.c.h.b16 %v1342
    %v2179 = vunpack.c.l.b16 %v1343
    %v2180 = vunpack.c.h.b16 %v1343
    %v2181 = vunpack.c.l.b16 %v1344
    %v2182 = vunpack.c.h.b16 %v1344
    %v2183 = vunpack.c.l.b16 %v1345
    %v2184 = vunpack.c.h.b16 %v1345
    %v2185 = vunpack.c.l.b16 %v1346
    %v2186 = vunpack.c.h.b16 %v1346
    %v2187 = vunpack.c.l.b16 %v1347
    %v2188 = vunpack.c.h.b16 %v1347
    %v2189 = vunpack.c.l.b16 %v1348
    %v2190 = vunpack.c.h.b16 %v1348
    %v2191 = vunpack.c.l.b16 %v1349
    %v2192 = vunpack.c.h.b16 %v1349
    %v2193 = vunpack.c.l.b16 %v1350
    %v2194 = vunpack.c.h.b16 %v1350
    %v2195 = vunpack.c.l.b16 %v1351
    %v2196 = vunpack.c.h.b16 %v1351
    %v2197 = vunpack.c.l.b16 %v1352
    %v2198 = vunpack.c.h.b16 %v1352
    %v2199 = vunpack.c.l.b16 %v1353
    %v2200 = vunpack.c.h.b16 %v1353
    %v2201 = vunpack.c.l.b16 %v1354
    %v2202 = vunpack.c.h.b16 %v1354
    %v2203 = vunpack.c.l.b16 %v1355
    %v2204 = vunpack.c.h.b16 %v1355
    %v2205 = vunpack.c.l.b16 %v1356
    %v2206 = vunpack.c.h.b16 %v1356
    %v2207 = vunpack.c.l.b16 %v1357
    %v2208 = vunpack.c.h.b16 %v1357
    %v2209 = vunpack.c.l.b16 %v1358
    %v2210 = vunpack.c.h.b16 %v1358
    %v2211 = vunpack.c.l.b16 %v1359
    %v2212 = vunpack.c.h.b16 %v1359
    %v2213 = vunpack.c.l.b16 %v1360
    %v2214 = vunpack.c.h.b16 %v1360
    %v2215 = vunpack.c.l.b16 %v1361
    %v2216 = vunpack.c.h.b16 %v1361
    %v2217 = vpack.c.b16 %v1709, %v1705
    %v2218 = vpack.c.b16 %v1710, %v1706
    %v2219 = vpack.c.b16 %v1711, %v1707
    %v2220 = vpack.c.b16 %v1712, %v1708
    %v2221 = vpack.c.b16 %v1717, %v1713
    %v2222 = vpack.c.b16 %v1718, %v1714
    %v2223 = vpack.c.b16 %v1719, %v1715
    %v2224 = vpack.c.b16 %v1720, %v1716
    %v2225 = vpack.c.b16 %v1725, %v1721
    %v2226 = vpack.c.b16 %v1726, %v1722
    %v2227 = vpack.c.b16 %v1727, %v1723
    %v2228 = vpack.c.b16 %v1728, %v1724
    %v2229 = vpack.c.b16 %v1733, %v1729
    %v2230 = vpack.c.b16 %v1734, %v1730
    %v2231 = vpack.c.b16 %v1735, %v1731
    %v2232 = vpack.c.b16 %v1736, %v1732
    %v2233 = vpack.c.b16 %v1741, %v1737
    %v2234 = vpack.c.b16 %v1742, %v1738
    %v2235 = vpack.c.b16 %v1743, %v1739
    %v2236 = vpack.c.b16 %v1744, %v1740
    %v2237 = vpack.c.b16 %v1749, %v1745
    %v2238 = vpack.c.b16 %v1750, %v1746
    %v2239 = vpack.c.b16 %v1751, %v1747
    %v2240 = vpack.c.b16 %v1752, %v1748
    %v2241 = vpack.c.b16 %v1757, %v1753
    %v2242 = vpack.c.b16 %v1758, %v1754
    %v2243 = vpack.c.b16 %v1759, %v1755
    %v2244 = vpack.c.b16 %v1760, %v1756
    %v2245 = vpack.c.b16 %v1765, %v1761
    %v2246 = vpack.c.b16 %v1766, %v1762
    %v2247 = vpack.c.b16 %v1767, %v1763
    %v2248 = vpack.c.b16 %v1768, %v1764
    %v2249 = vpack.c.b16 %v1773, %v1769
    %v2250 = vpack.c.b16 %v1774, %v1770
    %v2251 = vpack.c.b16 %v1775, %v1771
    %v2252 = vpack.c.b16 %v1776, %v1772
    %v2253 = vpack.c.b16 %v1781, %v1777
    %v2254 = vpack.c.b16 %v1782, %v1778
    %v2255 = vpack.c.b16 %v1783, %v1779
    %v2256 = vpack.c.b16 %v1784, %v1780
    %v2257 = vpack.c.b16 %v1789, %v1785
    %v2258 = vpack.c.b16 %v1790, %v1786
    %v2259 = vpack.c.b16 %v1791, %v1787
    %v2260 = vpack.c.b16 %v1792, %v1788
    %v2261 = vpack.c.b16 %v1797, %v1793
    %v2262 = vpack.c.b16 %v1798, %v1794
    %v2263 = vpack.c.b16 %v1799, %v1795
    %v2264 = vpack.c.b16 %v1800, %v1796
    %v2265 = vpack.c.b16 %v1805, %v1801
    %v2266 = vpack.c.b16 %v1806, %v1802
    %v2267 = vpack.c.b16 %v1807, %v1803
    %v2268 = vpack.c.b16 %v1808, %v1804
    %v2269 = vpack.c.b16 %v1813, %v1809
    %v2270 = vpack.c.b16 %v1814, %v1810
    %v2271 = vpack.c.b16 %v1815, %v1811
    %v2272 = vpack.c.b16 %v1816, %v1812
    %v2273 = vpack.c.b16 %v1821, %v1817
    %v2274 = vpack.c.b16 %v1822, %v1818
    %v2275 = vpack.c.b16 %v1823, %v1819
    %v2276 = vpack.c.b16 %v1824, %v1820
    %v2277 = vpack.c.b16 %v1829, %v1825
    %v2278 = vpack.c.b16 %v1830, %v1826
    %v2279 = vpack.c.b16 %v1831, %v1827
    %v2280 = vpack.c.b16 %v1832, %v1828
    %v2281 = vpack.c.b16 %v1837, %v1833
    %v2282 = vpack.c.b16 %v1838, %v1834
    %v2283 = vpack.c.b16 %v1839, %v1835
    %v2284 = vpack.c.b16 %v1840, %v1836
    %v2285 = vpack.c.b16 %v1845, %v1841
    %v2286 = vpack.c.b16 %v1846, %v1842
    %v2287 = vpack.c.b16 %v1847, %v1843
    %v2288 = vpack.c.b16 %v1848, %v1844
    %v2289 = vpack.c.b16 %v1853, %v1849
    %v2290 = vpack.c.b16 %v1854, %v1850
    %v2291 = vpack.c.b16 %v1855, %v1851
    %v2292 = vpack.c.b16 %v1856, %v1852
    %v2293 = vpack.c.b16 %v1861, %v1857
    %v2294 = vpack.c.b16 %v1862, %v1858
    %v2295 = vpack.c.b16 %v1863, %v1859
    %v2296 = vpack.c.b16 %v1864, %v1860
    %v2297 = vpack.c.b16 %v1869, %v1865
    %v2298 = vpack.c.b16 %v1870, %v1866
    %v2299 = vpack.c.b16 %v1871, %v1867
    %v2300 = vpack.c.b16 %v1872, %v1868
    %v2301 = vpack.c.b16 %v1877, %v1873
    %v2302 = vpack.c.b16 %v1878, %v1874
    %v2303 = vpack.c.b16 %v1879, %v1875
    %v2304 = vpack.c.b16 %v1880, %v1876
    %v2305 = vpack.c.b16 %v1885, %v1881
    %v2306 = vpack.c.b16 %v1886, %v1882
    %v2307 = vpack.c.b16 %v1887, %v1883
    %v2308 = vpack.c.b16 %v1888, %v1884
    %v2309 = vpack.c.b16 %v1893, %v1889
    %v2310 = vpack.c.b16 %v1894, %v1890
    %v2311 = vpack.c.b16 %v1895, %v1891
    %v2312 = vpack.c.b16 %v1896, %v1892
    %v2313 = vpack.c.b16 %v1901, %v1897
    %v2314 = vpack.c.b16 %v1902, %v1898
    %v2315 = vpack.c.b16 %v1903, %v1899
    %v2316 = vpack.c.b16 %v1904, %v1900
    %v2317 = vpack.c.b16 %v1909, %v1905
    %v2318 = vpack.c.b16 %v1910, %v1906
    %v2319 = vpack.c.b16 %v1911, %v1907
    %v2320 = vpack.c.b16 %v1912, %v1908
    %v2321 = vpack.c.b16 %v1917, %v1913
    %v2322 = vpack.c.b16 %v1918, %v1914
    %v2323 = vpack.c.b16 %v1919, %v1915
    %v2324 = vpack.c.b16 %v1920, %v1916
    %v2325 = vpack.c.b16 %v1925, %v1921
    %v2326 = vpack.c.b16 %v1926, %v1922
    %v2327 = vpack.c.b16 %v1927, %v1923
    %v2328 = vpack.c.b16 %v1928, %v1924
    %v2329 = vpack.c.b16 %v1933, %v1929
    %v2330 = vpack.c.b16 %v1934, %v1930
    %v2331 = vpack.c.b16 %v1935, %v1931
    %v2332 = vpack.c.b16 %v1936, %v1932
    %v2333 = vpack.c.b16 %v1941, %v1937
    %v2334 = vpack.c.b16 %v1942, %v1938
    %v2335 = vpack.c.b16 %v1943, %v1939
    %v2336 = vpack.c.b16 %v1944, %v1940
    %v2337 = vpack.c.b16 %v1949, %v1945
    %v2338 = vpack.c.b16 %v1950, %v1946
    %v2339 = vpack.c.b16 %v1951, %v1947
    %v2340 = vpack.c.b16 %v1952, %v1948
    %v2341 = vpack.c.b16 %v1957, %v1953
    %v2342 = vpack.c.b16 %v1958, %v1954
    %v2343 = vpack.c.b16 %v1959, %v1955
    %v2344 = vpack.c.b16 %v1960, %v1956
    %v2345 = vpack.c.b16 %v1965, %v1961
    %v2346 = vpack.c.b16 %v1966, %v1962
    %v2347 = vpack.c.b16 %v1967, %v1963
    %v2348 = vpack.c.b16 %v1968, %v1964
    %v2349 = vpack.c.b16 %v1973, %v1969
    %v2350 = vpack.c.b16 %v1974, %v1970
    %v2351 = vpack.c.b16 %v1975, %v1971
    %v2352 = vpack.c.b16 %v1976, %v1972
    %v2353 = vpack.c.b16 %v1981, %v1977
    %v2354 = vpack.c.b16 %v1982, %v1978
    %v2355 = vpack.c.b16 %v1983, %v1979
    %v2356 = vpack.c.b16 %v1984, %v1980
    %v2357 = vpack.c.b16 %v1989, %v1985
    %v2358 = vpack.c.b16 %v1990, %v1986
    %v2359 = vpack.c.b16 %v1991, %v1987
    %v2360 = vpack.c.b16 %v1992, %v1988
    %v2361 = vpack.c.b16 %v1997, %v1993
    %v2362 = vpack.c.b16 %v1998, %v1994
    %v2363 = vpack.c.b16 %v1999, %v1995
    %v2364 = vpack.c.b16 %v2000, %v1996
    %v2365 = vpack.c.b16 %v2005, %v2001
    %v2366 = vpack.c.b16 %v2006, %v2002
    %v2367 = vpack.c.b16 %v2007, %v2003
    %v2368 = vpack.c.b16 %v2008, %v2004
    %v2369 = vpack.c.b16 %v2013, %v2009
    %v2370 = vpack.c.b16 %v2014, %v2010
    %v2371 = vpack.c.b16 %v2015, %v2011
    %v2372 = vpack.c.b16 %v2016, %v2012
    %v2373 = vpack.c.b16 %v2021, %v2017
    %v2374 = vpack.c.b16 %v2022, %v2018
    %v2375 = vpack.c.b16 %v2023, %v2019
    %v2376 = vpack.c.b16 %v2024, %v2020
    %v2377 = vpack.c.b16 %v2029, %v2025
    %v2378 = vpack.c.b16 %v2030, %v2026
    %v2379 = vpack.c.b16 %v2031, %v2027
    %v2380 = vpack.c.b16 %v2032, %v2028
    %v2381 = vpack.c.b16 %v2037, %v2033
    %v2382 = vpack.c.b16 %v2038, %v2034
    %v2383 = vpack.c.b16 %v2039, %v2035
    %v2384 = vpack.c.b16 %v2040, %v2036
    %v2385 = vpack.c.b16 %v2045, %v2041
    %v2386 = vpack.c.b16 %v2046, %v2042
    %v2387 = vpack.c.b16 %v2047, %v2043
    %v2388 = vpack.c.b16 %v2048, %v2044
    %v2389 = vpack.c.b16 %v2053, %v2049
    %v2390 = vpack.c.b16 %v2054, %v2050
    %v2391 = vpack.c.b16 %v2055, %v2051
    %v2392 = vpack.c.b16 %v2056, %v2052
    %v2393 = vpack.c.b16 %v2061, %v2057
    %v2394 = vpack.c.b16 %v2062, %v2058
    %v2395 = vpack.c.b16 %v2063, %v2059
    %v2396 = vpack.c.b16 %v2064, %v2060
    %v2397 = vpack.c.b16 %v2069, %v2065
    %v2398 = vpack.c.b16 %v2070, %v2066
    %v2399 = vpack.c.b16 %v2071, %v2067
    %v2400 = vpack.c.b16 %v2072, %v2068
    %v2401 = vpack.c.b16 %v2077, %v2073
    %v2402 = vpack.c.b16 %v2078, %v2074
    %v2403 = vpack.c.b16 %v2079, %v2075
    %v2404 = vpack.c.b16 %v2080, %v2076
    %v2405 = vpack.c.b16 %v2085, %v2081
    %v2406 = vpack.c.b16 %v2086, %v2082
    %v2407 = vpack.c.b16 %v2087, %v2083
    %v2408 = vpack.c.b16 %v2088, %v2084
    %v2409 = vpack.c.b16 %v2093, %v2089
    %v2410 = vpack.c.b16 %v2094, %v2090
    %v2411 = vpack.c.b16 %v2095, %v2091
    %v2412 = vpack.c.b16 %v2096, %v2092
    %v2413 = vpack.c.b16 %v2101, %v2097
    %v2414 = vpack.c.b16 %v2102, %v2098
    %v2415 = vpack.c.b16 %v2103, %v2099
    %v2416 = vpack.c.b16 %v2104, %v2100
    %v2417 = vpack.c.b16 %v2109, %v2105
    %v2418 = vpack.c.b16 %v2110, %v2106
    %v2419 = vpack.c.b16 %v2111, %v2107
    %v2420 = vpack.c.b16 %v2112, %v2108
    %v2421 = vpack.c.b16 %v2117, %v2113
    %v2422 = vpack.c.b16 %v2118, %v2114
    %v2423 = vpack.c.b16 %v2119, %v2115
    %v2424 = vpack.c.b16 %v2120, %v2116
    %v2425 = vpack.c.b16 %v2125, %v2121
    %v2426 = vpack.c.b16 %v2126, %v2122
    %v2427 = vpack.c.b16 %v2127, %v2123
    %v2428 = vpack.c.b16 %v2128, %v2124
    %v2429 = vpack.c.b16 %v2133, %v2129
    %v2430 = vpack.c.b16 %v2134, %v2130
    %v2431 = vpack.c.b16 %v2135, %v2131
    %v2432 = vpack.c.b16 %v2136, %v2132
    %v2433 = vpack.c.b16 %v2141, %v2137
    %v2434 = vpack.c.b16 %v2142, %v2138
    %v2435 = vpack.c.b16 %v2143, %v2139
    %v2436 = vpack.c.b16 %v2144, %v2140
    %v2437 = vpack.c.b16 %v2149, %v2145
    %v2438 = vpack.c.b16 %v2150, %v2146
    %v2439 = vpack.c.b16 %v2151, %v2147
    %v2440 = vpack.c.b16 %v2152, %v2148
    %v2441 = vpack.c.b16 %v2157, %v2153
    %v2442 = vpack.c.b16 %v2158, %v2154
    %v2443 = vpack.c.b16 %v2159, %v2155
    %v2444 = vpack.c.b16 %v2160, %v2156
    %v2445 = vpack.c.b16 %v2165, %v2161
    %v2446 = vpack.c.b16 %v2166, %v2162
    %v2447 = vpack.c.b16 %v2167, %v2163
    %v2448 = vpack.c.b16 %v2168, %v2164
    %v2449 = vpack.c.b16 %v2173, %v2169
    %v2450 = vpack.c.b16 %v2174, %v2170
    %v2451 = vpack.c.b16 %v2175, %v2171
    %v2452 = vpack.c.b16 %v2176, %v2172
    %v2453 = vpack.c.b16 %v2181, %v2177
    %v2454 = vpack.c.b16 %v2182, %v2178
    %v2455 = vpack.c.b16 %v2183, %v2179
    %v2456 = vpack.c.b16 %v2184, %v2180
    %v2457 = vpack.c.b16 %v2189, %v2185
    %v2458 = vpack.c.b16 %v2190, %v2186
    %v2459 = vpack.c.b16 %v2191, %v2187
    %v2460 = vpack.c.b16 %v2192, %v2188
    %v2461 = vpack.c.b16 %v2197, %v2193
    %v2462 = vpack.c.b16 %v2198, %v2194
    %v2463 = vpack.c.b16 %v2199, %v2195
    %v2464 = vpack.c.b16 %v2200, %v2196
    %v2465 = vpack.c.b16 %v2205, %v2201
    %v2466 = vpack.c.b16 %v2206, %v2202
    %v2467 = vpack.c.b16 %v2207, %v2203
    %v2468 = vpack.c.b16 %v2208, %v2204
    %v2469 = vpack.c.b16 %v2213, %v2209
    %v2470 = vpack.c.b16 %v2214, %v2210
    %v2471 = vpack.c.b16 %v2215, %v2211
    %v2472 = vpack.c.b16 %v2216, %v2212
    %2729 = vmatprep.subr.bf16.mxu0 %v2218
    %2730 = vmatpush1.bf16.msra.mxu0 %v2217
    %2731 = vmatprep.subr.bf16.mxu0 %v2222
    %2732 = vmatpush1.bf16.msra.mxu0 %v2221
    %2733 = vmatprep.subr.bf16.mxu0 %v2226
    %2734 = vmatpush1.bf16.msra.mxu0 %v2225
    %2735 = vmatprep.subr.bf16.mxu0 %v2230
    %2736 = vmatpush1.bf16.msra.mxu0 %v2229
    %2737 = vmatprep.subr.bf16.mxu0 %v2234
    %2738 = vmatpush1.bf16.msra.mxu0 %v2233
    %2739 = vmatprep.subr.bf16.mxu0 %v2238
    %2740 = vmatpush1.bf16.msra.mxu0 %v2237
    %2741 = vmatprep.subr.bf16.mxu0 %v2242
    %2742 = vmatpush1.bf16.msra.mxu0 %v2241
    %2743 = vmatprep.subr.bf16.mxu0 %v2246
    %2744 = vmatpush1.bf16.msra.mxu0 %v2245
    %2745 = vmatprep.subr.bf16.mxu0 %v2250
    %2746 = vmatpush1.bf16.msra.mxu0 %v2249
    %2747 = vmatprep.subr.bf16.mxu0 %v2254
    %2748 = vmatpush1.bf16.msra.mxu0 %v2253
    %2749 = vmatprep.subr.bf16.mxu0 %v2258
    %2750 = vmatpush1.bf16.msra.mxu0 %v2257
    %2751 = vmatprep.subr.bf16.mxu0 %v2262
    %2752 = vmatpush1.bf16.msra.mxu0 %v2261
    %2753 = vmatprep.subr.bf16.mxu0 %v2266
    %2754 = vmatpush1.bf16.msra.mxu0 %v2265
    %2755 = vmatprep.subr.bf16.mxu0 %v2270
    %2756 = vmatpush1.bf16.msra.mxu0 %v2269
    %2757 = vmatprep.subr.bf16.mxu0 %v2274
    %2758 = vmatpush1.bf16.msra.mxu0 %v2273
    %2759 = vmatprep.subr.bf16.mxu0 %v2278
    %2760 = vmatpush1.bf16.msra.mxu0 %v2277
    %2761 = vmatprep.mubr.bf16.mxu0 %v1434
    %2762 = vmatmul.mubr.bf16.gmra.mrb[0].mxu0 %v1433
    %v2763 = vpop.f32.mrb[0].mxu0
    %v2764 = vadd.f32 %v1367, %v2763
    %v2765 = vpop.f32.mrb[0].mxu0
    %v2766 = vadd.f32 %v1371, %v2765
    %v2767 = vpop.f32.mrb[0].mxu0
    %v2768 = vpop.f32.mrb[0].mxu0
    %2769 = vdwg.mxu0
    %2770 = vmatprep.subr.bf16.mxu0 %v2282
    %2771 = vmatpush1.bf16.msra.mxu0 %v2281
    %2772 = vmatprep.subr.bf16.mxu0 %v2286
    %2773 = vmatpush1.bf16.msra.mxu0 %v2285
    %2774 = vmatprep.subr.bf16.mxu0 %v2290
    %2775 = vmatpush1.bf16.msra.mxu0 %v2289
    %2776 = vmatprep.subr.bf16.mxu0 %v2294
    %2777 = vmatpush1.bf16.msra.mxu0 %v2293
    %2778 = vmatprep.subr.bf16.mxu0 %v2298
    %2779 = vmatpush1.bf16.msra.mxu0 %v2297
    %2780 = vmatprep.subr.bf16.mxu0 %v2302
    %2781 = vmatpush1.bf16.msra.mxu0 %v2301
    %2782 = vmatprep.subr.bf16.mxu0 %v2306
    %2783 = vmatpush1.bf16.msra.mxu0 %v2305
    %2784 = vmatprep.subr.bf16.mxu0 %v2310
    %2785 = vmatpush1.bf16.msra.mxu0 %v2309
    %2786 = vmatprep.subr.bf16.mxu0 %v2314
    %2787 = vmatpush1.bf16.msra.mxu0 %v2313
    %2788 = vmatprep.subr.bf16.mxu0 %v2318
    %2789 = vmatpush1.bf16.msra.mxu0 %v2317
    %2790 = vmatprep.subr.bf16.mxu0 %v2322
    %2791 = vmatpush1.bf16.msra.mxu0 %v2321
    %2792 = vmatprep.subr.bf16.mxu0 %v2326
    %2793 = vmatpush1.bf16.msra.mxu0 %v2325
    %2794 = vmatprep.subr.bf16.mxu0 %v2330
    %2795 = vmatpush1.bf16.msra.mxu0 %v2329
    %2796 = vmatprep.subr.bf16.mxu0 %v2334
    %2797 = vmatpush1.bf16.msra.mxu0 %v2333
    %2798 = vmatprep.subr.bf16.mxu0 %v2338
    %2799 = vmatpush1.bf16.msra.mxu0 %v2337
    %2800 = vmatprep.subr.bf16.mxu0 %v2342
    %2801 = vmatpush1.bf16.msra.mxu0 %v2341
    %2802 = vmatprep.mubr.bf16.mxu0 %v1436
    %2803 = vmatmul.mubr.bf16.gmra.mrb[0].mxu0 %v1435
    %v2804 = vpop.f32.mrb[0].mxu0
    %v2805 = vadd.f32 %v2764, %v2804
    %v2806 = vpop.f32.mrb[0].mxu0
    %v2807 = vadd.f32 %v2766, %v2806
    %v2808 = vpop.f32.mrb[0].mxu0
    %v2809 = vpop.f32.mrb[0].mxu0
    %2810 = vdwg.mxu0
    %2811 = vmatprep.subr.bf16.mxu0 %v2346
    %2812 = vmatpush1.bf16.msra.mxu0 %v2345
    %2813 = vmatprep.subr.bf16.mxu0 %v2350
    %2814 = vmatpush1.bf16.msra.mxu0 %v2349
    %2815 = vmatprep.subr.bf16.mxu0 %v2354
    %2816 = vmatpush1.bf16.msra.mxu0 %v2353
    %2817 = vmatprep.subr.bf16.mxu0 %v2358
    %2818 = vmatpush1.bf16.msra.mxu0 %v2357
    %2819 = vmatprep.subr.bf16.mxu0 %v2362
    %2820 = vmatpush1.bf16.msra.mxu0 %v2361
    %2821 = vmatprep.subr.bf16.mxu0 %v2366
    %2822 = vmatpush1.bf16.msra.mxu0 %v2365
    %2823 = vmatprep.subr.bf16.mxu0 %v2370
    %2824 = vmatpush1.bf16.msra.mxu0 %v2369
    %2825 = vmatprep.subr.bf16.mxu0 %v2374
    %2826 = vmatpush1.bf16.msra.mxu0 %v2373
    %2827 = vmatprep.subr.bf16.mxu0 %v2378
    %2828 = vmatpush1.bf16.msra.mxu0 %v2377
    %2829 = vmatprep.subr.bf16.mxu0 %v2382
    %2830 = vmatpush1.bf16.msra.mxu0 %v2381
    %2831 = vmatprep.subr.bf16.mxu0 %v2386
    %2832 = vmatpush1.bf16.msra.mxu0 %v2385
    %2833 = vmatprep.subr.bf16.mxu0 %v2390
    %2834 = vmatpush1.bf16.msra.mxu0 %v2389
    %2835 = vmatprep.subr.bf16.mxu0 %v2394
    %2836 = vmatpush1.bf16.msra.mxu0 %v2393
    %2837 = vmatprep.subr.bf16.mxu0 %v2398
    %2838 = vmatpush1.bf16.msra.mxu0 %v2397
    %2839 = vmatprep.subr.bf16.mxu0 %v2402
    %2840 = vmatpush1.bf16.msra.mxu0 %v2401
    %2841 = vmatprep.subr.bf16.mxu0 %v2406
    %2842 = vmatpush1.bf16.msra.mxu0 %v2405
    %2843 = vmatprep.mubr.bf16.mxu0 %v1438
    %2844 = vmatmul.mubr.bf16.gmra.mrb[0].mxu0 %v1437
    %v2845 = vpop.f32.mrb[0].mxu0
    %v2846 = vadd.f32 %v2805, %v2845
    %v2847 = vpop.f32.mrb[0].mxu0
    %v2848 = vadd.f32 %v2807, %v2847
    %v2849 = vpop.f32.mrb[0].mxu0
    %v2850 = vpop.f32.mrb[0].mxu0
    %2851 = vdwg.mxu0
    %2852 = vmatprep.subr.bf16.mxu0 %v2410
    %2853 = vmatpush1.bf16.msra.mxu0 %v2409
    %2854 = vmatprep.subr.bf16.mxu0 %v2414
    %2855 = vmatpush1.bf16.msra.mxu0 %v2413
    %2856 = vmatprep.subr.bf16.mxu0 %v2418
    %2857 = vmatpush1.bf16.msra.mxu0 %v2417
    %2858 = vmatprep.subr.bf16.mxu0 %v2422
    %2859 = vmatpush1.bf16.msra.mxu0 %v2421
    %2860 = vmatprep.subr.bf16.mxu0 %v2426
    %2861 = vmatpush1.bf16.msra.mxu0 %v2425
    %2862 = vmatprep.subr.bf16.mxu0 %v2430
    %2863 = vmatpush1.bf16.msra.mxu0 %v2429
    %2864 = vmatprep.subr.bf16.mxu0 %v2434
    %2865 = vmatpush1.bf16.msra.mxu0 %v2433
    %2866 = vmatprep.subr.bf16.mxu0 %v2438
    %2867 = vmatpush1.bf16.msra.mxu0 %v2437
    %2868 = vmatprep.subr.bf16.mxu0 %v2442
    %2869 = vmatpush1.bf16.msra.mxu0 %v2441
    %2870 = vmatprep.subr.bf16.mxu0 %v2446
    %2871 = vmatpush1.bf16.msra.mxu0 %v2445
    %2872 = vmatprep.subr.bf16.mxu0 %v2450
    %2873 = vmatpush1.bf16.msra.mxu0 %v2449
    %2874 = vmatprep.subr.bf16.mxu0 %v2454
    %2875 = vmatpush1.bf16.msra.mxu0 %v2453
    %2876 = vmatprep.subr.bf16.mxu0 %v2458
    %2877 = vmatpush1.bf16.msra.mxu0 %v2457
    %2878 = vmatprep.subr.bf16.mxu0 %v2462
    %2879 = vmatpush1.bf16.msra.mxu0 %v2461
    %2880 = vmatprep.subr.bf16.mxu0 %v2466
    %2881 = vmatpush1.bf16.msra.mxu0 %v2465
    %2882 = vmatprep.subr.bf16.mxu0 %v2470
    %2883 = vmatpush1.bf16.msra.mxu0 %v2469
    %2884 = vmatprep.mubr.bf16.mxu0 %v1440
    %2885 = vmatmul.mubr.bf16.gmra.mrb[0].mxu0 %v1439
    %v2886 = vpop.f32.mrb[0].mxu0
    %v2887 = vadd.f32 %v2846, %v2886
    %v2888 = vpop.f32.mrb[0].mxu0
    %v2889 = vadd.f32 %v2848, %v2888
    %v2890 = vpop.f32.mrb[0].mxu0
    %v2891 = vpop.f32.mrb[0].mxu0
    %2892 = vdwg.mxu0
    %2893 = vmatprep.subr.bf16.mxu0 %v2220
    %2894 = vmatpush1.bf16.msra.mxu0 %v2219
    %2895 = vmatprep.subr.bf16.mxu0 %v2224
    %2896 = vmatpush1.bf16.msra.mxu0 %v2223
    %2897 = vmatprep.subr.bf16.mxu0 %v2228
    %2898 = vmatpush1.bf16.msra.mxu0 %v2227
    %2899 = vmatprep.subr.bf16.mxu0 %v2232
    %2900 = vmatpush1.bf16.msra.mxu0 %v2231
    %2901 = vmatprep.subr.bf16.mxu0 %v2236
    %2902 = vmatpush1.bf16.msra.mxu0 %v2235
    %2903 = vmatprep.subr.bf16.mxu0 %v2240
    %2904 = vmatpush1.bf16.msra.mxu0 %v2239
    %2905 = vmatprep.subr.bf16.mxu0 %v2244
    %2906 = vmatpush1.bf16.msra.mxu0 %v2243
    %2907 = vmatprep.subr.bf16.mxu0 %v2248
    %2908 = vmatpush1.bf16.msra.mxu0 %v2247
    %2909 = vmatprep.subr.bf16.mxu0 %v2252
    %2910 = vmatpush1.bf16.msra.mxu0 %v2251
    %2911 = vmatprep.subr.bf16.mxu0 %v2256
    %2912 = vmatpush1.bf16.msra.mxu0 %v2255
    %2913 = vmatprep.subr.bf16.mxu0 %v2260
    %2914 = vmatpush1.bf16.msra.mxu0 %v2259
    %2915 = vmatprep.subr.bf16.mxu0 %v2264
    %2916 = vmatpush1.bf16.msra.mxu0 %v2263
    %2917 = vmatprep.subr.bf16.mxu0 %v2268
    %2918 = vmatpush1.bf16.msra.mxu0 %v2267
    %2919 = vmatprep.subr.bf16.mxu0 %v2272
    %2920 = vmatpush1.bf16.msra.mxu0 %v2271
    %2921 = vmatprep.subr.bf16.mxu0 %v2276
    %2922 = vmatpush1.bf16.msra.mxu0 %v2275
    %2923 = vmatprep.subr.bf16.mxu0 %v2280
    %2924 = vmatpush1.bf16.msra.mxu0 %v2279
    %2925 = vmatprep.mubr.bf16.mxu0 %v1434
    %2926 = vmatmul.mubr.bf16.gmra.mrb[0].mxu0 %v1433
    %v2927 = vpop.f32.mrb[0].mxu0
    %v2928 = vadd.f32 %v1375, %v2927
    %v2929 = vpop.f32.mrb[0].mxu0
    %v2930 = vadd.f32 %v1379, %v2929
    %v2931 = vpop.f32.mrb[0].mxu0
    %v2932 = vpop.f32.mrb[0].mxu0
    %2933 = vdwg.mxu0
    %2934 = vmatprep.subr.bf16.mxu0 %v2284
    %2935 = vmatpush1.bf16.msra.mxu0 %v2283
    %2936 = vmatprep.subr.bf16.mxu0 %v2288
    %2937 = vmatpush1.bf16.msra.mxu0 %v2287
    %2938 = vmatprep.subr.bf16.mxu0 %v2292
    %2939 = vmatpush1.bf16.msra.mxu0 %v2291
    %2940 = vmatprep.subr.bf16.mxu0 %v2296
    %2941 = vmatpush1.bf16.msra.mxu0 %v2295
    %2942 = vmatprep.subr.bf16.mxu0 %v2300
    %2943 = vmatpush1.bf16.msra.mxu0 %v2299
    %2944 = vmatprep.subr.bf16.mxu0 %v2304
    %2945 = vmatpush1.bf16.msra.mxu0 %v2303
    %2946 = vmatprep.subr.bf16.mxu0 %v2308
    %2947 = vmatpush1.bf16.msra.mxu0 %v2307
    %2948 = vmatprep.subr.bf16.mxu0 %v2312
    %2949 = vmatpush1.bf16.msra.mxu0 %v2311
    %2950 = vmatprep.subr.bf16.mxu0 %v2316
    %2951 = vmatpush1.bf16.msra.mxu0 %v2315
    %2952 = vmatprep.subr.bf16.mxu0 %v2320
    %2953 = vmatpush1.bf16.msra.mxu0 %v2319
    %2954 = vmatprep.subr.bf16.mxu0 %v2324
    %2955 = vmatpush1.bf16.msra.mxu0 %v2323
    %2956 = vmatprep.subr.bf16.mxu0 %v2328
    %2957 = vmatpush1.bf16.msra.mxu0 %v2327
    %2958 = vmatprep.subr.bf16.mxu0 %v2332
    %2959 = vmatpush1.bf16.msra.mxu0 %v2331
    %2960 = vmatprep.subr.bf16.mxu0 %v2336
    %2961 = vmatpush1.bf16.msra.mxu0 %v2335
    %2962 = vmatprep.subr.bf16.mxu0 %v2340
    %2963 = vmatpush1.bf16.msra.mxu0 %v2339
    %2964 = vmatprep.subr.bf16.mxu0 %v2344
    %2965 = vmatpush1.bf16.msra.mxu0 %v2343
    %2966 = vmatprep.mubr.bf16.mxu0 %v1436
    %2967 = vmatmul.mubr.bf16.gmra.mrb[0].mxu0 %v1435
    %v2968 = vpop.f32.mrb[0].mxu0
    %v2969 = vadd.f32 %v2928, %v2968
    %v2970 = vpop.f32.mrb[0].mxu0
    %v2971 = vadd.f32 %v2930, %v2970
    %v2972 = vpop.f32.mrb[0].mxu0
    %v2973 = vpop.f32.mrb[0].mxu0
    %2974 = vdwg.mxu0
    %2975 = vmatprep.subr.bf16.mxu0 %v2348
    %2976 = vmatpush1.bf16.msra.mxu0 %v2347
    %2977 = vmatprep.subr.bf16.mxu0 %v2352
    %2978 = vmatpush1.bf16.msra.mxu0 %v2351
    %2979 = vmatprep.subr.bf16.mxu0 %v2356
    %2980 = vmatpush1.bf16.msra.mxu0 %v2355
    %2981 = vmatprep.subr.bf16.mxu0 %v2360
    %2982 = vmatpush1.bf16.msra.mxu0 %v2359
    %2983 = vmatprep.subr.bf16.mxu0 %v2364
    %2984 = vmatpush1.bf16.msra.mxu0 %v2363
    %2985 = vmatprep.subr.bf16.mxu0 %v2368
    %2986 = vmatpush1.bf16.msra.mxu0 %v2367
    %2987 = vmatprep.subr.bf16.mxu0 %v2372
    %2988 = vmatpush1.bf16.msra.mxu0 %v2371
    %2989 = vmatprep.subr.bf16.mxu0 %v2376
    %2990 = vmatpush1.bf16.msra.mxu0 %v2375
    %2991 = vmatprep.subr.bf16.mxu0 %v2380
    %2992 = vmatpush1.bf16.msra.mxu0 %v2379
    %2993 = vmatprep.subr.bf16.mxu0 %v2384
    %2994 = vmatpush1.bf16.msra.mxu0 %v2383
    %2995 = vmatprep.subr.bf16.mxu0 %v2388
    %2996 = vmatpush1.bf16.msra.mxu0 %v2387
    %2997 = vmatprep.subr.bf16.mxu0 %v2392
    %2998 = vmatpush1.bf16.msra.mxu0 %v2391
    %2999 = vmatprep.subr.bf16.mxu0 %v2396
    %3000 = vmatpush1.bf16.msra.mxu0 %v2395
    %3001 = vmatprep.subr.bf16.mxu0 %v2400
    %3002 = vmatpush1.bf16.msra.mxu0 %v2399
    %3003 = vmatprep.subr.bf16.mxu0 %v2404
    %3004 = vmatpush1.bf16.msra.mxu0 %v2403
    %3005 = vmatprep.subr.bf16.mxu0 %v2408
    %3006 = vmatpush1.bf16.msra.mxu0 %v2407
    %3007 = vmatprep.mubr.bf16.mxu0 %v1438
    %3008 = vmatmul.mubr.bf16.gmra.mrb[0].mxu0 %v1437
    %v3009 = vpop.f32.mrb[0].mxu0
    %v3010 = vadd.f32 %v2969, %v3009
    %v3011 = vpop.f32.mrb[0].mxu0
    %v3012 = vadd.f32 %v2971, %v3011
    %v3013 = vpop.f32.mrb[0].mxu0
    %v3014 = vpop.f32.mrb[0].mxu0
    %3015 = vdwg.mxu0
    %3016 = vmatprep.subr.bf16.mxu0 %v2412
    %3017 = vmatpush1.bf16.msra.mxu0 %v2411
    %3018 = vmatprep.subr.bf16.mxu0 %v2416
    %3019 = vmatpush1.bf16.msra.mxu0 %v2415
    %3020 = vmatprep.subr.bf16.mxu0 %v2420
    %3021 = vmatpush1.bf16.msra.mxu0 %v2419
    %3022 = vmatprep.subr.bf16.mxu0 %v2424
    %3023 = vmatpush1.bf16.msra.mxu0 %v2423
    %3024 = vmatprep.subr.bf16.mxu0 %v2428
    %3025 = vmatpush1.bf16.msra.mxu0 %v2427
    %3026 = vmatprep.subr.bf16.mxu0 %v2432
    %3027 = vmatpush1.bf16.msra.mxu0 %v2431
    %3028 = vmatprep.subr.bf16.mxu0 %v2436
    %3029 = vmatpush1.bf16.msra.mxu0 %v2435
    %3030 = vmatprep.subr.bf16.mxu0 %v2440
    %3031 = vmatpush1.bf16.msra.mxu0 %v2439
    %3032 = vmatprep.subr.bf16.mxu0 %v2444
    %3033 = vmatpush1.bf16.msra.mxu0 %v2443
    %3034 = vmatprep.subr.bf16.mxu0 %v2448
    %3035 = vmatpush1.bf16.msra.mxu0 %v2447
    %3036 = vmatprep.subr.bf16.mxu0 %v2452
    %3037 = vmatpush1.bf16.msra.mxu0 %v2451
    %3038 = vmatprep.subr.bf16.mxu0 %v2456
    %3039 = vmatpush1.bf16.msra.mxu0 %v2455
    %3040 = vmatprep.subr.bf16.mxu0 %v2460
    %3041 = vmatpush1.bf16.msra.mxu0 %v2459
    %3042 = vmatprep.subr.bf16.mxu0 %v2464
    %3043 = vmatpush1.bf16.msra.mxu0 %v2463
    %3044 = vmatprep.subr.bf16.mxu0 %v2468
    %3045 = vmatpush1.bf16.msra.mxu0 %v2467
    %3046 = vmatprep.subr.bf16.mxu0 %v2472
    %3047 = vmatpush1.bf16.msra.mxu0 %v2471
    %3048 = vmatprep.mubr.bf16.mxu0 %v1440
    %3049 = vmatmul.mubr.bf16.gmra.mrb[0].mxu0 %v1439
    %v3050 = vpop.f32.mrb[0].mxu0
    %v3051 = vadd.f32 %v3010, %v3050
    %v3052 = vpop.f32.mrb[0].mxu0
    %v3053 = vadd.f32 %v3012, %v3052
    %v3054 = vpop.f32.mrb[0].mxu0
    %v3055 = vpop.f32.mrb[0].mxu0
    %3056 = vdwg.mxu0
    %v3057 = vmax.f32 %v2887, 0.0
    %v3058 = vmax.f32 %v2889, 0.0
    %v3059 = vmax.f32 %v3051, 0.0
    %v3060 = vmax.f32 %v3053, 0.0
    %v3061 = vpack.c.bf16 %v3057, %v3057
    %v3062 = vpack.c.bf16 %v3058, %v3058
    %v3063 = vpack.c.bf16 %v3059, %v3059
    %v3064 = vpack.c.bf16 %v3060, %v3060
    %v3065 = vld [vmem:[#allocation7] sm:$0xff]
    %v3066 = vld [vmem:[#allocation7 + $0x8] sm:$0xff]
    %v3067 = vld [vmem:[#allocation7 + $0x10] sm:$0xff]
    %v3068 = vld [vmem:[#allocation7 + $0x18] sm:$0xff]
    %v3069 = vld [vmem:[#allocation7 + $0x20] sm:$0xff]
    %v3070 = vld [vmem:[#allocation7 + $0x28] sm:$0xff]
    %v3071 = vld [vmem:[#allocation7 + $0x30] sm:$0xff]
    %v3072 = vld [vmem:[#allocation7 + $0x38] sm:$0xff]
    %v3073 = vld [vmem:[#allocation7 + $0x40] sm:$0xff]
    %v3074 = vld [vmem:[#allocation7 + $0x48] sm:$0xff]
    %v3075 = vld [vmem:[#allocation7 + $0x50] sm:$0xff]
    %v3076 = vld [vmem:[#allocation7 + $0x58] sm:$0xff]
    %v3077 = vld [vmem:[#allocation7 + $0x60] sm:$0xff]
    %v3078 = vld [vmem:[#allocation7 + $0x68] sm:$0xff]
    %v3079 = vld [vmem:[#allocation7 + $0x70] sm:$0xff]
    %v3080 = vld [vmem:[#allocation7 + $0x78] sm:$0xff]
    %v3081 = vld [vmem:[#allocation7 + $0x80] sm:$0xff]
    %v3082 = vld [vmem:[#allocation7 + $0x88] sm:$0xff]
    %v3083 = vld [vmem:[#allocation7 + $0x90] sm:$0xff]
    %v3084 = vld [vmem:[#allocation7 + $0x98] sm:$0xff]
    %v3085 = vld [vmem:[#allocation7 + $0xa0] sm:$0xff]
    %v3086 = vld [vmem:[#allocation7 + $0xa8] sm:$0xff]
    %v3087 = vld [vmem:[#allocation7 + $0xb0] sm:$0xff]
    %v3088 = vld [vmem:[#allocation7 + $0xb8] sm:$0xff]
    %v3089 = vld [vmem:[#allocation7 + $0xc0] sm:$0xff]
    %v3090 = vld [vmem:[#allocation7 + $0xc8] sm:$0xff]
    %v3091 = vld [vmem:[#allocation7 + $0xd0] sm:$0xff]
    %v3092 = vld [vmem:[#allocation7 + $0xd8] sm:$0xff]
    %v3093 = vld [vmem:[#allocation7 + $0xe0] sm:$0xff]
    %v3094 = vld [vmem:[#allocation7 + $0xe8] sm:$0xff]
    %v3095 = vld [vmem:[#allocation7 + $0xf0] sm:$0xff]
    %v3096 = vld [vmem:[#allocation7 + $0xf8] sm:$0xff]
    %v3097 = vld [vmem:[#allocation7 + $0x100] sm:$0xff]
    %v3098 = vld [vmem:[#allocation7 + $0x108] sm:$0xff]
    %v3099 = vld [vmem:[#allocation7 + $0x110] sm:$0xff]
    %v3100 = vld [vmem:[#allocation7 + $0x118] sm:$0xff]
    %v3101 = vld [vmem:[#allocation7 + $0x120] sm:$0xff]
    %v3102 = vld [vmem:[#allocation7 + $0x128] sm:$0xff]
    %v3103 = vld [vmem:[#allocation7 + $0x130] sm:$0xff]
    %v3104 = vld [vmem:[#allocation7 + $0x138] sm:$0xff]
    %v3105 = vld [vmem:[#allocation7 + $0x140] sm:$0xff]
    %v3106 = vld [vmem:[#allocation7 + $0x148] sm:$0xff]
    %v3107 = vld [vmem:[#allocation7 + $0x150] sm:$0xff]
    %v3108 = vld [vmem:[#allocation7 + $0x158] sm:$0xff]
    %v3109 = vld [vmem:[#allocation7 + $0x160] sm:$0xff]
    %v3110 = vld [vmem:[#allocation7 + $0x168] sm:$0xff]
    %v3111 = vld [vmem:[#allocation7 + $0x170] sm:$0xff]
    %v3112 = vld [vmem:[#allocation7 + $0x178] sm:$0xff]
    %v3113 = vld [vmem:[#allocation7 + $0x180] sm:$0xff]
    %v3114 = vld [vmem:[#allocation7 + $0x188] sm:$0xff]
    %v3115 = vld [vmem:[#allocation7 + $0x190] sm:$0xff]
    %v3116 = vld [vmem:[#allocation7 + $0x198] sm:$0xff]
    %v3117 = vld [vmem:[#allocation7 + $0x1a0] sm:$0xff]
    %v3118 = vld [vmem:[#allocation7 + $0x1a8] sm:$0xff]
    %v3119 = vld [vmem:[#allocation7 + $0x1b0] sm:$0xff]
    %v3120 = vld [vmem:[#allocation7 + $0x1b8] sm:$0xff]
    %v3121 = vld [vmem:[#allocation7 + $0x1c0] sm:$0xff]
    %v3122 = vld [vmem:[#allocation7 + $0x1c8] sm:$0xff]
    %v3123 = vld [vmem:[#allocation7 + $0x1d0] sm:$0xff]
    %v3124 = vld [vmem:[#allocation7 + $0x1d8] sm:$0xff]
    %v3125 = vld [vmem:[#allocation7 + $0x1e0] sm:$0xff]
    %v3126 = vld [vmem:[#allocation7 + $0x1e8] sm:$0xff]
    %v3127 = vld [vmem:[#allocation7 + $0x1f0] sm:$0xff]
    %v3128 = vld [vmem:[#allocation7 + $0x1f8] sm:$0xff]
    %v3129 = vld [vmem:[%s10] sm:$0x3]
    %v3131 = vlaneseq
    %v3132 = vshrl.u32 %v3131, 7
    %v3133 = vsub.s32 0, %v3132
    %v3134 = vrot.slane %v3129, %v3133
    %v3135 = vlaneseq
    %v3136 = vshrl.u32 %v3135, 7
    %v3137 = vsub.s32 1, %v3136
    %v3138 = vrot.slane %v3129, %v3137
    %v3205 = vunpack.c.l.b16 %v3065
    %v3206 = vunpack.c.h.b16 %v3065
    %v3207 = vunpack.c.l.b16 %v3066
    %v3208 = vunpack.c.h.b16 %v3066
    %v3209 = vunpack.c.l.b16 %v3067
    %v3210 = vunpack.c.h.b16 %v3067
    %v3211 = vunpack.c.l.b16 %v3068
    %v3212 = vunpack.c.h.b16 %v3068
    %v3213 = vunpack.c.l.b16 %v3069
    %v3214 = vunpack.c.h.b16 %v3069
    %v3215 = vunpack.c.l.b16 %v3070
    %v3216 = vunpack.c.h.b16 %v3070
    %v3217 = vunpack.c.l.b16 %v3071
    %v3218 = vunpack.c.h.b16 %v3071
    %v3219 = vunpack.c.l.b16 %v3072
    %v3220 = vunpack.c.h.b16 %v3072
    %v3221 = vunpack.c.l.b16 %v3073
    %v3222 = vunpack.c.h.b16 %v3073
    %v3223 = vunpack.c.l.b16 %v3074
    %v3224 = vunpack.c.h.b16 %v3074
    %v3225 = vunpack.c.l.b16 %v3075
    %v3226 = vunpack.c.h.b16 %v3075
    %v3227 = vunpack.c.l.b16 %v3076
    %v3228 = vunpack.c.h.b16 %v3076
    %v3229 = vunpack.c.l.b16 %v3077
    %v3230 = vunpack.c.h.b16 %v3077
    %v3231 = vunpack.c.l.b16 %v3078
    %v3232 = vunpack.c.h.b16 %v3078
    %v3233 = vunpack.c.l.b16 %v3079
    %v3234 = vunpack.c.h.b16 %v3079
    %v3235 = vunpack.c.l.b16 %v3080
    %v3236 = vunpack.c.h.b16 %v3080
    %v3237 = vunpack.c.l.b16 %v3081
    %v3238 = vunpack.c.h.b16 %v3081
    %v3239 = vunpack.c.l.b16 %v3082
    %v3240 = vunpack.c.h.b16 %v3082
    %v3241 = vunpack.c.l.b16 %v3083
    %v3242 = vunpack.c.h.b16 %v3083
    %v3243 = vunpack.c.l.b16 %v3084
    %v3244 = vunpack.c.h.b16 %v3084
    %v3245 = vunpack.c.l.b16 %v3085
    %v3246 = vunpack.c.h.b16 %v3085
    %v3247 = vunpack.c.l.b16 %v3086
    %v3248 = vunpack.c.h.b16 %v3086
    %v3249 = vunpack.c.l.b16 %v3087
    %v3250 = vunpack.c.h.b16 %v3087
    %v3251 = vunpack.c.l.b16 %v3088
    %v3252 = vunpack.c.h.b16 %v3088
    %v3253 = vunpack.c.l.b16 %v3089
    %v3254 = vunpack.c.h.b16 %v3089
    %v3255 = vunpack.c.l.b16 %v3090
    %v3256 = vunpack.c.h.b16 %v3090
    %v3257 = vunpack.c.l.b16 %v3091
    %v3258 = vunpack.c.h.b16 %v3091
    %v3259 = vunpack.c.l.b16 %v3092
    %v3260 = vunpack.c.h.b16 %v3092
    %v3261 = vunpack.c.l.b16 %v3093
    %v3262 = vunpack.c.h.b16 %v3093
    %v3263 = vunpack.c.l.b16 %v3094
    %v3264 = vunpack.c.h.b16 %v3094
    %v3265 = vunpack.c.l.b16 %v3095
    %v3266 = vunpack.c.h.b16 %v3095
    %v3267 = vunpack.c.l.b16 %v3096
    %v3268 = vunpack.c.h.b16 %v3096
    %v3269 = vunpack.c.l.b16 %v3097
    %v3270 = vunpack.c.h.b16 %v3097
    %v3271 = vunpack.c.l.b16 %v3098
    %v3272 = vunpack.c.h.b16 %v3098
    %v3273 = vunpack.c.l.b16 %v3099
    %v3274 = vunpack.c.h.b16 %v3099
    %v3275 = vunpack.c.l.b16 %v3100
    %v3276 = vunpack.c.h.b16 %v3100
    %v3277 = vunpack.c.l.b16 %v3101
    %v3278 = vunpack.c.h.b16 %v3101
    %v3279 = vunpack.c.l.b16 %v3102
    %v3280 = vunpack.c.h.b16 %v3102
    %v3281 = vunpack.c.l.b16 %v3103
    %v3282 = vunpack.c.h.b16 %v3103
    %v3283 = vunpack.c.l.b16 %v3104
    %v3284 = vunpack.c.h.b16 %v3104
    %v3285 = vunpack.c.l.b16 %v3105
    %v3286 = vunpack.c.h.b16 %v3105
    %v3287 = vunpack.c.l.b16 %v3106
    %v3288 = vunpack.c.h.b16 %v3106
    %v3289 = vunpack.c.l.b16 %v3107
    %v3290 = vunpack.c.h.b16 %v3107
    %v3291 = vunpack.c.l.b16 %v3108
    %v3292 = vunpack.c.h.b16 %v3108
    %v3293 = vunpack.c.l.b16 %v3109
    %v3294 = vunpack.c.h.b16 %v3109
    %v3295 = vunpack.c.l.b16 %v3110
    %v3296 = vunpack.c.h.b16 %v3110
    %v3297 = vunpack.c.l.b16 %v3111
    %v3298 = vunpack.c.h.b16 %v3111
    %v3299 = vunpack.c.l.b16 %v3112
    %v3300 = vunpack.c.h.b16 %v3112
    %v3301 = vunpack.c.l.b16 %v3113
    %v3302 = vunpack.c.h.b16 %v3113
    %v3303 = vunpack.c.l.b16 %v3114
    %v3304 = vunpack.c.h.b16 %v3114
    %v3305 = vunpack.c.l.b16 %v3115
    %v3306 = vunpack.c.h.b16 %v3115
    %v3307 = vunpack.c.l.b16 %v3116
    %v3308 = vunpack.c.h.b16 %v3116
    %v3309 = vunpack.c.l.b16 %v3117
    %v3310 = vunpack.c.h.b16 %v3117
    %v3311 = vunpack.c.l.b16 %v3118
    %v3312 = vunpack.c.h.b16 %v3118
    %v3313 = vunpack.c.l.b16 %v3119
    %v3314 = vunpack.c.h.b16 %v3119
    %v3315 = vunpack.c.l.b16 %v3120
    %v3316 = vunpack.c.h.b16 %v3120
    %v3317 = vunpack.c.l.b16 %v3121
    %v3318 = vunpack.c.h.b16 %v3121
    %v3319 = vunpack.c.l.b16 %v3122
    %v3320 = vunpack.c.h.b16 %v3122
    %v3321 = vunpack.c.l.b16 %v3123
    %v3322 = vunpack.c.h.b16 %v3123
    %v3323 = vunpack.c.l.b16 %v3124
    %v3324 = vunpack.c.h.b16 %v3124
    %v3325 = vunpack.c.l.b16 %v3125
    %v3326 = vunpack.c.h.b16 %v3125
    %v3327 = vunpack.c.l.b16 %v3126
    %v3328 = vunpack.c.h.b16 %v3126
    %v3329 = vunpack.c.l.b16 %v3127
    %v3330 = vunpack.c.h.b16 %v3127
    %v3331 = vunpack.c.l.b16 %v3128
    %v3332 = vunpack.c.h.b16 %v3128
    %v3333 = vpack.c.b16 %v3207, %v3205
    %v3334 = vpack.c.b16 %v3208, %v3206
    %v3335 = vpack.c.b16 %v3211, %v3209
    %v3336 = vpack.c.b16 %v3212, %v3210
    %v3337 = vpack.c.b16 %v3215, %v3213
    %v3338 = vpack.c.b16 %v3216, %v3214
    %v3339 = vpack.c.b16 %v3219, %v3217
    %v3340 = vpack.c.b16 %v3220, %v3218
    %v3341 = vpack.c.b16 %v3223, %v3221
    %v3342 = vpack.c.b16 %v3224, %v3222
    %v3343 = vpack.c.b16 %v3227, %v3225
    %v3344 = vpack.c.b16 %v3228, %v3226
    %v3345 = vpack.c.b16 %v3231, %v3229
    %v3346 = vpack.c.b16 %v3232, %v3230
    %v3347 = vpack.c.b16 %v3235, %v3233
    %v3348 = vpack.c.b16 %v3236, %v3234
    %v3349 = vpack.c.b16 %v3239, %v3237
    %v3350 = vpack.c.b16 %v3240, %v3238
    %v3351 = vpack.c.b16 %v3243, %v3241
    %v3352 = vpack.c.b16 %v3244, %v3242
    %v3353 = vpack.c.b16 %v3247, %v3245
    %v3354 = vpack.c.b16 %v3248, %v3246
    %v3355 = vpack.c.b16 %v3251, %v3249
    %v3356 = vpack.c.b16 %v3252, %v3250
    %v3357 = vpack.c.b16 %v3255, %v3253
    %v3358 = vpack.c.b16 %v3256, %v3254
    %v3359 = vpack.c.b16 %v3259, %v3257
    %v3360 = vpack.c.b16 %v3260, %v3258
    %v3361 = vpack.c.b16 %v3263, %v3261
    %v3362 = vpack.c.b16 %v3264, %v3262
    %v3363 = vpack.c.b16 %v3267, %v3265
    %v3364 = vpack.c.b16 %v3268, %v3266
    %v3365 = vpack.c.b16 %v3271, %v3269
    %v3366 = vpack.c.b16 %v3272, %v3270
    %v3367 = vpack.c.b16 %v3275, %v3273
    %v3368 = vpack.c.b16 %v3276, %v3274
    %v3369 = vpack.c.b16 %v3279, %v3277
    %v3370 = vpack.c.b16 %v3280, %v3278
    %v3371 = vpack.c.b16 %v3283, %v3281
    %v3372 = vpack.c.b16 %v3284, %v3282
    %v3373 = vpack.c.b16 %v3287, %v3285
    %v3374 = vpack.c.b16 %v3288, %v3286
    %v3375 = vpack.c.b16 %v3291, %v3289
    %v3376 = vpack.c.b16 %v3292, %v3290
    %v3377 = vpack.c.b16 %v3295, %v3293
    %v3378 = vpack.c.b16 %v3296, %v3294
    %v3379 = vpack.c.b16 %v3299, %v3297
    %v3380 = vpack.c.b16 %v3300, %v3298
    %v3381 = vpack.c.b16 %v3303, %v3301
    %v3382 = vpack.c.b16 %v3304, %v3302
    %v3383 = vpack.c.b16 %v3307, %v3305
    %v3384 = vpack.c.b16 %v3308, %v3306
    %v3385 = vpack.c.b16 %v3311, %v3309
    %v3386 = vpack.c.b16 %v3312, %v3310
    %v3387 = vpack.c.b16 %v3315, %v3313
    %v3388 = vpack.c.b16 %v3316, %v3314
    %v3389 = vpack.c.b16 %v3319, %v3317
    %v3390 = vpack.c.b16 %v3320, %v3318
    %v3391 = vpack.c.b16 %v3323, %v3321
    %v3392 = vpack.c.b16 %v3324, %v3322
    %v3393 = vpack.c.b16 %v3327, %v3325
    %v3394 = vpack.c.b16 %v3328, %v3326
    %v3395 = vpack.c.b16 %v3331, %v3329
    %v3396 = vpack.c.b16 %v3332, %v3330
    %3461 = vmatprep.subr.bf16.mxu0 %v3334
    %3462 = vmatpush1.bf16.msra.mxu0 %v3333
    %3463 = vmatprep.subr.bf16.mxu0 %v3336
    %3464 = vmatpush1.bf16.msra.mxu0 %v3335
    %3465 = vmatprep.subr.bf16.mxu0 %v3338
    %3466 = vmatpush1.bf16.msra.mxu0 %v3337
    %3467 = vmatprep.subr.bf16.mxu0 %v3340
    %3468 = vmatpush1.bf16.msra.mxu0 %v3339
    %3469 = vmatprep.subr.bf16.mxu0 %v3342
    %3470 = vmatpush1.bf16.msra.mxu0 %v3341
    %3471 = vmatprep.subr.bf16.mxu0 %v3344
    %3472 = vmatpush1.bf16.msra.mxu0 %v3343
    %3473 = vmatprep.subr.bf16.mxu0 %v3346
    %3474 = vmatpush1.bf16.msra.mxu0 %v3345
    %3475 = vmatprep.subr.bf16.mxu0 %v3348
    %3476 = vmatpush1.bf16.msra.mxu0 %v3347
    %3477 = vmatprep.subr.bf16.mxu0 %v3350
    %3478 = vmatpush1.bf16.msra.mxu0 %v3349
    %3479 = vmatprep.subr.bf16.mxu0 %v3352
    %3480 = vmatpush1.bf16.msra.mxu0 %v3351
    %3481 = vmatprep.subr.bf16.mxu0 %v3354
    %3482 = vmatpush1.bf16.msra.mxu0 %v3353
    %3483 = vmatprep.subr.bf16.mxu0 %v3356
    %3484 = vmatpush1.bf16.msra.mxu0 %v3355
    %3485 = vmatprep.subr.bf16.mxu0 %v3358
    %3486 = vmatpush1.bf16.msra.mxu0 %v3357
    %3487 = vmatprep.subr.bf16.mxu0 %v3360
    %3488 = vmatpush1.bf16.msra.mxu0 %v3359
    %3489 = vmatprep.subr.bf16.mxu0 %v3362
    %3490 = vmatpush1.bf16.msra.mxu0 %v3361
    %3491 = vmatprep.subr.bf16.mxu0 %v3364
    %3492 = vmatpush1.bf16.msra.mxu0 %v3363
    %3493 = vmatprep.mubr.bf16.mxu0 %v3062
    %3494 = vmatmul.mubr.bf16.gmra.mrb[0].mxu0 %v3061
    %v3495 = vpop.f32.mrb[0].mxu0
    %v3496 = vadd.f32 %v3134, %v3495
    %v3497 = vpop.f32.mrb[0].mxu0
    %v3498 = vadd.f32 %v3138, %v3497
    %v3499 = vpop.f32.mrb[0].mxu0
    %v3500 = vpop.f32.mrb[0].mxu0
    %3501 = vdwg.mxu0
    %3502 = vmatprep.subr.bf16.mxu0 %v3366
    %3503 = vmatpush1.bf16.msra.mxu0 %v3365
    %3504 = vmatprep.subr.bf16.mxu0 %v3368
    %3505 = vmatpush1.bf16.msra.mxu0 %v3367
    %3506 = vmatprep.subr.bf16.mxu0 %v3370
    %3507 = vmatpush1.bf16.msra.mxu0 %v3369
    %3508 = vmatprep.subr.bf16.mxu0 %v3372
    %3509 = vmatpush1.bf16.msra.mxu0 %v3371
    %3510 = vmatprep.subr.bf16.mxu0 %v3374
    %3511 = vmatpush1.bf16.msra.mxu0 %v3373
    %3512 = vmatprep.subr.bf16.mxu0 %v3376
    %3513 = vmatpush1.bf16.msra.mxu0 %v3375
    %3514 = vmatprep.subr.bf16.mxu0 %v3378
    %3515 = vmatpush1.bf16.msra.mxu0 %v3377
    %3516 = vmatprep.subr.bf16.mxu0 %v3380
    %3517 = vmatpush1.bf16.msra.mxu0 %v3379
    %3518 = vmatprep.subr.bf16.mxu0 %v3382
    %3519 = vmatpush1.bf16.msra.mxu0 %v3381
    %3520 = vmatprep.subr.bf16.mxu0 %v3384
    %3521 = vmatpush1.bf16.msra.mxu0 %v3383
    %3522 = vmatprep.subr.bf16.mxu0 %v3386
    %3523 = vmatpush1.bf16.msra.mxu0 %v3385
    %3524 = vmatprep.subr.bf16.mxu0 %v3388
    %3525 = vmatpush1.bf16.msra.mxu0 %v3387
    %3526 = vmatprep.subr.bf16.mxu0 %v3390
    %3527 = vmatpush1.bf16.msra.mxu0 %v3389
    %3528 = vmatprep.subr.bf16.mxu0 %v3392
    %3529 = vmatpush1.bf16.msra.mxu0 %v3391
    %3530 = vmatprep.subr.bf16.mxu0 %v3394
    %3531 = vmatpush1.bf16.msra.mxu0 %v3393
    %3532 = vmatprep.subr.bf16.mxu0 %v3396
    %3533 = vmatpush1.bf16.msra.mxu0 %v3395
    %3534 = vmatprep.mubr.bf16.mxu0 %v3064
    %3535 = vmatmul.mubr.bf16.gmra.mrb[0].mxu0 %v3063
    %v3536 = vpop.f32.mrb[0].mxu0
    %v3537 = vadd.f32 %v3496, %v3536
    %v3538 = vpop.f32.mrb[0].mxu0
    %v3539 = vadd.f32 %v3498, %v3538
    %v3540 = vpop.f32.mrb[0].mxu0
    %v3541 = vpop.f32.mrb[0].mxu0
    %3542 = vdwg.mxu0
    %v3543 = vmax.f32 %v3537, 0.0
    %v3544 = vmax.f32 %v3539, 0.0
    %v3545 = vld [vmem:[%s11] sm:$0xff]
    %v3546 = vld [vmem:[%s11 + $0x8] sm:$0xff]
    %v3547 = vld [vmem:[%s11 + $0x10] sm:$0xff]
    %v3548 = vld [vmem:[%s11 + $0x18] sm:$0xff]
    %v3549 = vld [vmem:[%s11 + $0x20] sm:$0xff]
    %v3550 = vld [vmem:[%s11 + $0x28] sm:$0xff]
    %v3551 = vld [vmem:[%s11 + $0x30] sm:$0xff]
    %v3552 = vld [vmem:[%s11 + $0x38] sm:$0xff]
    %v3553 = vld [vmem:[%s11 + $0x40] sm:$0xff]
    %v3554 = vld [vmem:[%s11 + $0x48] sm:$0xff]
    %v3555 = vld [vmem:[%s11 + $0x50] sm:$0xff]
    %v3556 = vld [vmem:[%s11 + $0x58] sm:$0xff]
    %v3557 = vld [vmem:[%s11 + $0x60] sm:$0xff]
    %v3558 = vld [vmem:[%s11 + $0x68] sm:$0xff]
    %v3559 = vld [vmem:[%s11 + $0x70] sm:$0xff]
    %v3560 = vld [vmem:[%s11 + $0x78] sm:$0xff]
    %v3561 = vld [vmem:[%s11 + $0x80] sm:$0xff]
    %v3562 = vld [vmem:[%s11 + $0x88] sm:$0xff]
    %v3563 = vld [vmem:[%s11 + $0x90] sm:$0xff]
    %v3564 = vld [vmem:[%s11 + $0x98] sm:$0xff]
    %v3565 = vld [vmem:[%s11 + $0xa0] sm:$0xff]
    %v3566 = vld [vmem:[%s11 + $0xa8] sm:$0xff]
    %v3567 = vld [vmem:[%s11 + $0xb0] sm:$0xff]
    %v3568 = vld [vmem:[%s11 + $0xb8] sm:$0xff]
    %v3569 = vld [vmem:[%s11 + $0xc0] sm:$0xff]
    %v3570 = vld [vmem:[%s11 + $0xc8] sm:$0xff]
    %v3571 = vld [vmem:[%s11 + $0xd0] sm:$0xff]
    %v3572 = vld [vmem:[%s11 + $0xd8] sm:$0xff]
    %v3573 = vld [vmem:[%s11 + $0xe0] sm:$0xff]
    %v3574 = vld [vmem:[%s11 + $0xe8] sm:$0xff]
    %v3575 = vld [vmem:[%s11 + $0xf0] sm:$0xff]
    %v3576 = vld [vmem:[%s11 + $0xf8] sm:$0xff]
    %v3577 = vld [vmem:[%s12] sm:$0x1]
    %v3579 = vlaneseq
    %v3580 = vshrl.u32 %v3579, 7
    %v3581 = vsub.s32 0, %v3580
    %v3582 = vrot.slane %v3577, %v3581
    %3584 = vmatprep.subr.mxu0 0.0
    %3585 = vmatpush1.msra.mxu0 %v3545
    %3586 = vmatprep.subr.mxu0 0.0
    %3587 = vmatpush1.msra.mxu0 %v3546
    %3588 = vmatprep.subr.mxu0 0.0
    %3589 = vmatpush1.msra.mxu0 %v3547
    %3590 = vmatprep.subr.mxu0 0.0
    %3591 = vmatpush1.msra.mxu0 %v3548
    %3592 = vmatprep.subr.mxu0 0.0
    %3593 = vmatpush1.msra.mxu0 %v3549
    %3594 = vmatprep.subr.mxu0 0.0
    %3595 = vmatpush1.msra.mxu0 %v3550
    %3596 = vmatprep.subr.mxu0 0.0
    %3597 = vmatpush1.msra.mxu0 %v3551
    %3598 = vmatprep.subr.mxu0 0.0
    %3599 = vmatpush1.msra.mxu0 %v3552
    %3600 = vmatprep.subr.mxu0 0.0
    %3601 = vmatpush1.msra.mxu0 %v3553
    %3602 = vmatprep.subr.mxu0 0.0
    %3603 = vmatpush1.msra.mxu0 %v3554
    %3604 = vmatprep.subr.mxu0 0.0
    %3605 = vmatpush1.msra.mxu0 %v3555
    %3606 = vmatprep.subr.mxu0 0.0
    %3607 = vmatpush1.msra.mxu0 %v3556
    %3608 = vmatprep.subr.mxu0 0.0
    %3609 = vmatpush1.msra.mxu0 %v3557
    %3610 = vmatprep.subr.mxu0 0.0
    %3611 = vmatpush1.msra.mxu0 %v3558
    %3612 = vmatprep.subr.mxu0 0.0
    %3613 = vmatpush1.msra.mxu0 %v3559
    %3614 = vmatprep.subr.mxu0 0.0
    %3615 = vmatpush1.msra.mxu0 %v3560
    %3616 = vmatprep.subr.mxu0 0.0
    %3617 = vmatpush1.msra.mxu0 %v3561
    %3618 = vmatprep.subr.mxu0 0.0
    %3619 = vmatpush1.msra.mxu0 %v3562
    %3620 = vmatprep.subr.mxu0 0.0
    %3621 = vmatpush1.msra.mxu0 %v3563
    %3622 = vmatprep.subr.mxu0 0.0
    %3623 = vmatpush1.msra.mxu0 %v3564
    %3624 = vmatprep.subr.mxu0 0.0
    %3625 = vmatpush1.msra.mxu0 %v3565
    %3626 = vmatprep.subr.mxu0 0.0
    %3627 = vmatpush1.msra.mxu0 %v3566
    %3628 = vmatprep.subr.mxu0 0.0
    %3629 = vmatpush1.msra.mxu0 %v3567
    %3630 = vmatprep.subr.mxu0 0.0
    %3631 = vmatpush1.msra.mxu0 %v3568
    %3632 = vmatprep.subr.mxu0 0.0
    %3633 = vmatpush1.msra.mxu0 %v3569
    %3634 = vmatprep.subr.mxu0 0.0
    %3635 = vmatpush1.msra.mxu0 %v3570
    %3636 = vmatprep.subr.mxu0 0.0
    %3637 = vmatpush1.msra.mxu0 %v3571
    %3638 = vmatprep.subr.mxu0 0.0
    %3639 = vmatpush1.msra.mxu0 %v3572
    %3640 = vmatprep.subr.mxu0 0.0
    %3641 = vmatpush1.msra.mxu0 %v3573
    %3642 = vmatprep.subr.mxu0 0.0
    %3643 = vmatpush1.msra.mxu0 %v3574
    %3644 = vmatprep.subr.mxu0 0.0
    %3645 = vmatpush1.msra.mxu0 %v3575
    %3646 = vmatprep.subr.mxu0 0.0
    %3647 = vmatpush1.msra.mxu0 %v3576
    %3648 = vmatprep.mubr.f32.mxu0 %v3544
    %3649 = vmatmul.mubr.f32.gmra.mrb[0].mxu0 %v3543
    %v3650 = vpop.f32.mrb[0].mxu0
    %v3651 = vadd.f32 %v3582, %v3650
    %v3652 = vpop.f32.mrb[0].mxu0
    %3653 = vdwg.mxu0
    %vm3654 = vcmask 66560
    %3655 = vst.msk [vmem:[#allocation8] sm:$0x3] %vm3654, %v3651
    // Predicated region
    $region66: #{tpu_custom_call.1} parent=1 // pred_check
      _
    $region67: #{tpu_custom_call.1} parent=1 // pred_check_branch
      %3657 = sbr.rel (0) target = $region69
    $region68: #{tpu_custom_call.1} parent=1 // pred_region
      %s3659 = ssub.s32 32, 32
      %3660 = vsyncadd [#allocation4], %s3659
      %s3662 = sshll.u32 [#allocation8], 4
      %s3663 = int_to_ptr.vmem [resolvable:$true] %s3662
      %3665 = dma.vmem_to_hbm [thread:$0]  %s3663, 32, %s13, [#allocation4]
    $region69: #{tpu_custom_call.1} parent=1 // pred_fallthru
      _
    // Predicated region
    $region70: #{tpu_custom_call.1} parent=1 // pred_check
      _
    $region71: #{tpu_custom_call.1} parent=1 // pred_check_branch
      %3667 = sbr.rel (0) target = $region73
    $region72: #{tpu_custom_call.1} parent=1 // pred_region
      %3668 = dma.done [#allocation4], 32
    $region73: #{tpu_custom_call.1} parent=1 // pred_fallthru
      _
    %3669 = vsyncpa [#allocation3], 1
    %3670 = vsyncpa [#allocation6], 1
    %3671 = vsyncpa [#allocation4], 1

</llo_original>
